<compile_context>
chip_gen: v5e
topology: v5e:2x2
jax: 0.10.0
libtpu: 0.0.40
codegen_flags: <defaults>
</compile_context>

<pallas_src>
import numpy as np
import jax
import jax.numpy as jnp
from jax import lax
from jax.experimental import pallas as pl
from jax.experimental.pallas import tpu as pltpu


def _loop(n, body, *, unroll=4):
    """Static Python unroll for small trip counts, partially-unrolled fori otherwise."""
    if n <= 8:
        for i in range(n):
            body(i)
    else:
        def wrapped(i, carry):
            body(i)
            return carry
        lax.fori_loop(0, n, wrapped, None, unroll=min(unroll, n))


# --------------------------------------------------------------------------
# Pallas kernel: whole PNet forward for one batch element per grid step.
# --------------------------------------------------------------------------
def _pnet_kernel(x_ref,
                 w1_ref, b1_ref, a1_ref,
                 w2_ref, b2_ref, a2_ref,
                 w3_ref, b3_ref, a3_ref,
                 w4_ref, b4_ref,
                 se_ref, so_ref,
                 out_ref,
                 pool_buf, act2_buf):
    # Static geometry (x is (1, H*3, W); scratch rows are 16-sublane slots).
    W = x_ref.shape[2]
    H = x_ref.shape[1] // 3
    Hc1, Wc1 = H - 2, W - 2                       # after conv1 (3x3 valid)
    Hp, Wp = pool_buf.shape[0] // 16, pool_buf.shape[1]   # after maxpool (ceil)
    Ho2, Wo2 = act2_buf.shape[0] // 16, act2_buf.shape[1]  # after conv2
    Ho3, Wo3 = out_ref.shape[1], out_ref.shape[3]           # after conv3 / heads

    # ---- hoisted weight loads + bias / alpha broadcasts (once per grid step) ----
    w1 = w1_ref[...]; w2 = w2_ref[...]; w3 = w3_ref[...]; w4 = w4_ref[...]
    se = se_ref[...]; so = so_ref[...]
    mm = w1.dtype                                  # matmul operand dtype
    b1 = jnp.broadcast_to(b1_ref[...], (10, Wc1))
    a1 = jnp.broadcast_to(a1_ref[...], (10, Wc1))
    b2 = jnp.broadcast_to(b2_ref[...], (16, Wo2))
    a2 = jnp.broadcast_to(a2_ref[...], (16, Wo2))
    b3 = jnp.broadcast_to(b3_ref[...], (32, Wo3))
    a3 = jnp.broadcast_to(a3_ref[...], (32, Wo3))
    b4 = jnp.broadcast_to(b4_ref[...], (5, Wo3))
    conf_mask = lax.broadcasted_iota(jnp.int32, (5, Wo3), 0) == 0

    def conv_row(load_window, w_all, bias_b, alpha_b):
        # One conv output row = 3 MXU dots (one per kernel column dj).
        acc = bias_b
        for dj in range(3):
            win = load_window(dj)                              # (K, Wout)
            acc = acc + jnp.dot(w_all[dj], win.astype(mm),
                                preferred_element_type=jnp.float32)
        return jnp.where(acc > 0, acc, alpha_b * acc)          # PReLU

    # Zero the pool scratch once: conv2 weights are zero-padded over channel
    # slots [10,16) so those sublanes must not contain stale VMEM (0*NaN=NaN).
    pool_buf[...] = jnp.zeros_like(pool_buf)

    # ---- conv1 (3->10) + PReLU + MaxPool(2,2,ceil) fused row loop ----------
    def conv1_row(r):
        def load(dj):
            return x_ref[0, pl.ds(3 * r, 9), pl.ds(dj, Wc1)]   # (9, Wc1)
        return conv_row(load, w1, b1, a1)                      # (10, Wc1)

    def pool_body(p):
        r0 = 2 * p
        h = conv1_row(r0)
        if isinstance(p, int):                    # static (unrolled) path
            if r0 + 1 < Hc1:                      # ceil_mode: skip missing row
                h = jnp.maximum(h, conv1_row(r0 + 1))
        else:                                     # dynamic path: row clamp
            h = jnp.maximum(h, conv1_row(jnp.minimum(r0 + 1, Hc1 - 1)))
        # Width pooling: two 0/1 column-selection matmuls (ceil col clamp is
        # folded into `so`), max in registers, one lane-dense store.
        pooled = jnp.maximum(
            jnp.dot(h, se, preferred_element_type=jnp.float32),
            jnp.dot(h, so, preferred_element_type=jnp.float32))     # (10, Wp)
        pool_buf[pl.ds(16 * p, 10), :] = pooled

    _loop(Hp, pool_body)

    # ---- conv2 (10->16) + PReLU ---------------------------------------------
    def conv2_body(oh):
        def load(dj):
            return pool_buf[pl.ds(16 * oh, 48), pl.ds(dj, Wo2)]   # (48, Wo2)
        act2_buf[pl.ds(16 * oh, 16), :] = conv_row(load, w2, b2, a2)

    _loop(Ho2, conv2_body)

    # ---- conv3 (16->32) + PReLU + fused heads (32->5) -----------------------
    def conv3_body(oh):
        def load(dj):
            return act2_buf[pl.ds(16 * oh, 48), pl.ds(dj, Wo3)]   # (48, Wo3)
        y = conv_row(load, w3, b3, a3)                            # (32, Wo3)
        head = jnp.dot(w4, y.astype(mm),
                       preferred_element_type=jnp.float32) + b4   # (5, Wo3)
        out_ref[0, oh] = jnp.where(conf_mask,
                                   1.0 / (1.0 + jnp.exp(-head)), head)

    _loop(Ho3, conv3_body)


# --------------------------------------------------------------------------
# Wrapper: layout conversion, parameter packing, pallas_call setup.
# --------------------------------------------------------------------------
def pnet_pallas(x_nchw, params, *, use_bf16_matmul=False):
    (w1, b1, a1, w2, b2, a2, w3, b3, a3, w41, b41, w42, b42) = params
    N, C, H, W = x_nchw.shape
    assert C == 3
    # (N, C, H, W) -> (N, H*C, W): channels-on-sublanes, W-on-lanes.
    x2 = jnp.transpose(x_nchw.astype(jnp.float32), (0, 2, 1, 3)).reshape(N, H * 3, W)

    Hc1, Wc1 = H - 2, W - 2                 # conv1
    Hp, Wp = -(-Hc1 // 2), -(-Wc1 // 2)     # maxpool, ceil_mode=True
    Ho2, Wo2 = Hp - 2, Wp - 2               # conv2
    Ho3, Wo3 = Ho2 - 2, Wo2 - 2             # conv3 / heads

    mm_dtype = jnp.bfloat16 if use_bf16_matmul else jnp.float32

    def conv_w(w, cin_pad=None):
        # HWIO (3,3,cin,cout) -> (kw=dj, cout, kh*cin_pad), zero channel padding.
        kh, kw, cin, cout = w.shape
        wt = jnp.transpose(w, (1, 3, 0, 2))             # (dj, cout, di, ci)
        if cin_pad is not None and cin_pad != cin:
            wt = jnp.pad(wt, ((0, 0), (0, 0), (0, 0), (0, cin_pad - cin)))
            cin = cin_pad
        return wt.reshape(kw, cout, kh * cin).astype(mm_dtype)

    # Width-pool column selection matrices (ceil_mode col clamp in `so`).
    cols = np.arange(Wp)
    se = np.zeros((Wc1, Wp), np.float32)
    se[2 * cols, cols] = 1.0
    so = np.zeros((Wc1, Wp), np.float32)
    so[np.minimum(2 * cols + 1, Wc1 - 1), cols] = 1.0

    w4 = jnp.concatenate([w41.reshape(32, 1), w42.reshape(32, 4)],
                         axis=1).T.astype(mm_dtype)                # (5, 32)
    b4 = jnp.concatenate([b41, b42]).reshape(5, 1)

    consts = (
        conv_w(w1), b1.reshape(10, 1), a1.reshape(10, 1),
        conv_w(w2, cin_pad=16), b2.reshape(16, 1), a2.reshape(16, 1),
        conv_w(w3), b3.reshape(32, 1), a3.reshape(32, 1),
        w4, b4,
        jnp.asarray(se), jnp.asarray(so),
    )

    def const_spec(a):
        zeros = (0,) * a.ndim
        return pl.BlockSpec(a.shape, lambda n, z=zeros: z)

    in_specs = ([pl.BlockSpec((1, H * 3, W), lambda n: (n, 0, 0))]
                + [const_spec(a) for a in consts])
    out_specs = pl.BlockSpec((1, Ho3, 5, Wo3), lambda n: (n, 0, 0, 0))
    out_shape = jax.ShapeDtypeStruct((N, Ho3, 5, Wo3), jnp.float32)
    scratch_shapes = [
        pltpu.VMEM((Hp * 16, Wp), jnp.float32),    # pooled activations
        pltpu.VMEM((Ho2 * 16, Wo2), jnp.float32),  # conv2 activations
    ]

    flops = 2 * N * (Hc1 * Wc1 * 27 * 10 + 2 * Hp * Wp * Wc1 * 10
                     + Ho2 * Wo2 * 90 * 16 + Ho3 * Wo3 * 144 * 32
                     + Ho3 * Wo3 * 32 * 5)
    bytes_accessed = 4 * (int(np.prod(x2.shape)) + N * 5 * Ho3 * Wo3
                          + sum(int(np.prod(c.shape)) for c in consts))
    cost = pl.CostEstimate(flops=int(flops),
                           transcendentals=int(N * Ho3 * Wo3 * 5),
                           bytes_accessed=int(bytes_accessed))

    out = pl.pallas_call(
        _pnet_kernel,
        grid=(N,),
        in_specs=in_specs,
        out_specs=out_specs,
        out_shape=out_shape,
        scratch_shapes=scratch_shapes,
        compiler_params=pltpu.CompilerParams(
            dimension_semantics=("parallel",),
            vmem_limit_bytes=32 * 1024 * 1024),
        cost_estimate=cost,
    )(x2, *consts)

    # Split fused head slab back to PyTorch's (conf, off) NCHW convention.
    conf = jnp.transpose(out[:, :, 0:1, :], (0, 2, 1, 3))
    off = jnp.transpose(out[:, :, 1:5, :], (0, 2, 1, 3))
    return conf, off


# --------------------------------------------------------------------------
# Deterministic synthetic parameters (HWIO conv weights, matches PNet shapes).
# --------------------------------------------------------------------------
def init_params(key):
    keys = jax.random.split(key, 10)

    def cw(kk, ks, cin, cout):
        scale = 1.0 / np.sqrt(cin * ks * ks)
        return jax.random.normal(kk, (ks, ks, cin, cout), jnp.float32) * scale

    def cb(kk, cout):
        return jax.random.normal(kk, (cout,), jnp.float32) * 0.05

    w1, b1 = cw(keys[0], 3, 3, 10), cb(keys[1], 10)
    w2, b2 = cw(keys[2], 3, 10, 16), cb(keys[3], 16)
    w3, b3 = cw(keys[4], 3, 16, 32), cb(keys[5], 32)
    w41, b41 = cw(keys[6], 1, 32, 1), cb(keys[7], 1)
    w42, b42 = cw(keys[8], 1, 32, 4), cb(keys[9], 4)
    a1 = jnp.full((10,), 0.25, jnp.float32)     # PyTorch PReLU default init
    a2 = jnp.full((16,), 0.25, jnp.float32)
    a3 = jnp.full((32,), 0.25, jnp.float32)
    return (w1, b1, a1, w2, b2, a2, w3, b3, a3, w41, b41, w42, b42)


# --------------------------------------------------------------------------
# Pure-JAX reference (correctness check only).
# --------------------------------------------------------------------------
def pnet_reference(x_nchw, params):
    (w1, b1, a1, w2, b2, a2, w3, b3, a3, w41, b41, w42, b42) = params
    x = jnp.transpose(x_nchw, (0, 2, 3, 1)).astype(jnp.float32)

    def conv(x, w, b):
        y = jax.lax.conv_general_dilated(
            x, w, (1, 1), 'VALID',
            dimension_numbers=('NHWC', 'HWIO', 'NHWC'))
        return y + b.reshape(1, 1, 1, -1)

    def prelu(x, a):
        return jnp.where(x > 0, x, a.reshape(1, 1, 1, -1) * x)

    y = prelu(conv(x, w1, b1), a1)
    # MaxPool2d(2, 2, ceil_mode=True): pad to even with -inf, then VALID pool.
    _, Hh, Ww, _ = y.shape
    ph, pw = (-Hh) % 2, (-Ww) % 2
    y = jnp.pad(y, ((0, 0), (0, ph), (0, pw), (0, 0)), constant_values=-jnp.inf)
    y = jax.lax.reduce_window(y, -jnp.inf, jax.lax.max,
                              (1, 2, 2, 1), (1, 2, 2, 1), 'VALID')
    y = prelu(conv(y, w2, b2), a2)
    y = prelu(conv(y, w3, b3), a3)
    conf = jax.nn.sigmoid(conv(y, w41, b41))
    off = conv(y, w42, b42)
    return jnp.transpose(conf, (0, 3, 1, 2)), jnp.transpose(off, (0, 3, 1, 2))


if __name__ == "__main__":
    key = jax.random.PRNGKey(0)
    pkey, xkey = jax.random.split(key)
    params = init_params(pkey)
    x = jax.random.normal(xkey, (2, 3, 16, 16), jnp.float32)   # NCHW

    conf, off = pnet_pallas(x, params)
    conf = jax.block_until_ready(conf)
    off = jax.block_until_ready(off)

    assert conf.shape == (2, 1, 3, 3), conf.shape
    assert off.shape == (2, 4, 3, 3), off.shape

    ref_conf, ref_off = pnet_reference(x, params)
    np.testing.assert_allclose(np.asarray(conf), np.asarray(ref_conf),
                               rtol=5e-2, atol=5e-2)
    np.testing.assert_allclose(np.asarray(off), np.asarray(ref_off),
                               rtol=5e-2, atol=5e-2)

    print("KERNEL_OK")
</pallas_src>

<mosaic_0001>
module attributes {stable_mosaic.version = 11 : i64} {
  func.func @_pnet_kernel(%arg0: i32, %arg1: memref<1x48x16xf32, #tpu.memory_space<vmem>>, %arg2: memref<3x10x9xf32, #tpu.memory_space<vmem>>, %arg3: memref<10x1xf32, #tpu.memory_space<vmem>>, %arg4: memref<10x1xf32, #tpu.memory_space<vmem>>, %arg5: memref<3x16x48xf32, #tpu.memory_space<vmem>>, %arg6: memref<16x1xf32, #tpu.memory_space<vmem>>, %arg7: memref<16x1xf32, #tpu.memory_space<vmem>>, %arg8: memref<3x32x48xf32, #tpu.memory_space<vmem>>, %arg9: memref<32x1xf32, #tpu.memory_space<vmem>>, %arg10: memref<32x1xf32, #tpu.memory_space<vmem>>, %arg11: memref<5x32xf32, #tpu.memory_space<vmem>>, %arg12: memref<5x1xf32, #tpu.memory_space<vmem>>, %arg13: memref<14x7xf32, #tpu.memory_space<vmem>>, %arg14: memref<14x7xf32, #tpu.memory_space<vmem>>, %arg15: memref<1x3x5x3xf32, #tpu.memory_space<vmem>>, %arg16: memref<112x7xf32, #tpu.memory_space<vmem>>, %arg17: memref<80x5xf32, #tpu.memory_space<vmem>>) attributes {dimension_semantics = [#tpu.dimension_semantics<parallel>], iteration_bounds = array<i64: 2>, scalar_prefetch = 0 : i64, scratch_operands = 2 : i64, tpu.core_type = #tpu.core_type<tc>, window_params = [{transform_indices = @transform_0, window_bounds = array<i64: 1, 48, 16>}, {pipeline_mode = #tpu.pipeline_mode<synchronous>, transform_indices = @transform_1, window_bounds = array<i64: 3, 10, 9>}, {pipeline_mode = #tpu.pipeline_mode<synchronous>, transform_indices = @transform_2, window_bounds = array<i64: 10, 1>}, {pipeline_mode = #tpu.pipeline_mode<synchronous>, transform_indices = @transform_3, window_bounds = array<i64: 10, 1>}, {pipeline_mode = #tpu.pipeline_mode<synchronous>, transform_indices = @transform_4, window_bounds = array<i64: 3, 16, 48>}, {pipeline_mode = #tpu.pipeline_mode<synchronous>, transform_indices = @transform_5, window_bounds = array<i64: 16, 1>}, {pipeline_mode = #tpu.pipeline_mode<synchronous>, transform_indices = @transform_6, window_bounds = array<i64: 16, 1>}, {pipeline_mode = #tpu.pipeline_mode<synchronous>, transform_indices = @transform_7, window_bounds = array<i64: 3, 32, 48>}, {pipeline_mode = #tpu.pipeline_mode<synchronous>, transform_indices = @transform_8, window_bounds = array<i64: 32, 1>}, {pipeline_mode = #tpu.pipeline_mode<synchronous>, transform_indices = @transform_9, window_bounds = array<i64: 32, 1>}, {pipeline_mode = #tpu.pipeline_mode<synchronous>, transform_indices = @transform_10, window_bounds = array<i64: 5, 32>}, {pipeline_mode = #tpu.pipeline_mode<synchronous>, transform_indices = @transform_11, window_bounds = array<i64: 5, 1>}, {pipeline_mode = #tpu.pipeline_mode<synchronous>, transform_indices = @transform_12, window_bounds = array<i64: 14, 7>}, {pipeline_mode = #tpu.pipeline_mode<synchronous>, transform_indices = @transform_13, window_bounds = array<i64: 14, 7>}, {transform_indices = @transform_14, window_bounds = array<i64: 1, 3, 5, 3>}]} {
    %c0 = arith.constant 0 : index
    %c0_0 = arith.constant 0 : index
    %c0_1 = arith.constant 0 : index
    %0 = vector.load %arg2[%c0, %c0_0, %c0_1] : memref<3x10x9xf32, #tpu.memory_space<vmem>>, vector<3x10x9xf32>
    %c0_2 = arith.constant 0 : index
    %c0_3 = arith.constant 0 : index
    %c0_4 = arith.constant 0 : index
    %1 = vector.load %arg5[%c0_2, %c0_3, %c0_4] : memref<3x16x48xf32, #tpu.memory_space<vmem>>, vector<3x16x48xf32>
    %c0_5 = arith.constant 0 : index
    %c0_6 = arith.constant 0 : index
    %c0_7 = arith.constant 0 : index
    %2 = vector.load %arg8[%c0_5, %c0_6, %c0_7] : memref<3x32x48xf32, #tpu.memory_space<vmem>>, vector<3x32x48xf32>
    %c0_8 = arith.constant 0 : index
    %c0_9 = arith.constant 0 : index
    %3 = vector.load %arg11[%c0_8, %c0_9] : memref<5x32xf32, #tpu.memory_space<vmem>>, vector<5x32xf32>
    %c0_10 = arith.constant 0 : index
    %c0_11 = arith.constant 0 : index
    %4 = vector.load %arg13[%c0_10, %c0_11] : memref<14x7xf32, #tpu.memory_space<vmem>>, vector<14x7xf32>
    %c0_12 = arith.constant 0 : index
    %c0_13 = arith.constant 0 : index
    %5 = vector.load %arg14[%c0_12, %c0_13] : memref<14x7xf32, #tpu.memory_space<vmem>>, vector<14x7xf32>
    %c0_14 = arith.constant 0 : index
    %c0_15 = arith.constant 0 : index
    %6 = vector.load %arg3[%c0_14, %c0_15] : memref<10x1xf32, #tpu.memory_space<vmem>>, vector<10x1xf32>
    %7 = vector.shape_cast %6 : vector<10x1xf32> to vector<10x1xf32>
    %8 = vector.broadcast %7 : vector<10x1xf32> to vector<10x14xf32>
    %c0_16 = arith.constant 0 : index
    %c0_17 = arith.constant 0 : index
    %9 = vector.load %arg4[%c0_16, %c0_17] : memref<10x1xf32, #tpu.memory_space<vmem>>, vector<10x1xf32>
    %10 = vector.shape_cast %9 : vector<10x1xf32> to vector<10x1xf32>
    %11 = vector.broadcast %10 : vector<10x1xf32> to vector<10x14xf32>
    %c0_18 = arith.constant 0 : index
    %c0_19 = arith.constant 0 : index
    %12 = vector.load %arg6[%c0_18, %c0_19] : memref<16x1xf32, #tpu.memory_space<vmem>>, vector<16x1xf32>
    %13 = vector.shape_cast %12 : vector<16x1xf32> to vector<16x1xf32>
    %14 = vector.broadcast %13 : vector<16x1xf32> to vector<16x5xf32>
    %c0_20 = arith.constant 0 : index
    %c0_21 = arith.constant 0 : index
    %15 = vector.load %arg7[%c0_20, %c0_21] : memref<16x1xf32, #tpu.memory_space<vmem>>, vector<16x1xf32>
    %16 = vector.shape_cast %15 : vector<16x1xf32> to vector<16x1xf32>
    %17 = vector.broadcast %16 : vector<16x1xf32> to vector<16x5xf32>
    %c0_22 = arith.constant 0 : index
    %c0_23 = arith.constant 0 : index
    %18 = vector.load %arg9[%c0_22, %c0_23] : memref<32x1xf32, #tpu.memory_space<vmem>>, vector<32x1xf32>
    %19 = vector.shape_cast %18 : vector<32x1xf32> to vector<32x1xf32>
    %20 = vector.broadcast %19 : vector<32x1xf32> to vector<32x3xf32>
    %c0_24 = arith.constant 0 : index
    %c0_25 = arith.constant 0 : index
    %21 = vector.load %arg10[%c0_24, %c0_25] : memref<32x1xf32, #tpu.memory_space<vmem>>, vector<32x1xf32>
    %22 = vector.shape_cast %21 : vector<32x1xf32> to vector<32x1xf32>
    %23 = vector.broadcast %22 : vector<32x1xf32> to vector<32x3xf32>
    %c0_26 = arith.constant 0 : index
    %c0_27 = arith.constant 0 : index
    %24 = vector.load %arg12[%c0_26, %c0_27] : memref<5x1xf32, #tpu.memory_space<vmem>>, vector<5x1xf32>
    %25 = vector.shape_cast %24 : vector<5x1xf32> to vector<5x1xf32>
    %26 = vector.broadcast %25 : vector<5x1xf32> to vector<5x3xf32>
    %27 = tpu.iota {dimensions = array<i32: 0>} : vector<5x3xi32>
    %c0_i32 = arith.constant 0 : i32
    %28 = vector.broadcast %c0_i32 : i32 to vector<5x3xi32>
    %29 = arith.cmpi eq, %27, %28 : vector<5x3xi32>
    %cst = arith.constant 0.000000e+00 : f32
    %30 = vector.broadcast %cst : f32 to vector<112x7xf32>
    %c0_28 = arith.constant 0 : index
    %c0_29 = arith.constant 0 : index
    %31 = vector.load %arg16[%c0_28, %c0_29] : memref<112x7xf32, #tpu.memory_space<vmem>>, vector<112x7xf32>
    tpu.vector_store %arg16[%c0_28, %c0_29], %30 {strides = array<i32>} : memref<112x7xf32, #tpu.memory_space<vmem>>, vector<112x7xf32>,
    %c0_30 = arith.constant 0 : index
    %c0_31 = arith.constant 0 : index
    %c0_32 = arith.constant 0 : index
    %32 = vector.load %arg1[%c0_30, %c0_31, %c0_32] : memref<1x48x16xf32, #tpu.memory_space<vmem>>, vector<1x9x14xf32>
    %33 = vector.shape_cast %32 : vector<1x9x14xf32> to vector<9x14xf32>
    %34 = vector.extract_strided_slice %0 {offsets = [0, 0, 0], sizes = [1, 10, 9], strides = [1, 1, 1]} : vector<3x10x9xf32> to vector<1x10x9xf32>
    %35 = vector.shape_cast %34 : vector<1x10x9xf32> to vector<10x9xf32>
    %cst_33 = arith.constant dense<0.000000e+00> : vector<10x14xf32>
    %36 = tpu.matmul %35, %33, %cst_33 {dimension_numbers = #tpu.dot_dimension_numbers<[1], [0], [0], [1], [0, 0, 1, 1], [], []>} : vector<10x9xf32>, vector<9x14xf32>, vector<10x14xf32> -> vector<10x14xf32>
    %37 = arith.addf %8, %36 : vector<10x14xf32>
    %c0_34 = arith.constant 0 : index
    %c0_35 = arith.constant 0 : index
    %c1 = arith.constant 1 : index
    %38 = vector.load %arg1[%c0_34, %c0_35, %c1] : memref<1x48x16xf32, #tpu.memory_space<vmem>>, vector<1x9x14xf32>
    %39 = vector.shape_cast %38 : vector<1x9x14xf32> to vector<9x14xf32>
    %40 = vector.extract_strided_slice %0 {offsets = [1, 0, 0], sizes = [1, 10, 9], strides = [1, 1, 1]} : vector<3x10x9xf32> to vector<1x10x9xf32>
    %41 = vector.shape_cast %40 : vector<1x10x9xf32> to vector<10x9xf32>
    %cst_36 = arith.constant dense<0.000000e+00> : vector<10x14xf32>
    %42 = tpu.matmul %41, %39, %cst_36 {dimension_numbers = #tpu.dot_dimension_numbers<[1], [0], [0], [1], [0, 0, 1, 1], [], []>} : vector<10x9xf32>, vector<9x14xf32>, vector<10x14xf32> -> vector<10x14xf32>
    %43 = arith.addf %37, %42 : vector<10x14xf32>
    %c0_37 = arith.constant 0 : index
    %c0_38 = arith.constant 0 : index
    %c2 = arith.constant 2 : index
    %44 = vector.load %arg1[%c0_37, %c0_38, %c2] : memref<1x48x16xf32, #tpu.memory_space<vmem>>, vector<1x9x14xf32>
    %45 = vector.shape_cast %44 : vector<1x9x14xf32> to vector<9x14xf32>
    %46 = vector.extract_strided_slice %0 {offsets = [2, 0, 0], sizes = [1, 10, 9], strides = [1, 1, 1]} : vector<3x10x9xf32> to vector<1x10x9xf32>
    %47 = vector.shape_cast %46 : vector<1x10x9xf32> to vector<10x9xf32>
    %cst_39 = arith.constant dense<0.000000e+00> : vector<10x14xf32>
    %48 = tpu.matmul %47, %45, %cst_39 {dimension_numbers = #tpu.dot_dimension_numbers<[1], [0], [0], [1], [0, 0, 1, 1], [], []>} : vector<10x9xf32>, vector<9x14xf32>, vector<10x14xf32> -> vector<10x14xf32>
    %49 = arith.addf %43, %48 : vector<10x14xf32>
    %cst_40 = arith.constant 0.000000e+00 : f32
    %50 = vector.broadcast %cst_40 : f32 to vector<10x14xf32>
    %51 = arith.cmpf ogt, %49, %50 : vector<10x14xf32>
    %52 = arith.mulf %11, %49 : vector<10x14xf32>
    %53 = arith.select %51, %49, %52 : vector<10x14xi1>, vector<10x14xf32>
    %c0_41 = arith.constant 0 : index
    %c3 = arith.constant 3 : index
    %c0_42 = arith.constant 0 : index
    %54 = vector.load %arg1[%c0_41, %c3, %c0_42] : memref<1x48x16xf32, #tpu.memory_space<vmem>>, vector<1x9x14xf32>
    %55 = vector.shape_cast %54 : vector<1x9x14xf32> to vector<9x14xf32>
    %56 = vector.extract_strided_slice %0 {offsets = [0, 0, 0], sizes = [1, 10, 9], strides = [1, 1, 1]} : vector<3x10x9xf32> to vector<1x10x9xf32>
    %57 = vector.shape_cast %56 : vector<1x10x9xf32> to vector<10x9xf32>
    %cst_43 = arith.constant dense<0.000000e+00> : vector<10x14xf32>
    %58 = tpu.matmul %57, %55, %cst_43 {dimension_numbers = #tpu.dot_dimension_numbers<[1], [0], [0], [1], [0, 0, 1, 1], [], []>} : vector<10x9xf32>, vector<9x14xf32>, vector<10x14xf32> -> vector<10x14xf32>
    %59 = arith.addf %8, %58 : vector<10x14xf32>
    %c0_44 = arith.constant 0 : index
    %c3_45 = arith.constant 3 : index
    %c1_46 = arith.constant 1 : index
    %60 = vector.load %arg1[%c0_44, %c3_45, %c1_46] : memref<1x48x16xf32, #tpu.memory_space<vmem>>, vector<1x9x14xf32>
    %61 = vector.shape_cast %60 : vector<1x9x14xf32> to vector<9x14xf32>
    %62 = vector.extract_strided_slice %0 {offsets = [1, 0, 0], sizes = [1, 10, 9], strides = [1, 1, 1]} : vector<3x10x9xf32> to vector<1x10x9xf32>
    %63 = vector.shape_cast %62 : vector<1x10x9xf32> to vector<10x9xf32>
    %cst_47 = arith.constant dense<0.000000e+00> : vector<10x14xf32>
    %64 = tpu.matmul %63, %61, %cst_47 {dimension_numbers = #tpu.dot_dimension_numbers<[1], [0], [0], [1], [0, 0, 1, 1], [], []>} : vector<10x9xf32>, vector<9x14xf32>, vector<10x14xf32> -> vector<10x14xf32>
    %65 = arith.addf %59, %64 : vector<10x14xf32>
    %c0_48 = arith.constant 0 : index
    %c3_49 = arith.constant 3 : index
    %c2_50 = arith.constant 2 : index
    %66 = vector.load %arg1[%c0_48, %c3_49, %c2_50] : memref<1x48x16xf32, #tpu.memory_space<vmem>>, vector<1x9x14xf32>
    %67 = vector.shape_cast %66 : vector<1x9x14xf32> to vector<9x14xf32>
    %68 = vector.extract_strided_slice %0 {offsets = [2, 0, 0], sizes = [1, 10, 9], strides = [1, 1, 1]} : vector<3x10x9xf32> to vector<1x10x9xf32>
    %69 = vector.shape_cast %68 : vector<1x10x9xf32> to vector<10x9xf32>
    %cst_51 = arith.constant dense<0.000000e+00> : vector<10x14xf32>
    %70 = tpu.matmul %69, %67, %cst_51 {dimension_numbers = #tpu.dot_dimension_numbers<[1], [0], [0], [1], [0, 0, 1, 1], [], []>} : vector<10x9xf32>, vector<9x14xf32>, vector<10x14xf32> -> vector<10x14xf32>
    %71 = arith.addf %65, %70 : vector<10x14xf32>
    %cst_52 = arith.constant 0.000000e+00 : f32
    %72 = vector.broadcast %cst_52 : f32 to vector<10x14xf32>
    %73 = arith.cmpf ogt, %71, %72 : vector<10x14xf32>
    %74 = arith.mulf %11, %71 : vector<10x14xf32>
    %75 = arith.select %73, %71, %74 : vector<10x14xi1>, vector<10x14xf32>
    %76 = arith.maximumf %53, %75 : vector<10x14xf32>
    %cst_53 = arith.constant dense<0.000000e+00> : vector<10x7xf32>
    %77 = tpu.matmul %76, %4, %cst_53 {dimension_numbers = #tpu.dot_dimension_numbers<[1], [0], [0], [1], [0, 0, 1, 1], [], []>} : vector<10x14xf32>, vector<14x7xf32>, vector<10x7xf32> -> vector<10x7xf32>
    %cst_54 = arith.constant dense<0.000000e+00> : vector<10x7xf32>
    %78 = tpu.matmul %76, %5, %cst_54 {dimension_numbers = #tpu.dot_dimension_numbers<[1], [0], [0], [1], [0, 0, 1, 1], [], []>} : vector<10x14xf32>, vector<14x7xf32>, vector<10x7xf32> -> vector<10x7xf32>
    %79 = arith.maximumf %77, %78 : vector<10x7xf32>
    %c0_55 = arith.constant 0 : index
    %c0_56 = arith.constant 0 : index
    %80 = vector.load %arg16[%c0_55, %c0_56] : memref<112x7xf32, #tpu.memory_space<vmem>>, vector<10x7xf32>
    tpu.vector_store %arg16[%c0_55, %c0_56], %79 {strides = array<i32>} : memref<112x7xf32, #tpu.memory_space<vmem>>, vector<10x7xf32>,
    %c0_57 = arith.constant 0 : index
    %c6 = arith.constant 6 : index
    %c0_58 = arith.constant 0 : index
    %81 = vector.load %arg1[%c0_57, %c6, %c0_58] : memref<1x48x16xf32, #tpu.memory_space<vmem>>, vector<1x9x14xf32>
    %82 = vector.shape_cast %81 : vector<1x9x14xf32> to vector<9x14xf32>
    %83 = vector.extract_strided_slice %0 {offsets = [0, 0, 0], sizes = [1, 10, 9], strides = [1, 1, 1]} : vector<3x10x9xf32> to vector<1x10x9xf32>
    %84 = vector.shape_cast %83 : vector<1x10x9xf32> to vector<10x9xf32>
    %cst_59 = arith.constant dense<0.000000e+00> : vector<10x14xf32>
    %85 = tpu.matmul %84, %82, %cst_59 {dimension_numbers = #tpu.dot_dimension_numbers<[1], [0], [0], [1], [0, 0, 1, 1], [], []>} : vector<10x9xf32>, vector<9x14xf32>, vector<10x14xf32> -> vector<10x14xf32>
    %86 = arith.addf %8, %85 : vector<10x14xf32>
    %c0_60 = arith.constant 0 : index
    %c6_61 = arith.constant 6 : index
    %c1_62 = arith.constant 1 : index
    %87 = vector.load %arg1[%c0_60, %c6_61, %c1_62] : memref<1x48x16xf32, #tpu.memory_space<vmem>>, vector<1x9x14xf32>
    %88 = vector.shape_cast %87 : vector<1x9x14xf32> to vector<9x14xf32>
    %89 = vector.extract_strided_slice %0 {offsets = [1, 0, 0], sizes = [1, 10, 9], strides = [1, 1, 1]} : vector<3x10x9xf32> to vector<1x10x9xf32>
    %90 = vector.shape_cast %89 : vector<1x10x9xf32> to vector<10x9xf32>
    %cst_63 = arith.constant dense<0.000000e+00> : vector<10x14xf32>
    %91 = tpu.matmul %90, %88, %cst_63 {dimension_numbers = #tpu.dot_dimension_numbers<[1], [0], [0], [1], [0, 0, 1, 1], [], []>} : vector<10x9xf32>, vector<9x14xf32>, vector<10x14xf32> -> vector<10x14xf32>
    %92 = arith.addf %86, %91 : vector<10x14xf32>
    %c0_64 = arith.constant 0 : index
    %c6_65 = arith.constant 6 : index
    %c2_66 = arith.constant 2 : index
    %93 = vector.load %arg1[%c0_64, %c6_65, %c2_66] : memref<1x48x16xf32, #tpu.memory_space<vmem>>, vector<1x9x14xf32>
    %94 = vector.shape_cast %93 : vector<1x9x14xf32> to vector<9x14xf32>
    %95 = vector.extract_strided_slice %0 {offsets = [2, 0, 0], sizes = [1, 10, 9], strides = [1, 1, 1]} : vector<3x10x9xf32> to vector<1x10x9xf32>
    %96 = vector.shape_cast %95 : vector<1x10x9xf32> to vector<10x9xf32>
    %cst_67 = arith.constant dense<0.000000e+00> : vector<10x14xf32>
    %97 = tpu.matmul %96, %94, %cst_67 {dimension_numbers = #tpu.dot_dimension_numbers<[1], [0], [0], [1], [0, 0, 1, 1], [], []>} : vector<10x9xf32>, vector<9x14xf32>, vector<10x14xf32> -> vector<10x14xf32>
    %98 = arith.addf %92, %97 : vector<10x14xf32>
    %cst_68 = arith.constant 0.000000e+00 : f32
    %99 = vector.broadcast %cst_68 : f32 to vector<10x14xf32>
    %100 = arith.cmpf ogt, %98, %99 : vector<10x14xf32>
    %101 = arith.mulf %11, %98 : vector<10x14xf32>
    %102 = arith.select %100, %98, %101 : vector<10x14xi1>, vector<10x14xf32>
    %c0_69 = arith.constant 0 : index
    %c9 = arith.constant 9 : index
    %c0_70 = arith.constant 0 : index
    %103 = vector.load %arg1[%c0_69, %c9, %c0_70] : memref<1x48x16xf32, #tpu.memory_space<vmem>>, vector<1x9x14xf32>
    %104 = vector.shape_cast %103 : vector<1x9x14xf32> to vector<9x14xf32>
    %105 = vector.extract_strided_slice %0 {offsets = [0, 0, 0], sizes = [1, 10, 9], strides = [1, 1, 1]} : vector<3x10x9xf32> to vector<1x10x9xf32>
    %106 = vector.shape_cast %105 : vector<1x10x9xf32> to vector<10x9xf32>
    %cst_71 = arith.constant dense<0.000000e+00> : vector<10x14xf32>
    %107 = tpu.matmul %106, %104, %cst_71 {dimension_numbers = #tpu.dot_dimension_numbers<[1], [0], [0], [1], [0, 0, 1, 1], [], []>} : vector<10x9xf32>, vector<9x14xf32>, vector<10x14xf32> -> vector<10x14xf32>
    %108 = arith.addf %8, %107 : vector<10x14xf32>
    %c0_72 = arith.constant 0 : index
    %c9_73 = arith.constant 9 : index
    %c1_74 = arith.constant 1 : index
    %109 = vector.load %arg1[%c0_72, %c9_73, %c1_74] : memref<1x48x16xf32, #tpu.memory_space<vmem>>, vector<1x9x14xf32>
    %110 = vector.shape_cast %109 : vector<1x9x14xf32> to vector<9x14xf32>
    %111 = vector.extract_strided_slice %0 {offsets = [1, 0, 0], sizes = [1, 10, 9], strides = [1, 1, 1]} : vector<3x10x9xf32> to vector<1x10x9xf32>
    %112 = vector.shape_cast %111 : vector<1x10x9xf32> to vector<10x9xf32>
    %cst_75 = arith.constant dense<0.000000e+00> : vector<10x14xf32>
    %113 = tpu.matmul %112, %110, %cst_75 {dimension_numbers = #tpu.dot_dimension_numbers<[1], [0], [0], [1], [0, 0, 1, 1], [], []>} : vector<10x9xf32>, vector<9x14xf32>, vector<10x14xf32> -> vector<10x14xf32>
    %114 = arith.addf %108, %113 : vector<10x14xf32>
    %c0_76 = arith.constant 0 : index
    %c9_77 = arith.constant 9 : index
    %c2_78 = arith.constant 2 : index
    %115 = vector.load %arg1[%c0_76, %c9_77, %c2_78] : memref<1x48x16xf32, #tpu.memory_space<vmem>>, vector<1x9x14xf32>
    %116 = vector.shape_cast %115 : vector<1x9x14xf32> to vector<9x14xf32>
    %117 = vector.extract_strided_slice %0 {offsets = [2, 0, 0], sizes = [1, 10, 9], strides = [1, 1, 1]} : vector<3x10x9xf32> to vector<1x10x9xf32>
    %118 = vector.shape_cast %117 : vector<1x10x9xf32> to vector<10x9xf32>
    %cst_79 = arith.constant dense<0.000000e+00> : vector<10x14xf32>
    %119 = tpu.matmul %118, %116, %cst_79 {dimension_numbers = #tpu.dot_dimension_numbers<[1], [0], [0], [1], [0, 0, 1, 1], [], []>} : vector<10x9xf32>, vector<9x14xf32>, vector<10x14xf32> -> vector<10x14xf32>
    %120 = arith.addf %114, %119 : vector<10x14xf32>
    %cst_80 = arith.constant 0.000000e+00 : f32
    %121 = vector.broadcast %cst_80 : f32 to vector<10x14xf32>
    %122 = arith.cmpf ogt, %120, %121 : vector<10x14xf32>
    %123 = arith.mulf %11, %120 : vector<10x14xf32>
    %124 = arith.select %122, %120, %123 : vector<10x14xi1>, vector<10x14xf32>
    %125 = arith.maximumf %102, %124 : vector<10x14xf32>
    %cst_81 = arith.constant dense<0.000000e+00> : vector<10x7xf32>
    %126 = tpu.matmul %125, %4, %cst_81 {dimension_numbers = #tpu.dot_dimension_numbers<[1], [0], [0], [1], [0, 0, 1, 1], [], []>} : vector<10x14xf32>, vector<14x7xf32>, vector<10x7xf32> -> vector<10x7xf32>
    %cst_82 = arith.constant dense<0.000000e+00> : vector<10x7xf32>
    %127 = tpu.matmul %125, %5, %cst_82 {dimension_numbers = #tpu.dot_dimension_numbers<[1], [0], [0], [1], [0, 0, 1, 1], [], []>} : vector<10x14xf32>, vector<14x7xf32>, vector<10x7xf32> -> vector<10x7xf32>
    %128 = arith.maximumf %126, %127 : vector<10x7xf32>
    %c16 = arith.constant 16 : index
    %c0_83 = arith.constant 0 : index
    %129 = vector.load %arg16[%c16, %c0_83] : memref<112x7xf32, #tpu.memory_space<vmem>>, vector<10x7xf32>
    tpu.vector_store %arg16[%c16, %c0_83], %128 {strides = array<i32>} : memref<112x7xf32, #tpu.memory_space<vmem>>, vector<10x7xf32>,
    %c0_84 = arith.constant 0 : index
    %c12 = arith.constant 12 : index
    %c0_85 = arith.constant 0 : index
    %130 = vector.load %arg1[%c0_84, %c12, %c0_85] : memref<1x48x16xf32, #tpu.memory_space<vmem>>, vector<1x9x14xf32>
    %131 = vector.shape_cast %130 : vector<1x9x14xf32> to vector<9x14xf32>
    %132 = vector.extract_strided_slice %0 {offsets = [0, 0, 0], sizes = [1, 10, 9], strides = [1, 1, 1]} : vector<3x10x9xf32> to vector<1x10x9xf32>
    %133 = vector.shape_cast %132 : vector<1x10x9xf32> to vector<10x9xf32>
    %cst_86 = arith.constant dense<0.000000e+00> : vector<10x14xf32>
    %134 = tpu.matmul %133, %131, %cst_86 {dimension_numbers = #tpu.dot_dimension_numbers<[1], [0], [0], [1], [0, 0, 1, 1], [], []>} : vector<10x9xf32>, vector<9x14xf32>, vector<10x14xf32> -> vector<10x14xf32>
    %135 = arith.addf %8, %134 : vector<10x14xf32>
    %c0_87 = arith.constant 0 : index
    %c12_88 = arith.constant 12 : index
    %c1_89 = arith.constant 1 : index
    %136 = vector.load %arg1[%c0_87, %c12_88, %c1_89] : memref<1x48x16xf32, #tpu.memory_space<vmem>>, vector<1x9x14xf32>
    %137 = vector.shape_cast %136 : vector<1x9x14xf32> to vector<9x14xf32>
    %138 = vector.extract_strided_slice %0 {offsets = [1, 0, 0], sizes = [1, 10, 9], strides = [1, 1, 1]} : vector<3x10x9xf32> to vector<1x10x9xf32>
    %139 = vector.shape_cast %138 : vector<1x10x9xf32> to vector<10x9xf32>
    %cst_90 = arith.constant dense<0.000000e+00> : vector<10x14xf32>
    %140 = tpu.matmul %139, %137, %cst_90 {dimension_numbers = #tpu.dot_dimension_numbers<[1], [0], [0], [1], [0, 0, 1, 1], [], []>} : vector<10x9xf32>, vector<9x14xf32>, vector<10x14xf32> -> vector<10x14xf32>
    %141 = arith.addf %135, %140 : vector<10x14xf32>
    %c0_91 = arith.constant 0 : index
    %c12_92 = arith.constant 12 : index
    %c2_93 = arith.constant 2 : index
    %142 = vector.load %arg1[%c0_91, %c12_92, %c2_93] : memref<1x48x16xf32, #tpu.memory_space<vmem>>, vector<1x9x14xf32>
    %143 = vector.shape_cast %142 : vector<1x9x14xf32> to vector<9x14xf32>
    %144 = vector.extract_strided_slice %0 {offsets = [2, 0, 0], sizes = [1, 10, 9], strides = [1, 1, 1]} : vector<3x10x9xf32> to vector<1x10x9xf32>
    %145 = vector.shape_cast %144 : vector<1x10x9xf32> to vector<10x9xf32>
    %cst_94 = arith.constant dense<0.000000e+00> : vector<10x14xf32>
    %146 = tpu.matmul %145, %143, %cst_94 {dimension_numbers = #tpu.dot_dimension_numbers<[1], [0], [0], [1], [0, 0, 1, 1], [], []>} : vector<10x9xf32>, vector<9x14xf32>, vector<10x14xf32> -> vector<10x14xf32>
    %147 = arith.addf %141, %146 : vector<10x14xf32>
    %cst_95 = arith.constant 0.000000e+00 : f32
    %148 = vector.broadcast %cst_95 : f32 to vector<10x14xf32>
    %149 = arith.cmpf ogt, %147, %148 : vector<10x14xf32>
    %150 = arith.mulf %11, %147 : vector<10x14xf32>
    %151 = arith.select %149, %147, %150 : vector<10x14xi1>, vector<10x14xf32>
    %c0_96 = arith.constant 0 : index
    %c15 = arith.constant 15 : index
    %c0_97 = arith.constant 0 : index
    %152 = vector.load %arg1[%c0_96, %c15, %c0_97] : memref<1x48x16xf32, #tpu.memory_space<vmem>>, vector<1x9x14xf32>
    %153 = vector.shape_cast %152 : vector<1x9x14xf32> to vector<9x14xf32>
    %154 = vector.extract_strided_slice %0 {offsets = [0, 0, 0], sizes = [1, 10, 9], strides = [1, 1, 1]} : vector<3x10x9xf32> to vector<1x10x9xf32>
    %155 = vector.shape_cast %154 : vector<1x10x9xf32> to vector<10x9xf32>
    %cst_98 = arith.constant dense<0.000000e+00> : vector<10x14xf32>
    %156 = tpu.matmul %155, %153, %cst_98 {dimension_numbers = #tpu.dot_dimension_numbers<[1], [0], [0], [1], [0, 0, 1, 1], [], []>} : vector<10x9xf32>, vector<9x14xf32>, vector<10x14xf32> -> vector<10x14xf32>
    %157 = arith.addf %8, %156 : vector<10x14xf32>
    %c0_99 = arith.constant 0 : index
    %c15_100 = arith.constant 15 : index
    %c1_101 = arith.constant 1 : index
    %158 = vector.load %arg1[%c0_99, %c15_100, %c1_101] : memref<1x48x16xf32, #tpu.memory_space<vmem>>, vector<1x9x14xf32>
    %159 = vector.shape_cast %158 : vector<1x9x14xf32> to vector<9x14xf32>
    %160 = vector.extract_strided_slice %0 {offsets = [1, 0, 0], sizes = [1, 10, 9], strides = [1, 1, 1]} : vector<3x10x9xf32> to vector<1x10x9xf32>
    %161 = vector.shape_cast %160 : vector<1x10x9xf32> to vector<10x9xf32>
    %cst_102 = arith.constant dense<0.000000e+00> : vector<10x14xf32>
    %162 = tpu.matmul %161, %159, %cst_102 {dimension_numbers = #tpu.dot_dimension_numbers<[1], [0], [0], [1], [0, 0, 1, 1], [], []>} : vector<10x9xf32>, vector<9x14xf32>, vector<10x14xf32> -> vector<10x14xf32>
    %163 = arith.addf %157, %162 : vector<10x14xf32>
    %c0_103 = arith.constant 0 : index
    %c15_104 = arith.constant 15 : index
    %c2_105 = arith.constant 2 : index
    %164 = vector.load %arg1[%c0_103, %c15_104, %c2_105] : memref<1x48x16xf32, #tpu.memory_space<vmem>>, vector<1x9x14xf32>
    %165 = vector.shape_cast %164 : vector<1x9x14xf32> to vector<9x14xf32>
    %166 = vector.extract_strided_slice %0 {offsets = [2, 0, 0], sizes = [1, 10, 9], strides = [1, 1, 1]} : vector<3x10x9xf32> to vector<1x10x9xf32>
    %167 = vector.shape_cast %166 : vector<1x10x9xf32> to vector<10x9xf32>
    %cst_106 = arith.constant dense<0.000000e+00> : vector<10x14xf32>
    %168 = tpu.matmul %167, %165, %cst_106 {dimension_numbers = #tpu.dot_dimension_numbers<[1], [0], [0], [1], [0, 0, 1, 1], [], []>} : vector<10x9xf32>, vector<9x14xf32>, vector<10x14xf32> -> vector<10x14xf32>
    %169 = arith.addf %163, %168 : vector<10x14xf32>
    %cst_107 = arith.constant 0.000000e+00 : f32
    %170 = vector.broadcast %cst_107 : f32 to vector<10x14xf32>
    %171 = arith.cmpf ogt, %169, %170 : vector<10x14xf32>
    %172 = arith.mulf %11, %169 : vector<10x14xf32>
    %173 = arith.select %171, %169, %172 : vector<10x14xi1>, vector<10x14xf32>
    %174 = arith.maximumf %151, %173 : vector<10x14xf32>
    %cst_108 = arith.constant dense<0.000000e+00> : vector<10x7xf32>
    %175 = tpu.matmul %174, %4, %cst_108 {dimension_numbers = #tpu.dot_dimension_numbers<[1], [0], [0], [1], [0, 0, 1, 1], [], []>} : vector<10x14xf32>, vector<14x7xf32>, vector<10x7xf32> -> vector<10x7xf32>
    %cst_109 = arith.constant dense<0.000000e+00> : vector<10x7xf32>
    %176 = tpu.matmul %174, %5, %cst_109 {dimension_numbers = #tpu.dot_dimension_numbers<[1], [0], [0], [1], [0, 0, 1, 1], [], []>} : vector<10x14xf32>, vector<14x7xf32>, vector<10x7xf32> -> vector<10x7xf32>
    %177 = arith.maximumf %175, %176 : vector<10x7xf32>
    %c32 = arith.constant 32 : index
    %c0_110 = arith.constant 0 : index
    %178 = vector.load %arg16[%c32, %c0_110] : memref<112x7xf32, #tpu.memory_space<vmem>>, vector<10x7xf32>
    tpu.vector_store %arg16[%c32, %c0_110], %177 {strides = array<i32>} : memref<112x7xf32, #tpu.memory_space<vmem>>, vector<10x7xf32>,
    %c0_111 = arith.constant 0 : index
    %c18 = arith.constant 18 : index
    %c0_112 = arith.constant 0 : index
    %179 = vector.load %arg1[%c0_111, %c18, %c0_112] : memref<1x48x16xf32, #tpu.memory_space<vmem>>, vector<1x9x14xf32>
    %180 = vector.shape_cast %179 : vector<1x9x14xf32> to vector<9x14xf32>
    %181 = vector.extract_strided_slice %0 {offsets = [0, 0, 0], sizes = [1, 10, 9], strides = [1, 1, 1]} : vector<3x10x9xf32> to vector<1x10x9xf32>
    %182 = vector.shape_cast %181 : vector<1x10x9xf32> to vector<10x9xf32>
    %cst_113 = arith.constant dense<0.000000e+00> : vector<10x14xf32>
    %183 = tpu.matmul %182, %180, %cst_113 {dimension_numbers = #tpu.dot_dimension_numbers<[1], [0], [0], [1], [0, 0, 1, 1], [], []>} : vector<10x9xf32>, vector<9x14xf32>, vector<10x14xf32> -> vector<10x14xf32>
    %184 = arith.addf %8, %183 : vector<10x14xf32>
    %c0_114 = arith.constant 0 : index
    %c18_115 = arith.constant 18 : index
    %c1_116 = arith.constant 1 : index
    %185 = vector.load %arg1[%c0_114, %c18_115, %c1_116] : memref<1x48x16xf32, #tpu.memory_space<vmem>>, vector<1x9x14xf32>
    %186 = vector.shape_cast %185 : vector<1x9x14xf32> to vector<9x14xf32>
    %187 = vector.extract_strided_slice %0 {offsets = [1, 0, 0], sizes = [1, 10, 9], strides = [1, 1, 1]} : vector<3x10x9xf32> to vector<1x10x9xf32>
    %188 = vector.shape_cast %187 : vector<1x10x9xf32> to vector<10x9xf32>
    %cst_117 = arith.constant dense<0.000000e+00> : vector<10x14xf32>
    %189 = tpu.matmul %188, %186, %cst_117 {dimension_numbers = #tpu.dot_dimension_numbers<[1], [0], [0], [1], [0, 0, 1, 1], [], []>} : vector<10x9xf32>, vector<9x14xf32>, vector<10x14xf32> -> vector<10x14xf32>
    %190 = arith.addf %184, %189 : vector<10x14xf32>
    %c0_118 = arith.constant 0 : index
    %c18_119 = arith.constant 18 : index
    %c2_120 = arith.constant 2 : index
    %191 = vector.load %arg1[%c0_118, %c18_119, %c2_120] : memref<1x48x16xf32, #tpu.memory_space<vmem>>, vector<1x9x14xf32>
    %192 = vector.shape_cast %191 : vector<1x9x14xf32> to vector<9x14xf32>
    %193 = vector.extract_strided_slice %0 {offsets = [2, 0, 0], sizes = [1, 10, 9], strides = [1, 1, 1]} : vector<3x10x9xf32> to vector<1x10x9xf32>
    %194 = vector.shape_cast %193 : vector<1x10x9xf32> to vector<10x9xf32>
    %cst_121 = arith.constant dense<0.000000e+00> : vector<10x14xf32>
    %195 = tpu.matmul %194, %192, %cst_121 {dimension_numbers = #tpu.dot_dimension_numbers<[1], [0], [0], [1], [0, 0, 1, 1], [], []>} : vector<10x9xf32>, vector<9x14xf32>, vector<10x14xf32> -> vector<10x14xf32>
    %196 = arith.addf %190, %195 : vector<10x14xf32>
    %cst_122 = arith.constant 0.000000e+00 : f32
    %197 = vector.broadcast %cst_122 : f32 to vector<10x14xf32>
    %198 = arith.cmpf ogt, %196, %197 : vector<10x14xf32>
    %199 = arith.mulf %11, %196 : vector<10x14xf32>
    %200 = arith.select %198, %196, %199 : vector<10x14xi1>, vector<10x14xf32>
    %c0_123 = arith.constant 0 : index
    %c21 = arith.constant 21 : index
    %c0_124 = arith.constant 0 : index
    %201 = vector.load %arg1[%c0_123, %c21, %c0_124] : memref<1x48x16xf32, #tpu.memory_space<vmem>>, vector<1x9x14xf32>
    %202 = vector.shape_cast %201 : vector<1x9x14xf32> to vector<9x14xf32>
    %203 = vector.extract_strided_slice %0 {offsets = [0, 0, 0], sizes = [1, 10, 9], strides = [1, 1, 1]} : vector<3x10x9xf32> to vector<1x10x9xf32>
    %204 = vector.shape_cast %203 : vector<1x10x9xf32> to vector<10x9xf32>
    %cst_125 = arith.constant dense<0.000000e+00> : vector<10x14xf32>
    %205 = tpu.matmul %204, %202, %cst_125 {dimension_numbers = #tpu.dot_dimension_numbers<[1], [0], [0], [1], [0, 0, 1, 1], [], []>} : vector<10x9xf32>, vector<9x14xf32>, vector<10x14xf32> -> vector<10x14xf32>
    %206 = arith.addf %8, %205 : vector<10x14xf32>
    %c0_126 = arith.constant 0 : index
    %c21_127 = arith.constant 21 : index
    %c1_128 = arith.constant 1 : index
    %207 = vector.load %arg1[%c0_126, %c21_127, %c1_128] : memref<1x48x16xf32, #tpu.memory_space<vmem>>, vector<1x9x14xf32>
    %208 = vector.shape_cast %207 : vector<1x9x14xf32> to vector<9x14xf32>
    %209 = vector.extract_strided_slice %0 {offsets = [1, 0, 0], sizes = [1, 10, 9], strides = [1, 1, 1]} : vector<3x10x9xf32> to vector<1x10x9xf32>
    %210 = vector.shape_cast %209 : vector<1x10x9xf32> to vector<10x9xf32>
    %cst_129 = arith.constant dense<0.000000e+00> : vector<10x14xf32>
    %211 = tpu.matmul %210, %208, %cst_129 {dimension_numbers = #tpu.dot_dimension_numbers<[1], [0], [0], [1], [0, 0, 1, 1], [], []>} : vector<10x9xf32>, vector<9x14xf32>, vector<10x14xf32> -> vector<10x14xf32>
    %212 = arith.addf %206, %211 : vector<10x14xf32>
    %c0_130 = arith.constant 0 : index
    %c21_131 = arith.constant 21 : index
    %c2_132 = arith.constant 2 : index
    %213 = vector.load %arg1[%c0_130, %c21_131, %c2_132] : memref<1x48x16xf32, #tpu.memory_space<vmem>>, vector<1x9x14xf32>
    %214 = vector.shape_cast %213 : vector<1x9x14xf32> to vector<9x14xf32>
    %215 = vector.extract_strided_slice %0 {offsets = [2, 0, 0], sizes = [1, 10, 9], strides = [1, 1, 1]} : vector<3x10x9xf32> to vector<1x10x9xf32>
    %216 = vector.shape_cast %215 : vector<1x10x9xf32> to vector<10x9xf32>
    %cst_133 = arith.constant dense<0.000000e+00> : vector<10x14xf32>
    %217 = tpu.matmul %216, %214, %cst_133 {dimension_numbers = #tpu.dot_dimension_numbers<[1], [0], [0], [1], [0, 0, 1, 1], [], []>} : vector<10x9xf32>, vector<9x14xf32>, vector<10x14xf32> -> vector<10x14xf32>
    %218 = arith.addf %212, %217 : vector<10x14xf32>
    %cst_134 = arith.constant 0.000000e+00 : f32
    %219 = vector.broadcast %cst_134 : f32 to vector<10x14xf32>
    %220 = arith.cmpf ogt, %218, %219 : vector<10x14xf32>
    %221 = arith.mulf %11, %218 : vector<10x14xf32>
    %222 = arith.select %220, %218, %221 : vector<10x14xi1>, vector<10x14xf32>
    %223 = arith.maximumf %200, %222 : vector<10x14xf32>
    %cst_135 = arith.constant dense<0.000000e+00> : vector<10x7xf32>
    %224 = tpu.matmul %223, %4, %cst_135 {dimension_numbers = #tpu.dot_dimension_numbers<[1], [0], [0], [1], [0, 0, 1, 1], [], []>} : vector<10x14xf32>, vector<14x7xf32>, vector<10x7xf32> -> vector<10x7xf32>
    %cst_136 = arith.constant dense<0.000000e+00> : vector<10x7xf32>
    %225 = tpu.matmul %223, %5, %cst_136 {dimension_numbers = #tpu.dot_dimension_numbers<[1], [0], [0], [1], [0, 0, 1, 1], [], []>} : vector<10x14xf32>, vector<14x7xf32>, vector<10x7xf32> -> vector<10x7xf32>
    %226 = arith.maximumf %224, %225 : vector<10x7xf32>
    %c48 = arith.constant 48 : index
    %c0_137 = arith.constant 0 : index
    %227 = vector.load %arg16[%c48, %c0_137] : memref<112x7xf32, #tpu.memory_space<vmem>>, vector<10x7xf32>
    tpu.vector_store %arg16[%c48, %c0_137], %226 {strides = array<i32>} : memref<112x7xf32, #tpu.memory_space<vmem>>, vector<10x7xf32>,
    %c0_138 = arith.constant 0 : index
    %c24 = arith.constant 24 : index
    %c0_139 = arith.constant 0 : index
    %228 = vector.load %arg1[%c0_138, %c24, %c0_139] : memref<1x48x16xf32, #tpu.memory_space<vmem>>, vector<1x9x14xf32>
    %229 = vector.shape_cast %228 : vector<1x9x14xf32> to vector<9x14xf32>
    %230 = vector.extract_strided_slice %0 {offsets = [0, 0, 0], sizes = [1, 10, 9], strides = [1, 1, 1]} : vector<3x10x9xf32> to vector<1x10x9xf32>
    %231 = vector.shape_cast %230 : vector<1x10x9xf32> to vector<10x9xf32>
    %cst_140 = arith.constant dense<0.000000e+00> : vector<10x14xf32>
    %232 = tpu.matmul %231, %229, %cst_140 {dimension_numbers = #tpu.dot_dimension_numbers<[1], [0], [0], [1], [0, 0, 1, 1], [], []>} : vector<10x9xf32>, vector<9x14xf32>, vector<10x14xf32> -> vector<10x14xf32>
    %233 = arith.addf %8, %232 : vector<10x14xf32>
    %c0_141 = arith.constant 0 : index
    %c24_142 = arith.constant 24 : index
    %c1_143 = arith.constant 1 : index
    %234 = vector.load %arg1[%c0_141, %c24_142, %c1_143] : memref<1x48x16xf32, #tpu.memory_space<vmem>>, vector<1x9x14xf32>
    %235 = vector.shape_cast %234 : vector<1x9x14xf32> to vector<9x14xf32>
    %236 = vector.extract_strided_slice %0 {offsets = [1, 0, 0], sizes = [1, 10, 9], strides = [1, 1, 1]} : vector<3x10x9xf32> to vector<1x10x9xf32>
    %237 = vector.shape_cast %236 : vector<1x10x9xf32> to vector<10x9xf32>
    %cst_144 = arith.constant dense<0.000000e+00> : vector<10x14xf32>
    %238 = tpu.matmul %237, %235, %cst_144 {dimension_numbers = #tpu.dot_dimension_numbers<[1], [0], [0], [1], [0, 0, 1, 1], [], []>} : vector<10x9xf32>, vector<9x14xf32>, vector<10x14xf32> -> vector<10x14xf32>
    %239 = arith.addf %233, %238 : vector<10x14xf32>
    %c0_145 = arith.constant 0 : index
    %c24_146 = arith.constant 24 : index
    %c2_147 = arith.constant 2 : index
    %240 = vector.load %arg1[%c0_145, %c24_146, %c2_147] : memref<1x48x16xf32, #tpu.memory_space<vmem>>, vector<1x9x14xf32>
    %241 = vector.shape_cast %240 : vector<1x9x14xf32> to vector<9x14xf32>
    %242 = vector.extract_strided_slice %0 {offsets = [2, 0, 0], sizes = [1, 10, 9], strides = [1, 1, 1]} : vector<3x10x9xf32> to vector<1x10x9xf32>
    %243 = vector.shape_cast %242 : vector<1x10x9xf32> to vector<10x9xf32>
    %cst_148 = arith.constant dense<0.000000e+00> : vector<10x14xf32>
    %244 = tpu.matmul %243, %241, %cst_148 {dimension_numbers = #tpu.dot_dimension_numbers<[1], [0], [0], [1], [0, 0, 1, 1], [], []>} : vector<10x9xf32>, vector<9x14xf32>, vector<10x14xf32> -> vector<10x14xf32>
    %245 = arith.addf %239, %244 : vector<10x14xf32>
    %cst_149 = arith.constant 0.000000e+00 : f32
    %246 = vector.broadcast %cst_149 : f32 to vector<10x14xf32>
    %247 = arith.cmpf ogt, %245, %246 : vector<10x14xf32>
    %248 = arith.mulf %11, %245 : vector<10x14xf32>
    %249 = arith.select %247, %245, %248 : vector<10x14xi1>, vector<10x14xf32>
    %c0_150 = arith.constant 0 : index
    %c27 = arith.constant 27 : index
    %c0_151 = arith.constant 0 : index
    %250 = vector.load %arg1[%c0_150, %c27, %c0_151] : memref<1x48x16xf32, #tpu.memory_space<vmem>>, vector<1x9x14xf32>
    %251 = vector.shape_cast %250 : vector<1x9x14xf32> to vector<9x14xf32>
    %252 = vector.extract_strided_slice %0 {offsets = [0, 0, 0], sizes = [1, 10, 9], strides = [1, 1, 1]} : vector<3x10x9xf32> to vector<1x10x9xf32>
    %253 = vector.shape_cast %252 : vector<1x10x9xf32> to vector<10x9xf32>
    %cst_152 = arith.constant dense<0.000000e+00> : vector<10x14xf32>
    %254 = tpu.matmul %253, %251, %cst_152 {dimension_numbers = #tpu.dot_dimension_numbers<[1], [0], [0], [1], [0, 0, 1, 1], [], []>} : vector<10x9xf32>, vector<9x14xf32>, vector<10x14xf32> -> vector<10x14xf32>
    %255 = arith.addf %8, %254 : vector<10x14xf32>
    %c0_153 = arith.constant 0 : index
    %c27_154 = arith.constant 27 : index
    %c1_155 = arith.constant 1 : index
    %256 = vector.load %arg1[%c0_153, %c27_154, %c1_155] : memref<1x48x16xf32, #tpu.memory_space<vmem>>, vector<1x9x14xf32>
    %257 = vector.shape_cast %256 : vector<1x9x14xf32> to vector<9x14xf32>
    %258 = vector.extract_strided_slice %0 {offsets = [1, 0, 0], sizes = [1, 10, 9], strides = [1, 1, 1]} : vector<3x10x9xf32> to vector<1x10x9xf32>
    %259 = vector.shape_cast %258 : vector<1x10x9xf32> to vector<10x9xf32>
    %cst_156 = arith.constant dense<0.000000e+00> : vector<10x14xf32>
    %260 = tpu.matmul %259, %257, %cst_156 {dimension_numbers = #tpu.dot_dimension_numbers<[1], [0], [0], [1], [0, 0, 1, 1], [], []>} : vector<10x9xf32>, vector<9x14xf32>, vector<10x14xf32> -> vector<10x14xf32>
    %261 = arith.addf %255, %260 : vector<10x14xf32>
    %c0_157 = arith.constant 0 : index
    %c27_158 = arith.constant 27 : index
    %c2_159 = arith.constant 2 : index
    %262 = vector.load %arg1[%c0_157, %c27_158, %c2_159] : memref<1x48x16xf32, #tpu.memory_space<vmem>>, vector<1x9x14xf32>
    %263 = vector.shape_cast %262 : vector<1x9x14xf32> to vector<9x14xf32>
    %264 = vector.extract_strided_slice %0 {offsets = [2, 0, 0], sizes = [1, 10, 9], strides = [1, 1, 1]} : vector<3x10x9xf32> to vector<1x10x9xf32>
    %265 = vector.shape_cast %264 : vector<1x10x9xf32> to vector<10x9xf32>
    %cst_160 = arith.constant dense<0.000000e+00> : vector<10x14xf32>
    %266 = tpu.matmul %265, %263, %cst_160 {dimension_numbers = #tpu.dot_dimension_numbers<[1], [0], [0], [1], [0, 0, 1, 1], [], []>} : vector<10x9xf32>, vector<9x14xf32>, vector<10x14xf32> -> vector<10x14xf32>
    %267 = arith.addf %261, %266 : vector<10x14xf32>
    %cst_161 = arith.constant 0.000000e+00 : f32
    %268 = vector.broadcast %cst_161 : f32 to vector<10x14xf32>
    %269 = arith.cmpf ogt, %267, %268 : vector<10x14xf32>
    %270 = arith.mulf %11, %267 : vector<10x14xf32>
    %271 = arith.select %269, %267, %270 : vector<10x14xi1>, vector<10x14xf32>
    %272 = arith.maximumf %249, %271 : vector<10x14xf32>
    %cst_162 = arith.constant dense<0.000000e+00> : vector<10x7xf32>
    %273 = tpu.matmul %272, %4, %cst_162 {dimension_numbers = #tpu.dot_dimension_numbers<[1], [0], [0], [1], [0, 0, 1, 1], [], []>} : vector<10x14xf32>, vector<14x7xf32>, vector<10x7xf32> -> vector<10x7xf32>
    %cst_163 = arith.constant dense<0.000000e+00> : vector<10x7xf32>
    %274 = tpu.matmul %272, %5, %cst_163 {dimension_numbers = #tpu.dot_dimension_numbers<[1], [0], [0], [1], [0, 0, 1, 1], [], []>} : vector<10x14xf32>, vector<14x7xf32>, vector<10x7xf32> -> vector<10x7xf32>
    %275 = arith.maximumf %273, %274 : vector<10x7xf32>
    %c64 = arith.constant 64 : index
    %c0_164 = arith.constant 0 : index
    %276 = vector.load %arg16[%c64, %c0_164] : memref<112x7xf32, #tpu.memory_space<vmem>>, vector<10x7xf32>
    tpu.vector_store %arg16[%c64, %c0_164], %275 {strides = array<i32>} : memref<112x7xf32, #tpu.memory_space<vmem>>, vector<10x7xf32>,
    %c0_165 = arith.constant 0 : index
    %c30 = arith.constant 30 : index
    %c0_166 = arith.constant 0 : index
    %277 = vector.load %arg1[%c0_165, %c30, %c0_166] : memref<1x48x16xf32, #tpu.memory_space<vmem>>, vector<1x9x14xf32>
    %278 = vector.shape_cast %277 : vector<1x9x14xf32> to vector<9x14xf32>
    %279 = vector.extract_strided_slice %0 {offsets = [0, 0, 0], sizes = [1, 10, 9], strides = [1, 1, 1]} : vector<3x10x9xf32> to vector<1x10x9xf32>
    %280 = vector.shape_cast %279 : vector<1x10x9xf32> to vector<10x9xf32>
    %cst_167 = arith.constant dense<0.000000e+00> : vector<10x14xf32>
    %281 = tpu.matmul %280, %278, %cst_167 {dimension_numbers = #tpu.dot_dimension_numbers<[1], [0], [0], [1], [0, 0, 1, 1], [], []>} : vector<10x9xf32>, vector<9x14xf32>, vector<10x14xf32> -> vector<10x14xf32>
    %282 = arith.addf %8, %281 : vector<10x14xf32>
    %c0_168 = arith.constant 0 : index
    %c30_169 = arith.constant 30 : index
    %c1_170 = arith.constant 1 : index
    %283 = vector.load %arg1[%c0_168, %c30_169, %c1_170] : memref<1x48x16xf32, #tpu.memory_space<vmem>>, vector<1x9x14xf32>
    %284 = vector.shape_cast %283 : vector<1x9x14xf32> to vector<9x14xf32>
    %285 = vector.extract_strided_slice %0 {offsets = [1, 0, 0], sizes = [1, 10, 9], strides = [1, 1, 1]} : vector<3x10x9xf32> to vector<1x10x9xf32>
    %286 = vector.shape_cast %285 : vector<1x10x9xf32> to vector<10x9xf32>
    %cst_171 = arith.constant dense<0.000000e+00> : vector<10x14xf32>
    %287 = tpu.matmul %286, %284, %cst_171 {dimension_numbers = #tpu.dot_dimension_numbers<[1], [0], [0], [1], [0, 0, 1, 1], [], []>} : vector<10x9xf32>, vector<9x14xf32>, vector<10x14xf32> -> vector<10x14xf32>
    %288 = arith.addf %282, %287 : vector<10x14xf32>
    %c0_172 = arith.constant 0 : index
    %c30_173 = arith.constant 30 : index
    %c2_174 = arith.constant 2 : index
    %289 = vector.load %arg1[%c0_172, %c30_173, %c2_174] : memref<1x48x16xf32, #tpu.memory_space<vmem>>, vector<1x9x14xf32>
    %290 = vector.shape_cast %289 : vector<1x9x14xf32> to vector<9x14xf32>
    %291 = vector.extract_strided_slice %0 {offsets = [2, 0, 0], sizes = [1, 10, 9], strides = [1, 1, 1]} : vector<3x10x9xf32> to vector<1x10x9xf32>
    %292 = vector.shape_cast %291 : vector<1x10x9xf32> to vector<10x9xf32>
    %cst_175 = arith.constant dense<0.000000e+00> : vector<10x14xf32>
    %293 = tpu.matmul %292, %290, %cst_175 {dimension_numbers = #tpu.dot_dimension_numbers<[1], [0], [0], [1], [0, 0, 1, 1], [], []>} : vector<10x9xf32>, vector<9x14xf32>, vector<10x14xf32> -> vector<10x14xf32>
    %294 = arith.addf %288, %293 : vector<10x14xf32>
    %cst_176 = arith.constant 0.000000e+00 : f32
    %295 = vector.broadcast %cst_176 : f32 to vector<10x14xf32>
    %296 = arith.cmpf ogt, %294, %295 : vector<10x14xf32>
    %297 = arith.mulf %11, %294 : vector<10x14xf32>
    %298 = arith.select %296, %294, %297 : vector<10x14xi1>, vector<10x14xf32>
    %c0_177 = arith.constant 0 : index
    %c33 = arith.constant 33 : index
    %c0_178 = arith.constant 0 : index
    %299 = vector.load %arg1[%c0_177, %c33, %c0_178] : memref<1x48x16xf32, #tpu.memory_space<vmem>>, vector<1x9x14xf32>
    %300 = vector.shape_cast %299 : vector<1x9x14xf32> to vector<9x14xf32>
    %301 = vector.extract_strided_slice %0 {offsets = [0, 0, 0], sizes = [1, 10, 9], strides = [1, 1, 1]} : vector<3x10x9xf32> to vector<1x10x9xf32>
    %302 = vector.shape_cast %301 : vector<1x10x9xf32> to vector<10x9xf32>
    %cst_179 = arith.constant dense<0.000000e+00> : vector<10x14xf32>
    %303 = tpu.matmul %302, %300, %cst_179 {dimension_numbers = #tpu.dot_dimension_numbers<[1], [0], [0], [1], [0, 0, 1, 1], [], []>} : vector<10x9xf32>, vector<9x14xf32>, vector<10x14xf32> -> vector<10x14xf32>
    %304 = arith.addf %8, %303 : vector<10x14xf32>
    %c0_180 = arith.constant 0 : index
    %c33_181 = arith.constant 33 : index
    %c1_182 = arith.constant 1 : index
    %305 = vector.load %arg1[%c0_180, %c33_181, %c1_182] : memref<1x48x16xf32, #tpu.memory_space<vmem>>, vector<1x9x14xf32>
    %306 = vector.shape_cast %305 : vector<1x9x14xf32> to vector<9x14xf32>
    %307 = vector.extract_strided_slice %0 {offsets = [1, 0, 0], sizes = [1, 10, 9], strides = [1, 1, 1]} : vector<3x10x9xf32> to vector<1x10x9xf32>
    %308 = vector.shape_cast %307 : vector<1x10x9xf32> to vector<10x9xf32>
    %cst_183 = arith.constant dense<0.000000e+00> : vector<10x14xf32>
    %309 = tpu.matmul %308, %306, %cst_183 {dimension_numbers = #tpu.dot_dimension_numbers<[1], [0], [0], [1], [0, 0, 1, 1], [], []>} : vector<10x9xf32>, vector<9x14xf32>, vector<10x14xf32> -> vector<10x14xf32>
    %310 = arith.addf %304, %309 : vector<10x14xf32>
    %c0_184 = arith.constant 0 : index
    %c33_185 = arith.constant 33 : index
    %c2_186 = arith.constant 2 : index
    %311 = vector.load %arg1[%c0_184, %c33_185, %c2_186] : memref<1x48x16xf32, #tpu.memory_space<vmem>>, vector<1x9x14xf32>
    %312 = vector.shape_cast %311 : vector<1x9x14xf32> to vector<9x14xf32>
    %313 = vector.extract_strided_slice %0 {offsets = [2, 0, 0], sizes = [1, 10, 9], strides = [1, 1, 1]} : vector<3x10x9xf32> to vector<1x10x9xf32>
    %314 = vector.shape_cast %313 : vector<1x10x9xf32> to vector<10x9xf32>
    %cst_187 = arith.constant dense<0.000000e+00> : vector<10x14xf32>
    %315 = tpu.matmul %314, %312, %cst_187 {dimension_numbers = #tpu.dot_dimension_numbers<[1], [0], [0], [1], [0, 0, 1, 1], [], []>} : vector<10x9xf32>, vector<9x14xf32>, vector<10x14xf32> -> vector<10x14xf32>
    %316 = arith.addf %310, %315 : vector<10x14xf32>
    %cst_188 = arith.constant 0.000000e+00 : f32
    %317 = vector.broadcast %cst_188 : f32 to vector<10x14xf32>
    %318 = arith.cmpf ogt, %316, %317 : vector<10x14xf32>
    %319 = arith.mulf %11, %316 : vector<10x14xf32>
    %320 = arith.select %318, %316, %319 : vector<10x14xi1>, vector<10x14xf32>
    %321 = arith.maximumf %298, %320 : vector<10x14xf32>
    %cst_189 = arith.constant dense<0.000000e+00> : vector<10x7xf32>
    %322 = tpu.matmul %321, %4, %cst_189 {dimension_numbers = #tpu.dot_dimension_numbers<[1], [0], [0], [1], [0, 0, 1, 1], [], []>} : vector<10x14xf32>, vector<14x7xf32>, vector<10x7xf32> -> vector<10x7xf32>
    %cst_190 = arith.constant dense<0.000000e+00> : vector<10x7xf32>
    %323 = tpu.matmul %321, %5, %cst_190 {dimension_numbers = #tpu.dot_dimension_numbers<[1], [0], [0], [1], [0, 0, 1, 1], [], []>} : vector<10x14xf32>, vector<14x7xf32>, vector<10x7xf32> -> vector<10x7xf32>
    %324 = arith.maximumf %322, %323 : vector<10x7xf32>
    %c80 = arith.constant 80 : index
    %c0_191 = arith.constant 0 : index
    %325 = vector.load %arg16[%c80, %c0_191] : memref<112x7xf32, #tpu.memory_space<vmem>>, vector<10x7xf32>
    tpu.vector_store %arg16[%c80, %c0_191], %324 {strides = array<i32>} : memref<112x7xf32, #tpu.memory_space<vmem>>, vector<10x7xf32>,
    %c0_192 = arith.constant 0 : index
    %c36 = arith.constant 36 : index
    %c0_193 = arith.constant 0 : index
    %326 = vector.load %arg1[%c0_192, %c36, %c0_193] : memref<1x48x16xf32, #tpu.memory_space<vmem>>, vector<1x9x14xf32>
    %327 = vector.shape_cast %326 : vector<1x9x14xf32> to vector<9x14xf32>
    %328 = vector.extract_strided_slice %0 {offsets = [0, 0, 0], sizes = [1, 10, 9], strides = [1, 1, 1]} : vector<3x10x9xf32> to vector<1x10x9xf32>
    %329 = vector.shape_cast %328 : vector<1x10x9xf32> to vector<10x9xf32>
    %cst_194 = arith.constant dense<0.000000e+00> : vector<10x14xf32>
    %330 = tpu.matmul %329, %327, %cst_194 {dimension_numbers = #tpu.dot_dimension_numbers<[1], [0], [0], [1], [0, 0, 1, 1], [], []>} : vector<10x9xf32>, vector<9x14xf32>, vector<10x14xf32> -> vector<10x14xf32>
    %331 = arith.addf %8, %330 : vector<10x14xf32>
    %c0_195 = arith.constant 0 : index
    %c36_196 = arith.constant 36 : index
    %c1_197 = arith.constant 1 : index
    %332 = vector.load %arg1[%c0_195, %c36_196, %c1_197] : memref<1x48x16xf32, #tpu.memory_space<vmem>>, vector<1x9x14xf32>
    %333 = vector.shape_cast %332 : vector<1x9x14xf32> to vector<9x14xf32>
    %334 = vector.extract_strided_slice %0 {offsets = [1, 0, 0], sizes = [1, 10, 9], strides = [1, 1, 1]} : vector<3x10x9xf32> to vector<1x10x9xf32>
    %335 = vector.shape_cast %334 : vector<1x10x9xf32> to vector<10x9xf32>
    %cst_198 = arith.constant dense<0.000000e+00> : vector<10x14xf32>
    %336 = tpu.matmul %335, %333, %cst_198 {dimension_numbers = #tpu.dot_dimension_numbers<[1], [0], [0], [1], [0, 0, 1, 1], [], []>} : vector<10x9xf32>, vector<9x14xf32>, vector<10x14xf32> -> vector<10x14xf32>
    %337 = arith.addf %331, %336 : vector<10x14xf32>
    %c0_199 = arith.constant 0 : index
    %c36_200 = arith.constant 36 : index
    %c2_201 = arith.constant 2 : index
    %338 = vector.load %arg1[%c0_199, %c36_200, %c2_201] : memref<1x48x16xf32, #tpu.memory_space<vmem>>, vector<1x9x14xf32>
    %339 = vector.shape_cast %338 : vector<1x9x14xf32> to vector<9x14xf32>
    %340 = vector.extract_strided_slice %0 {offsets = [2, 0, 0], sizes = [1, 10, 9], strides = [1, 1, 1]} : vector<3x10x9xf32> to vector<1x10x9xf32>
    %341 = vector.shape_cast %340 : vector<1x10x9xf32> to vector<10x9xf32>
    %cst_202 = arith.constant dense<0.000000e+00> : vector<10x14xf32>
    %342 = tpu.matmul %341, %339, %cst_202 {dimension_numbers = #tpu.dot_dimension_numbers<[1], [0], [0], [1], [0, 0, 1, 1], [], []>} : vector<10x9xf32>, vector<9x14xf32>, vector<10x14xf32> -> vector<10x14xf32>
    %343 = arith.addf %337, %342 : vector<10x14xf32>
    %cst_203 = arith.constant 0.000000e+00 : f32
    %344 = vector.broadcast %cst_203 : f32 to vector<10x14xf32>
    %345 = arith.cmpf ogt, %343, %344 : vector<10x14xf32>
    %346 = arith.mulf %11, %343 : vector<10x14xf32>
    %347 = arith.select %345, %343, %346 : vector<10x14xi1>, vector<10x14xf32>
    %c0_204 = arith.constant 0 : index
    %c39 = arith.constant 39 : index
    %c0_205 = arith.constant 0 : index
    %348 = vector.load %arg1[%c0_204, %c39, %c0_205] : memref<1x48x16xf32, #tpu.memory_space<vmem>>, vector<1x9x14xf32>
    %349 = vector.shape_cast %348 : vector<1x9x14xf32> to vector<9x14xf32>
    %350 = vector.extract_strided_slice %0 {offsets = [0, 0, 0], sizes = [1, 10, 9], strides = [1, 1, 1]} : vector<3x10x9xf32> to vector<1x10x9xf32>
    %351 = vector.shape_cast %350 : vector<1x10x9xf32> to vector<10x9xf32>
    %cst_206 = arith.constant dense<0.000000e+00> : vector<10x14xf32>
    %352 = tpu.matmul %351, %349, %cst_206 {dimension_numbers = #tpu.dot_dimension_numbers<[1], [0], [0], [1], [0, 0, 1, 1], [], []>} : vector<10x9xf32>, vector<9x14xf32>, vector<10x14xf32> -> vector<10x14xf32>
    %353 = arith.addf %8, %352 : vector<10x14xf32>
    %c0_207 = arith.constant 0 : index
    %c39_208 = arith.constant 39 : index
    %c1_209 = arith.constant 1 : index
    %354 = vector.load %arg1[%c0_207, %c39_208, %c1_209] : memref<1x48x16xf32, #tpu.memory_space<vmem>>, vector<1x9x14xf32>
    %355 = vector.shape_cast %354 : vector<1x9x14xf32> to vector<9x14xf32>
    %356 = vector.extract_strided_slice %0 {offsets = [1, 0, 0], sizes = [1, 10, 9], strides = [1, 1, 1]} : vector<3x10x9xf32> to vector<1x10x9xf32>
    %357 = vector.shape_cast %356 : vector<1x10x9xf32> to vector<10x9xf32>
    %cst_210 = arith.constant dense<0.000000e+00> : vector<10x14xf32>
    %358 = tpu.matmul %357, %355, %cst_210 {dimension_numbers = #tpu.dot_dimension_numbers<[1], [0], [0], [1], [0, 0, 1, 1], [], []>} : vector<10x9xf32>, vector<9x14xf32>, vector<10x14xf32> -> vector<10x14xf32>
    %359 = arith.addf %353, %358 : vector<10x14xf32>
    %c0_211 = arith.constant 0 : index
    %c39_212 = arith.constant 39 : index
    %c2_213 = arith.constant 2 : index
    %360 = vector.load %arg1[%c0_211, %c39_212, %c2_213] : memref<1x48x16xf32, #tpu.memory_space<vmem>>, vector<1x9x14xf32>
    %361 = vector.shape_cast %360 : vector<1x9x14xf32> to vector<9x14xf32>
    %362 = vector.extract_strided_slice %0 {offsets = [2, 0, 0], sizes = [1, 10, 9], strides = [1, 1, 1]} : vector<3x10x9xf32> to vector<1x10x9xf32>
    %363 = vector.shape_cast %362 : vector<1x10x9xf32> to vector<10x9xf32>
    %cst_214 = arith.constant dense<0.000000e+00> : vector<10x14xf32>
    %364 = tpu.matmul %363, %361, %cst_214 {dimension_numbers = #tpu.dot_dimension_numbers<[1], [0], [0], [1], [0, 0, 1, 1], [], []>} : vector<10x9xf32>, vector<9x14xf32>, vector<10x14xf32> -> vector<10x14xf32>
    %365 = arith.addf %359, %364 : vector<10x14xf32>
    %cst_215 = arith.constant 0.000000e+00 : f32
    %366 = vector.broadcast %cst_215 : f32 to vector<10x14xf32>
    %367 = arith.cmpf ogt, %365, %366 : vector<10x14xf32>
    %368 = arith.mulf %11, %365 : vector<10x14xf32>
    %369 = arith.select %367, %365, %368 : vector<10x14xi1>, vector<10x14xf32>
    %370 = arith.maximumf %347, %369 : vector<10x14xf32>
    %cst_216 = arith.constant dense<0.000000e+00> : vector<10x7xf32>
    %371 = tpu.matmul %370, %4, %cst_216 {dimension_numbers = #tpu.dot_dimension_numbers<[1], [0], [0], [1], [0, 0, 1, 1], [], []>} : vector<10x14xf32>, vector<14x7xf32>, vector<10x7xf32> -> vector<10x7xf32>
    %cst_217 = arith.constant dense<0.000000e+00> : vector<10x7xf32>
    %372 = tpu.matmul %370, %5, %cst_217 {dimension_numbers = #tpu.dot_dimension_numbers<[1], [0], [0], [1], [0, 0, 1, 1], [], []>} : vector<10x14xf32>, vector<14x7xf32>, vector<10x7xf32> -> vector<10x7xf32>
    %373 = arith.maximumf %371, %372 : vector<10x7xf32>
    %c96 = arith.constant 96 : index
    %c0_218 = arith.constant 0 : index
    %374 = vector.load %arg16[%c96, %c0_218] : memref<112x7xf32, #tpu.memory_space<vmem>>, vector<10x7xf32>
    tpu.vector_store %arg16[%c96, %c0_218], %373 {strides = array<i32>} : memref<112x7xf32, #tpu.memory_space<vmem>>, vector<10x7xf32>,
    %c0_219 = arith.constant 0 : index
    %c0_220 = arith.constant 0 : index
    %375 = vector.load %arg16[%c0_219, %c0_220] : memref<112x7xf32, #tpu.memory_space<vmem>>, vector<48x5xf32>
    %376 = vector.extract_strided_slice %1 {offsets = [0, 0, 0], sizes = [1, 16, 48], strides = [1, 1, 1]} : vector<3x16x48xf32> to vector<1x16x48xf32>
    %377 = vector.shape_cast %376 : vector<1x16x48xf32> to vector<16x48xf32>
    %cst_221 = arith.constant dense<0.000000e+00> : vector<16x5xf32>
    %378 = tpu.matmul %377, %375, %cst_221 {dimension_numbers = #tpu.dot_dimension_numbers<[1], [0], [0], [1], [0, 0, 1, 1], [], []>} : vector<16x48xf32>, vector<48x5xf32>, vector<16x5xf32> -> vector<16x5xf32>
    %379 = arith.addf %14, %378 : vector<16x5xf32>
    %c0_222 = arith.constant 0 : index
    %c1_223 = arith.constant 1 : index
    %380 = vector.load %arg16[%c0_222, %c1_223] : memref<112x7xf32, #tpu.memory_space<vmem>>, vector<48x5xf32>
    %381 = vector.extract_strided_slice %1 {offsets = [1, 0, 0], sizes = [1, 16, 48], strides = [1, 1, 1]} : vector<3x16x48xf32> to vector<1x16x48xf32>
    %382 = vector.shape_cast %381 : vector<1x16x48xf32> to vector<16x48xf32>
    %cst_224 = arith.constant dense<0.000000e+00> : vector<16x5xf32>
    %383 = tpu.matmul %382, %380, %cst_224 {dimension_numbers = #tpu.dot_dimension_numbers<[1], [0], [0], [1], [0, 0, 1, 1], [], []>} : vector<16x48xf32>, vector<48x5xf32>, vector<16x5xf32> -> vector<16x5xf32>
    %384 = arith.addf %379, %383 : vector<16x5xf32>
    %c0_225 = arith.constant 0 : index
    %c2_226 = arith.constant 2 : index
    %385 = vector.load %arg16[%c0_225, %c2_226] : memref<112x7xf32, #tpu.memory_space<vmem>>, vector<48x5xf32>
    %386 = vector.extract_strided_slice %1 {offsets = [2, 0, 0], sizes = [1, 16, 48], strides = [1, 1, 1]} : vector<3x16x48xf32> to vector<1x16x48xf32>
    %387 = vector.shape_cast %386 : vector<1x16x48xf32> to vector<16x48xf32>
    %cst_227 = arith.constant dense<0.000000e+00> : vector<16x5xf32>
    %388 = tpu.matmul %387, %385, %cst_227 {dimension_numbers = #tpu.dot_dimension_numbers<[1], [0], [0], [1], [0, 0, 1, 1], [], []>} : vector<16x48xf32>, vector<48x5xf32>, vector<16x5xf32> -> vector<16x5xf32>
    %389 = arith.addf %384, %388 : vector<16x5xf32>
    %cst_228 = arith.constant 0.000000e+00 : f32
    %390 = vector.broadcast %cst_228 : f32 to vector<16x5xf32>
    %391 = arith.cmpf ogt, %389, %390 : vector<16x5xf32>
    %392 = arith.mulf %17, %389 : vector<16x5xf32>
    %393 = arith.select %391, %389, %392 : vector<16x5xi1>, vector<16x5xf32>
    %c0_229 = arith.constant 0 : index
    %c0_230 = arith.constant 0 : index
    %394 = vector.load %arg17[%c0_229, %c0_230] : memref<80x5xf32, #tpu.memory_space<vmem>>, vector<16x5xf32>
    tpu.vector_store %arg17[%c0_229, %c0_230], %393 {strides = array<i32>} : memref<80x5xf32, #tpu.memory_space<vmem>>, vector<16x5xf32>,
    %c16_231 = arith.constant 16 : index
    %c0_232 = arith.constant 0 : index
    %395 = vector.load %arg16[%c16_231, %c0_232] : memref<112x7xf32, #tpu.memory_space<vmem>>, vector<48x5xf32>
    %396 = vector.extract_strided_slice %1 {offsets = [0, 0, 0], sizes = [1, 16, 48], strides = [1, 1, 1]} : vector<3x16x48xf32> to vector<1x16x48xf32>
    %397 = vector.shape_cast %396 : vector<1x16x48xf32> to vector<16x48xf32>
    %cst_233 = arith.constant dense<0.000000e+00> : vector<16x5xf32>
    %398 = tpu.matmul %397, %395, %cst_233 {dimension_numbers = #tpu.dot_dimension_numbers<[1], [0], [0], [1], [0, 0, 1, 1], [], []>} : vector<16x48xf32>, vector<48x5xf32>, vector<16x5xf32> -> vector<16x5xf32>
    %399 = arith.addf %14, %398 : vector<16x5xf32>
    %c16_234 = arith.constant 16 : index
    %c1_235 = arith.constant 1 : index
    %400 = vector.load %arg16[%c16_234, %c1_235] : memref<112x7xf32, #tpu.memory_space<vmem>>, vector<48x5xf32>
    %401 = vector.extract_strided_slice %1 {offsets = [1, 0, 0], sizes = [1, 16, 48], strides = [1, 1, 1]} : vector<3x16x48xf32> to vector<1x16x48xf32>
    %402 = vector.shape_cast %401 : vector<1x16x48xf32> to vector<16x48xf32>
    %cst_236 = arith.constant dense<0.000000e+00> : vector<16x5xf32>
    %403 = tpu.matmul %402, %400, %cst_236 {dimension_numbers = #tpu.dot_dimension_numbers<[1], [0], [0], [1], [0, 0, 1, 1], [], []>} : vector<16x48xf32>, vector<48x5xf32>, vector<16x5xf32> -> vector<16x5xf32>
    %404 = arith.addf %399, %403 : vector<16x5xf32>
    %c16_237 = arith.constant 16 : index
    %c2_238 = arith.constant 2 : index
    %405 = vector.load %arg16[%c16_237, %c2_238] : memref<112x7xf32, #tpu.memory_space<vmem>>, vector<48x5xf32>
    %406 = vector.extract_strided_slice %1 {offsets = [2, 0, 0], sizes = [1, 16, 48], strides = [1, 1, 1]} : vector<3x16x48xf32> to vector<1x16x48xf32>
    %407 = vector.shape_cast %406 : vector<1x16x48xf32> to vector<16x48xf32>
    %cst_239 = arith.constant dense<0.000000e+00> : vector<16x5xf32>
    %408 = tpu.matmul %407, %405, %cst_239 {dimension_numbers = #tpu.dot_dimension_numbers<[1], [0], [0], [1], [0, 0, 1, 1], [], []>} : vector<16x48xf32>, vector<48x5xf32>, vector<16x5xf32> -> vector<16x5xf32>
    %409 = arith.addf %404, %408 : vector<16x5xf32>
    %cst_240 = arith.constant 0.000000e+00 : f32
    %410 = vector.broadcast %cst_240 : f32 to vector<16x5xf32>
    %411 = arith.cmpf ogt, %409, %410 : vector<16x5xf32>
    %412 = arith.mulf %17, %409 : vector<16x5xf32>
    %413 = arith.select %411, %409, %412 : vector<16x5xi1>, vector<16x5xf32>
    %c16_241 = arith.constant 16 : index
    %c0_242 = arith.constant 0 : index
    %414 = vector.load %arg17[%c16_241, %c0_242] : memref<80x5xf32, #tpu.memory_space<vmem>>, vector<16x5xf32>
    tpu.vector_store %arg17[%c16_241, %c0_242], %413 {strides = array<i32>} : memref<80x5xf32, #tpu.memory_space<vmem>>, vector<16x5xf32>,
    %c32_243 = arith.constant 32 : index
    %c0_244 = arith.constant 0 : index
    %415 = vector.load %arg16[%c32_243, %c0_244] : memref<112x7xf32, #tpu.memory_space<vmem>>, vector<48x5xf32>
    %416 = vector.extract_strided_slice %1 {offsets = [0, 0, 0], sizes = [1, 16, 48], strides = [1, 1, 1]} : vector<3x16x48xf32> to vector<1x16x48xf32>
    %417 = vector.shape_cast %416 : vector<1x16x48xf32> to vector<16x48xf32>
    %cst_245 = arith.constant dense<0.000000e+00> : vector<16x5xf32>
    %418 = tpu.matmul %417, %415, %cst_245 {dimension_numbers = #tpu.dot_dimension_numbers<[1], [0], [0], [1], [0, 0, 1, 1], [], []>} : vector<16x48xf32>, vector<48x5xf32>, vector<16x5xf32> -> vector<16x5xf32>
    %419 = arith.addf %14, %418 : vector<16x5xf32>
    %c32_246 = arith.constant 32 : index
    %c1_247 = arith.constant 1 : index
    %420 = vector.load %arg16[%c32_246, %c1_247] : memref<112x7xf32, #tpu.memory_space<vmem>>, vector<48x5xf32>
    %421 = vector.extract_strided_slice %1 {offsets = [1, 0, 0], sizes = [1, 16, 48], strides = [1, 1, 1]} : vector<3x16x48xf32> to vector<1x16x48xf32>
    %422 = vector.shape_cast %421 : vector<1x16x48xf32> to vector<16x48xf32>
    %cst_248 = arith.constant dense<0.000000e+00> : vector<16x5xf32>
    %423 = tpu.matmul %422, %420, %cst_248 {dimension_numbers = #tpu.dot_dimension_numbers<[1], [0], [0], [1], [0, 0, 1, 1], [], []>} : vector<16x48xf32>, vector<48x5xf32>, vector<16x5xf32> -> vector<16x5xf32>
    %424 = arith.addf %419, %423 : vector<16x5xf32>
    %c32_249 = arith.constant 32 : index
    %c2_250 = arith.constant 2 : index
    %425 = vector.load %arg16[%c32_249, %c2_250] : memref<112x7xf32, #tpu.memory_space<vmem>>, vector<48x5xf32>
    %426 = vector.extract_strided_slice %1 {offsets = [2, 0, 0], sizes = [1, 16, 48], strides = [1, 1, 1]} : vector<3x16x48xf32> to vector<1x16x48xf32>
    %427 = vector.shape_cast %426 : vector<1x16x48xf32> to vector<16x48xf32>
    %cst_251 = arith.constant dense<0.000000e+00> : vector<16x5xf32>
    %428 = tpu.matmul %427, %425, %cst_251 {dimension_numbers = #tpu.dot_dimension_numbers<[1], [0], [0], [1], [0, 0, 1, 1], [], []>} : vector<16x48xf32>, vector<48x5xf32>, vector<16x5xf32> -> vector<16x5xf32>
    %429 = arith.addf %424, %428 : vector<16x5xf32>
    %cst_252 = arith.constant 0.000000e+00 : f32
    %430 = vector.broadcast %cst_252 : f32 to vector<16x5xf32>
    %431 = arith.cmpf ogt, %429, %430 : vector<16x5xf32>
    %432 = arith.mulf %17, %429 : vector<16x5xf32>
    %433 = arith.select %431, %429, %432 : vector<16x5xi1>, vector<16x5xf32>
    %c32_253 = arith.constant 32 : index
    %c0_254 = arith.constant 0 : index
    %434 = vector.load %arg17[%c32_253, %c0_254] : memref<80x5xf32, #tpu.memory_space<vmem>>, vector<16x5xf32>
    tpu.vector_store %arg17[%c32_253, %c0_254], %433 {strides = array<i32>} : memref<80x5xf32, #tpu.memory_space<vmem>>, vector<16x5xf32>,
    %c48_255 = arith.constant 48 : index
    %c0_256 = arith.constant 0 : index
    %435 = vector.load %arg16[%c48_255, %c0_256] : memref<112x7xf32, #tpu.memory_space<vmem>>, vector<48x5xf32>
    %436 = vector.extract_strided_slice %1 {offsets = [0, 0, 0], sizes = [1, 16, 48], strides = [1, 1, 1]} : vector<3x16x48xf32> to vector<1x16x48xf32>
    %437 = vector.shape_cast %436 : vector<1x16x48xf32> to vector<16x48xf32>
    %cst_257 = arith.constant dense<0.000000e+00> : vector<16x5xf32>
    %438 = tpu.matmul %437, %435, %cst_257 {dimension_numbers = #tpu.dot_dimension_numbers<[1], [0], [0], [1], [0, 0, 1, 1], [], []>} : vector<16x48xf32>, vector<48x5xf32>, vector<16x5xf32> -> vector<16x5xf32>
    %439 = arith.addf %14, %438 : vector<16x5xf32>
    %c48_258 = arith.constant 48 : index
    %c1_259 = arith.constant 1 : index
    %440 = vector.load %arg16[%c48_258, %c1_259] : memref<112x7xf32, #tpu.memory_space<vmem>>, vector<48x5xf32>
    %441 = vector.extract_strided_slice %1 {offsets = [1, 0, 0], sizes = [1, 16, 48], strides = [1, 1, 1]} : vector<3x16x48xf32> to vector<1x16x48xf32>
    %442 = vector.shape_cast %441 : vector<1x16x48xf32> to vector<16x48xf32>
    %cst_260 = arith.constant dense<0.000000e+00> : vector<16x5xf32>
    %443 = tpu.matmul %442, %440, %cst_260 {dimension_numbers = #tpu.dot_dimension_numbers<[1], [0], [0], [1], [0, 0, 1, 1], [], []>} : vector<16x48xf32>, vector<48x5xf32>, vector<16x5xf32> -> vector<16x5xf32>
    %444 = arith.addf %439, %443 : vector<16x5xf32>
    %c48_261 = arith.constant 48 : index
    %c2_262 = arith.constant 2 : index
    %445 = vector.load %arg16[%c48_261, %c2_262] : memref<112x7xf32, #tpu.memory_space<vmem>>, vector<48x5xf32>
    %446 = vector.extract_strided_slice %1 {offsets = [2, 0, 0], sizes = [1, 16, 48], strides = [1, 1, 1]} : vector<3x16x48xf32> to vector<1x16x48xf32>
    %447 = vector.shape_cast %446 : vector<1x16x48xf32> to vector<16x48xf32>
    %cst_263 = arith.constant dense<0.000000e+00> : vector<16x5xf32>
    %448 = tpu.matmul %447, %445, %cst_263 {dimension_numbers = #tpu.dot_dimension_numbers<[1], [0], [0], [1], [0, 0, 1, 1], [], []>} : vector<16x48xf32>, vector<48x5xf32>, vector<16x5xf32> -> vector<16x5xf32>
    %449 = arith.addf %444, %448 : vector<16x5xf32>
    %cst_264 = arith.constant 0.000000e+00 : f32
    %450 = vector.broadcast %cst_264 : f32 to vector<16x5xf32>
    %451 = arith.cmpf ogt, %449, %450 : vector<16x5xf32>
    %452 = arith.mulf %17, %449 : vector<16x5xf32>
    %453 = arith.select %451, %449, %452 : vector<16x5xi1>, vector<16x5xf32>
    %c48_265 = arith.constant 48 : index
    %c0_266 = arith.constant 0 : index
    %454 = vector.load %arg17[%c48_265, %c0_266] : memref<80x5xf32, #tpu.memory_space<vmem>>, vector<16x5xf32>
    tpu.vector_store %arg17[%c48_265, %c0_266], %453 {strides = array<i32>} : memref<80x5xf32, #tpu.memory_space<vmem>>, vector<16x5xf32>,
    %c64_267 = arith.constant 64 : index
    %c0_268 = arith.constant 0 : index
    %455 = vector.load %arg16[%c64_267, %c0_268] : memref<112x7xf32, #tpu.memory_space<vmem>>, vector<48x5xf32>
    %456 = vector.extract_strided_slice %1 {offsets = [0, 0, 0], sizes = [1, 16, 48], strides = [1, 1, 1]} : vector<3x16x48xf32> to vector<1x16x48xf32>
    %457 = vector.shape_cast %456 : vector<1x16x48xf32> to vector<16x48xf32>
    %cst_269 = arith.constant dense<0.000000e+00> : vector<16x5xf32>
    %458 = tpu.matmul %457, %455, %cst_269 {dimension_numbers = #tpu.dot_dimension_numbers<[1], [0], [0], [1], [0, 0, 1, 1], [], []>} : vector<16x48xf32>, vector<48x5xf32>, vector<16x5xf32> -> vector<16x5xf32>
    %459 = arith.addf %14, %458 : vector<16x5xf32>
    %c64_270 = arith.constant 64 : index
    %c1_271 = arith.constant 1 : index
    %460 = vector.load %arg16[%c64_270, %c1_271] : memref<112x7xf32, #tpu.memory_space<vmem>>, vector<48x5xf32>
    %461 = vector.extract_strided_slice %1 {offsets = [1, 0, 0], sizes = [1, 16, 48], strides = [1, 1, 1]} : vector<3x16x48xf32> to vector<1x16x48xf32>
    %462 = vector.shape_cast %461 : vector<1x16x48xf32> to vector<16x48xf32>
    %cst_272 = arith.constant dense<0.000000e+00> : vector<16x5xf32>
    %463 = tpu.matmul %462, %460, %cst_272 {dimension_numbers = #tpu.dot_dimension_numbers<[1], [0], [0], [1], [0, 0, 1, 1], [], []>} : vector<16x48xf32>, vector<48x5xf32>, vector<16x5xf32> -> vector<16x5xf32>
    %464 = arith.addf %459, %463 : vector<16x5xf32>
    %c64_273 = arith.constant 64 : index
    %c2_274 = arith.constant 2 : index
    %465 = vector.load %arg16[%c64_273, %c2_274] : memref<112x7xf32, #tpu.memory_space<vmem>>, vector<48x5xf32>
    %466 = vector.extract_strided_slice %1 {offsets = [2, 0, 0], sizes = [1, 16, 48], strides = [1, 1, 1]} : vector<3x16x48xf32> to vector<1x16x48xf32>
    %467 = vector.shape_cast %466 : vector<1x16x48xf32> to vector<16x48xf32>
    %cst_275 = arith.constant dense<0.000000e+00> : vector<16x5xf32>
    %468 = tpu.matmul %467, %465, %cst_275 {dimension_numbers = #tpu.dot_dimension_numbers<[1], [0], [0], [1], [0, 0, 1, 1], [], []>} : vector<16x48xf32>, vector<48x5xf32>, vector<16x5xf32> -> vector<16x5xf32>
    %469 = arith.addf %464, %468 : vector<16x5xf32>
    %cst_276 = arith.constant 0.000000e+00 : f32
    %470 = vector.broadcast %cst_276 : f32 to vector<16x5xf32>
    %471 = arith.cmpf ogt, %469, %470 : vector<16x5xf32>
    %472 = arith.mulf %17, %469 : vector<16x5xf32>
    %473 = arith.select %471, %469, %472 : vector<16x5xi1>, vector<16x5xf32>
    %c64_277 = arith.constant 64 : index
    %c0_278 = arith.constant 0 : index
    %474 = vector.load %arg17[%c64_277, %c0_278] : memref<80x5xf32, #tpu.memory_space<vmem>>, vector<16x5xf32>
    tpu.vector_store %arg17[%c64_277, %c0_278], %473 {strides = array<i32>} : memref<80x5xf32, #tpu.memory_space<vmem>>, vector<16x5xf32>,
    %c0_279 = arith.constant 0 : index
    %c0_280 = arith.constant 0 : index
    %475 = vector.load %arg17[%c0_279, %c0_280] : memref<80x5xf32, #tpu.memory_space<vmem>>, vector<48x3xf32>
    %476 = vector.extract_strided_slice %2 {offsets = [0, 0, 0], sizes = [1, 32, 48], strides = [1, 1, 1]} : vector<3x32x48xf32> to vector<1x32x48xf32>
    %477 = vector.shape_cast %476 : vector<1x32x48xf32> to vector<32x48xf32>
    %cst_281 = arith.constant dense<0.000000e+00> : vector<32x3xf32>
    %478 = tpu.matmul %477, %475, %cst_281 {dimension_numbers = #tpu.dot_dimension_numbers<[1], [0], [0], [1], [0, 0, 1, 1], [], []>} : vector<32x48xf32>, vector<48x3xf32>, vector<32x3xf32> -> vector<32x3xf32>
    %479 = arith.addf %20, %478 : vector<32x3xf32>
    %c0_282 = arith.constant 0 : index
    %c1_283 = arith.constant 1 : index
    %480 = vector.load %arg17[%c0_282, %c1_283] : memref<80x5xf32, #tpu.memory_space<vmem>>, vector<48x3xf32>
    %481 = vector.extract_strided_slice %2 {offsets = [1, 0, 0], sizes = [1, 32, 48], strides = [1, 1, 1]} : vector<3x32x48xf32> to vector<1x32x48xf32>
    %482 = vector.shape_cast %481 : vector<1x32x48xf32> to vector<32x48xf32>
    %cst_284 = arith.constant dense<0.000000e+00> : vector<32x3xf32>
    %483 = tpu.matmul %482, %480, %cst_284 {dimension_numbers = #tpu.dot_dimension_numbers<[1], [0], [0], [1], [0, 0, 1, 1], [], []>} : vector<32x48xf32>, vector<48x3xf32>, vector<32x3xf32> -> vector<32x3xf32>
    %484 = arith.addf %479, %483 : vector<32x3xf32>
    %c0_285 = arith.constant 0 : index
    %c2_286 = arith.constant 2 : index
    %485 = vector.load %arg17[%c0_285, %c2_286] : memref<80x5xf32, #tpu.memory_space<vmem>>, vector<48x3xf32>
    %486 = vector.extract_strided_slice %2 {offsets = [2, 0, 0], sizes = [1, 32, 48], strides = [1, 1, 1]} : vector<3x32x48xf32> to vector<1x32x48xf32>
    %487 = vector.shape_cast %486 : vector<1x32x48xf32> to vector<32x48xf32>
    %cst_287 = arith.constant dense<0.000000e+00> : vector<32x3xf32>
    %488 = tpu.matmul %487, %485, %cst_287 {dimension_numbers = #tpu.dot_dimension_numbers<[1], [0], [0], [1], [0, 0, 1, 1], [], []>} : vector<32x48xf32>, vector<48x3xf32>, vector<32x3xf32> -> vector<32x3xf32>
    %489 = arith.addf %484, %488 : vector<32x3xf32>
    %cst_288 = arith.constant 0.000000e+00 : f32
    %490 = vector.broadcast %cst_288 : f32 to vector<32x3xf32>
    %491 = arith.cmpf ogt, %489, %490 : vector<32x3xf32>
    %492 = arith.mulf %23, %489 : vector<32x3xf32>
    %493 = arith.select %491, %489, %492 : vector<32x3xi1>, vector<32x3xf32>
    %cst_289 = arith.constant dense<0.000000e+00> : vector<5x3xf32>
    %494 = tpu.matmul %3, %493, %cst_289 {dimension_numbers = #tpu.dot_dimension_numbers<[1], [0], [0], [1], [0, 0, 1, 1], [], []>} : vector<5x32xf32>, vector<32x3xf32>, vector<5x3xf32> -> vector<5x3xf32>
    %495 = arith.addf %494, %26 : vector<5x3xf32>
    %cst_290 = arith.constant 0.000000e+00 : f32
    %496 = vector.broadcast %cst_290 : f32 to vector<5x3xf32>
    %497 = arith.subf %496, %495 : vector<5x3xf32>
    %498 = math.exp %497 : vector<5x3xf32>
    %cst_291 = arith.constant 1.000000e+00 : f32
    %499 = vector.broadcast %cst_291 : f32 to vector<5x3xf32>
    %500 = arith.addf %499, %498 : vector<5x3xf32>
    %cst_292 = arith.constant 1.000000e+00 : f32
    %501 = vector.broadcast %cst_292 : f32 to vector<5x3xf32>
    %502 = arith.divf %501, %500 : vector<5x3xf32>
    %503 = arith.select %29, %502, %495 : vector<5x3xi1>, vector<5x3xf32>
    %c0_293 = arith.constant 0 : index
    %c0_294 = arith.constant 0 : index
    %c0_295 = arith.constant 0 : index
    %c0_296 = arith.constant 0 : index
    %504 = vector.load %arg15[%c0_293, %c0_294, %c0_295, %c0_296] : memref<1x3x5x3xf32, #tpu.memory_space<vmem>>, vector<1x1x5x3xf32>
    %505 = vector.shape_cast %504 : vector<1x1x5x3xf32> to vector<5x3xf32>
    %506 = vector.shape_cast %503 : vector<5x3xf32> to vector<1x1x5x3xf32>
    tpu.vector_store %arg15[%c0_293, %c0_294, %c0_295, %c0_296], %506 {strides = array<i32>} : memref<1x3x5x3xf32, #tpu.memory_space<vmem>>, vector<1x1x5x3xf32>,
    %c16_297 = arith.constant 16 : index
    %c0_298 = arith.constant 0 : index
    %507 = vector.load %arg17[%c16_297, %c0_298] : memref<80x5xf32, #tpu.memory_space<vmem>>, vector<48x3xf32>
    %508 = vector.extract_strided_slice %2 {offsets = [0, 0, 0], sizes = [1, 32, 48], strides = [1, 1, 1]} : vector<3x32x48xf32> to vector<1x32x48xf32>
    %509 = vector.shape_cast %508 : vector<1x32x48xf32> to vector<32x48xf32>
    %cst_299 = arith.constant dense<0.000000e+00> : vector<32x3xf32>
    %510 = tpu.matmul %509, %507, %cst_299 {dimension_numbers = #tpu.dot_dimension_numbers<[1], [0], [0], [1], [0, 0, 1, 1], [], []>} : vector<32x48xf32>, vector<48x3xf32>, vector<32x3xf32> -> vector<32x3xf32>
    %511 = arith.addf %20, %510 : vector<32x3xf32>
    %c16_300 = arith.constant 16 : index
    %c1_301 = arith.constant 1 : index
    %512 = vector.load %arg17[%c16_300, %c1_301] : memref<80x5xf32, #tpu.memory_space<vmem>>, vector<48x3xf32>
    %513 = vector.extract_strided_slice %2 {offsets = [1, 0, 0], sizes = [1, 32, 48], strides = [1, 1, 1]} : vector<3x32x48xf32> to vector<1x32x48xf32>
    %514 = vector.shape_cast %513 : vector<1x32x48xf32> to vector<32x48xf32>
    %cst_302 = arith.constant dense<0.000000e+00> : vector<32x3xf32>
    %515 = tpu.matmul %514, %512, %cst_302 {dimension_numbers = #tpu.dot_dimension_numbers<[1], [0], [0], [1], [0, 0, 1, 1], [], []>} : vector<32x48xf32>, vector<48x3xf32>, vector<32x3xf32> -> vector<32x3xf32>
    %516 = arith.addf %511, %515 : vector<32x3xf32>
    %c16_303 = arith.constant 16 : index
    %c2_304 = arith.constant 2 : index
    %517 = vector.load %arg17[%c16_303, %c2_304] : memref<80x5xf32, #tpu.memory_space<vmem>>, vector<48x3xf32>
    %518 = vector.extract_strided_slice %2 {offsets = [2, 0, 0], sizes = [1, 32, 48], strides = [1, 1, 1]} : vector<3x32x48xf32> to vector<1x32x48xf32>
    %519 = vector.shape_cast %518 : vector<1x32x48xf32> to vector<32x48xf32>
    %cst_305 = arith.constant dense<0.000000e+00> : vector<32x3xf32>
    %520 = tpu.matmul %519, %517, %cst_305 {dimension_numbers = #tpu.dot_dimension_numbers<[1], [0], [0], [1], [0, 0, 1, 1], [], []>} : vector<32x48xf32>, vector<48x3xf32>, vector<32x3xf32> -> vector<32x3xf32>
    %521 = arith.addf %516, %520 : vector<32x3xf32>
    %cst_306 = arith.constant 0.000000e+00 : f32
    %522 = vector.broadcast %cst_306 : f32 to vector<32x3xf32>
    %523 = arith.cmpf ogt, %521, %522 : vector<32x3xf32>
    %524 = arith.mulf %23, %521 : vector<32x3xf32>
    %525 = arith.select %523, %521, %524 : vector<32x3xi1>, vector<32x3xf32>
    %cst_307 = arith.constant dense<0.000000e+00> : vector<5x3xf32>
    %526 = tpu.matmul %3, %525, %cst_307 {dimension_numbers = #tpu.dot_dimension_numbers<[1], [0], [0], [1], [0, 0, 1, 1], [], []>} : vector<5x32xf32>, vector<32x3xf32>, vector<5x3xf32> -> vector<5x3xf32>
    %527 = arith.addf %526, %26 : vector<5x3xf32>
    %cst_308 = arith.constant 0.000000e+00 : f32
    %528 = vector.broadcast %cst_308 : f32 to vector<5x3xf32>
    %529 = arith.subf %528, %527 : vector<5x3xf32>
    %530 = math.exp %529 : vector<5x3xf32>
    %cst_309 = arith.constant 1.000000e+00 : f32
    %531 = vector.broadcast %cst_309 : f32 to vector<5x3xf32>
    %532 = arith.addf %531, %530 : vector<5x3xf32>
    %cst_310 = arith.constant 1.000000e+00 : f32
    %533 = vector.broadcast %cst_310 : f32 to vector<5x3xf32>
    %534 = arith.divf %533, %532 : vector<5x3xf32>
    %535 = arith.select %29, %534, %527 : vector<5x3xi1>, vector<5x3xf32>
    %c0_311 = arith.constant 0 : index
    %c1_312 = arith.constant 1 : index
    %c0_313 = arith.constant 0 : index
    %c0_314 = arith.constant 0 : index
    %536 = vector.load %arg15[%c0_311, %c1_312, %c0_313, %c0_314] : memref<1x3x5x3xf32, #tpu.memory_space<vmem>>, vector<1x1x5x3xf32>
    %537 = vector.shape_cast %536 : vector<1x1x5x3xf32> to vector<5x3xf32>
    %538 = vector.shape_cast %535 : vector<5x3xf32> to vector<1x1x5x3xf32>
    tpu.vector_store %arg15[%c0_311, %c1_312, %c0_313, %c0_314], %538 {strides = array<i32>} : memref<1x3x5x3xf32, #tpu.memory_space<vmem>>, vector<1x1x5x3xf32>,
    %c32_315 = arith.constant 32 : index
    %c0_316 = arith.constant 0 : index
    %539 = vector.load %arg17[%c32_315, %c0_316] : memref<80x5xf32, #tpu.memory_space<vmem>>, vector<48x3xf32>
    %540 = vector.extract_strided_slice %2 {offsets = [0, 0, 0], sizes = [1, 32, 48], strides = [1, 1, 1]} : vector<3x32x48xf32> to vector<1x32x48xf32>
    %541 = vector.shape_cast %540 : vector<1x32x48xf32> to vector<32x48xf32>
    %cst_317 = arith.constant dense<0.000000e+00> : vector<32x3xf32>
    %542 = tpu.matmul %541, %539, %cst_317 {dimension_numbers = #tpu.dot_dimension_numbers<[1], [0], [0], [1], [0, 0, 1, 1], [], []>} : vector<32x48xf32>, vector<48x3xf32>, vector<32x3xf32> -> vector<32x3xf32>
    %543 = arith.addf %20, %542 : vector<32x3xf32>
    %c32_318 = arith.constant 32 : index
    %c1_319 = arith.constant 1 : index
    %544 = vector.load %arg17[%c32_318, %c1_319] : memref<80x5xf32, #tpu.memory_space<vmem>>, vector<48x3xf32>
    %545 = vector.extract_strided_slice %2 {offsets = [1, 0, 0], sizes = [1, 32, 48], strides = [1, 1, 1]} : vector<3x32x48xf32> to vector<1x32x48xf32>
    %546 = vector.shape_cast %545 : vector<1x32x48xf32> to vector<32x48xf32>
    %cst_320 = arith.constant dense<0.000000e+00> : vector<32x3xf32>
    %547 = tpu.matmul %546, %544, %cst_320 {dimension_numbers = #tpu.dot_dimension_numbers<[1], [0], [0], [1], [0, 0, 1, 1], [], []>} : vector<32x48xf32>, vector<48x3xf32>, vector<32x3xf32> -> vector<32x3xf32>
    %548 = arith.addf %543, %547 : vector<32x3xf32>
    %c32_321 = arith.constant 32 : index
    %c2_322 = arith.constant 2 : index
    %549 = vector.load %arg17[%c32_321, %c2_322] : memref<80x5xf32, #tpu.memory_space<vmem>>, vector<48x3xf32>
    %550 = vector.extract_strided_slice %2 {offsets = [2, 0, 0], sizes = [1, 32, 48], strides = [1, 1, 1]} : vector<3x32x48xf32> to vector<1x32x48xf32>
    %551 = vector.shape_cast %550 : vector<1x32x48xf32> to vector<32x48xf32>
    %cst_323 = arith.constant dense<0.000000e+00> : vector<32x3xf32>
    %552 = tpu.matmul %551, %549, %cst_323 {dimension_numbers = #tpu.dot_dimension_numbers<[1], [0], [0], [1], [0, 0, 1, 1], [], []>} : vector<32x48xf32>, vector<48x3xf32>, vector<32x3xf32> -> vector<32x3xf32>
    %553 = arith.addf %548, %552 : vector<32x3xf32>
    %cst_324 = arith.constant 0.000000e+00 : f32
    %554 = vector.broadcast %cst_324 : f32 to vector<32x3xf32>
    %555 = arith.cmpf ogt, %553, %554 : vector<32x3xf32>
    %556 = arith.mulf %23, %553 : vector<32x3xf32>
    %557 = arith.select %555, %553, %556 : vector<32x3xi1>, vector<32x3xf32>
    %cst_325 = arith.constant dense<0.000000e+00> : vector<5x3xf32>
    %558 = tpu.matmul %3, %557, %cst_325 {dimension_numbers = #tpu.dot_dimension_numbers<[1], [0], [0], [1], [0, 0, 1, 1], [], []>} : vector<5x32xf32>, vector<32x3xf32>, vector<5x3xf32> -> vector<5x3xf32>
    %559 = arith.addf %558, %26 : vector<5x3xf32>
    %cst_326 = arith.constant 0.000000e+00 : f32
    %560 = vector.broadcast %cst_326 : f32 to vector<5x3xf32>
    %561 = arith.subf %560, %559 : vector<5x3xf32>
    %562 = math.exp %561 : vector<5x3xf32>
    %cst_327 = arith.constant 1.000000e+00 : f32
    %563 = vector.broadcast %cst_327 : f32 to vector<5x3xf32>
    %564 = arith.addf %563, %562 : vector<5x3xf32>
    %cst_328 = arith.constant 1.000000e+00 : f32
    %565 = vector.broadcast %cst_328 : f32 to vector<5x3xf32>
    %566 = arith.divf %565, %564 : vector<5x3xf32>
    %567 = arith.select %29, %566, %559 : vector<5x3xi1>, vector<5x3xf32>
    %c0_329 = arith.constant 0 : index
    %c2_330 = arith.constant 2 : index
    %c0_331 = arith.constant 0 : index
    %c0_332 = arith.constant 0 : index
    %568 = vector.load %arg15[%c0_329, %c2_330, %c0_331, %c0_332] : memref<1x3x5x3xf32, #tpu.memory_space<vmem>>, vector<1x1x5x3xf32>
    %569 = vector.shape_cast %568 : vector<1x1x5x3xf32> to vector<5x3xf32>
    %570 = vector.shape_cast %567 : vector<5x3xf32> to vector<1x1x5x3xf32>
    tpu.vector_store %arg15[%c0_329, %c2_330, %c0_331, %c0_332], %570 {strides = array<i32>} : memref<1x3x5x3xf32, #tpu.memory_space<vmem>>, vector<1x1x5x3xf32>,
    return
  }
  func.func @transform_0(%arg0: i32) -> (i32, i32, i32) {
    %c0_i32 = arith.constant 0 : i32
    %c0_i32_0 = arith.constant 0 : i32
    %c0_i32_1 = arith.constant 0 : i32
    return %arg0, %c0_i32, %c0_i32_0 : i32, i32, i32
  }
  func.func @transform_1(%arg0: i32) -> (i32, i32, i32) {
    %c0_i32 = arith.constant 0 : i32
    %c0_i32_0 = arith.constant 0 : i32
    %c0_i32_1 = arith.constant 0 : i32
    %c0_i32_2 = arith.constant 0 : i32
    return %c0_i32, %c0_i32_0, %c0_i32_1 : i32, i32, i32
  }
  func.func @transform_2(%arg0: i32) -> (i32, i32) {
    %c0_i32 = arith.constant 0 : i32
    %c0_i32_0 = arith.constant 0 : i32
    %c0_i32_1 = arith.constant 0 : i32
    return %c0_i32, %c0_i32_0 : i32, i32
  }
  func.func @transform_3(%arg0: i32) -> (i32, i32) {
    %c0_i32 = arith.constant 0 : i32
    %c0_i32_0 = arith.constant 0 : i32
    %c0_i32_1 = arith.constant 0 : i32
    return %c0_i32, %c0_i32_0 : i32, i32
  }
  func.func @transform_4(%arg0: i32) -> (i32, i32, i32) {
    %c0_i32 = arith.constant 0 : i32
    %c0_i32_0 = arith.constant 0 : i32
    %c0_i32_1 = arith.constant 0 : i32
    %c0_i32_2 = arith.constant 0 : i32
    return %c0_i32, %c0_i32_0, %c0_i32_1 : i32, i32, i32
  }
  func.func @transform_5(%arg0: i32) -> (i32, i32) {
    %c0_i32 = arith.constant 0 : i32
    %c0_i32_0 = arith.constant 0 : i32
    %c0_i32_1 = arith.constant 0 : i32
    return %c0_i32, %c0_i32_0 : i32, i32
  }
  func.func @transform_6(%arg0: i32) -> (i32, i32) {
    %c0_i32 = arith.constant 0 : i32
    %c0_i32_0 = arith.constant 0 : i32
    %c0_i32_1 = arith.constant 0 : i32
    return %c0_i32, %c0_i32_0 : i32, i32
  }
  func.func @transform_7(%arg0: i32) -> (i32, i32, i32) {
    %c0_i32 = arith.constant 0 : i32
    %c0_i32_0 = arith.constant 0 : i32
    %c0_i32_1 = arith.constant 0 : i32
    %c0_i32_2 = arith.constant 0 : i32
    return %c0_i32, %c0_i32_0, %c0_i32_1 : i32, i32, i32
  }
  func.func @transform_8(%arg0: i32) -> (i32, i32) {
    %c0_i32 = arith.constant 0 : i32
    %c0_i32_0 = arith.constant 0 : i32
    %c0_i32_1 = arith.constant 0 : i32
    return %c0_i32, %c0_i32_0 : i32, i32
  }
  func.func @transform_9(%arg0: i32) -> (i32, i32) {
    %c0_i32 = arith.constant 0 : i32
    %c0_i32_0 = arith.constant 0 : i32
    %c0_i32_1 = arith.constant 0 : i32
    return %c0_i32, %c0_i32_0 : i32, i32
  }
  func.func @transform_10(%arg0: i32) -> (i32, i32) {
    %c0_i32 = arith.constant 0 : i32
    %c0_i32_0 = arith.constant 0 : i32
    %c0_i32_1 = arith.constant 0 : i32
    return %c0_i32, %c0_i32_0 : i32, i32
  }
  func.func @transform_11(%arg0: i32) -> (i32, i32) {
    %c0_i32 = arith.constant 0 : i32
    %c0_i32_0 = arith.constant 0 : i32
    %c0_i32_1 = arith.constant 0 : i32
    return %c0_i32, %c0_i32_0 : i32, i32
  }
  func.func @transform_12(%arg0: i32) -> (i32, i32) {
    %c0_i32 = arith.constant 0 : i32
    %c0_i32_0 = arith.constant 0 : i32
    %c0_i32_1 = arith.constant 0 : i32
    return %c0_i32, %c0_i32_0 : i32, i32
  }
  func.func @transform_13(%arg0: i32) -> (i32, i32) {
    %c0_i32 = arith.constant 0 : i32
    %c0_i32_0 = arith.constant 0 : i32
    %c0_i32_1 = arith.constant 0 : i32
    return %c0_i32, %c0_i32_0 : i32, i32
  }
  func.func @transform_14(%arg0: i32) -> (i32, i32, i32, i32) {
    %c0_i32 = arith.constant 0 : i32
    %c0_i32_0 = arith.constant 0 : i32
    %c0_i32_1 = arith.constant 0 : i32
    %c0_i32_2 = arith.constant 0 : i32
    return %arg0, %c0_i32, %c0_i32_0, %c0_i32_1 : i32, i32, i32, i32
  }
}

</mosaic_0001>

<llo_original>
// kernel: tpu_custom_call.1
$region0: #{tpu_custom_call.1}
  #allocation0 [shape = 'u32[]', space=smem, size = 0x4, offset = 0x4, fixed_abs, tag = 'smem constant byte address 0x4 - core index']
  #allocation1 [shape = 'u32[72,128]{1,0:T(1,128)}', space=vmem, size = 0x9000, scoped, tag = 'internal scratch']
  #allocation2 [shape = 'f32[112,7]{1,0:T(8,128)}', space=vmem, size = 0xe000, scoped, tag = 'scratch operand']
  #allocation3 [shape = 'f32[80,5]{1,0:T(8,128)}', space=vmem, size = 0xa000, scoped, tag = 'scratch operand']
  %s0 = inlined_call_operand.vmem [shape: f32[2,48,16], index: 0, kind: input, shape index: {}]
  %s1 = inlined_call_operand.vmem [shape: f32[3,10,9], index: 1, kind: input, shape index: {}]
  %s2 = inlined_call_operand.vmem [shape: f32[10,1], index: 2, kind: input, shape index: {}]
  %s3 = inlined_call_operand.vmem [shape: f32[10,1], index: 3, kind: input, shape index: {}]
  %s4 = inlined_call_operand.vmem [shape: f32[3,16,48], index: 4, kind: input, shape index: {}]
  %s5 = inlined_call_operand.vmem [shape: f32[16,1], index: 5, kind: input, shape index: {}]
  %s6 = inlined_call_operand.vmem [shape: f32[16,1], index: 6, kind: input, shape index: {}]
  %s7 = inlined_call_operand.vmem [shape: f32[3,32,48], index: 7, kind: input, shape index: {}]
  %s8 = inlined_call_operand.vmem [shape: f32[32,1], index: 8, kind: input, shape index: {}]
  %s9 = inlined_call_operand.vmem [shape: f32[32,1], index: 9, kind: input, shape index: {}]
  %s10 = inlined_call_operand.vmem [shape: f32[5,32], index: 10, kind: input, shape index: {}]
  %s11 = inlined_call_operand.vmem [shape: f32[5,1], index: 11, kind: input, shape index: {}]
  %s12 = inlined_call_operand.vmem [shape: f32[14,7], index: 12, kind: input, shape index: {}]
  %s13 = inlined_call_operand.vmem [shape: f32[14,7], index: 13, kind: input, shape index: {}]
  %s14 = inlined_call_operand.vmem [shape: f32[2,3,5,3], index: 14, kind: output, shape index: {}]
  %s15 = sld [smem:[#allocation0]]
  $region89: #{tpu_custom_call.1} parent=0
    _
  %s17 = ssub.s32 1, %s15
  %s18 = scalar_select 0, %s17, %s15
  loop: start=0, step=1, limit=4
  $region2: #{tpu_custom_call.1} parent=0 // loop_pre_header
    _
  $region3: #{tpu_custom_call.1} parent=0 // loop_header
    %s20 = sphi 0, %s24
    %p21 = scmp.ge.s32.totalorder %s20, 4
    %s30 = sphi 0, %s32
    %s33 = sphi 0, %s30
    %s34 = sphi 0, %s33
    %s50 = sphi 0, %s34
    %s54 = sphi 0, %s54
    %s56 = sphi 0, %s54
    %s57 = sphi 0, %s56
    %s71 = sphi 0, %s57
    %s75 = sphi 0, %s75
    %s77 = sphi 0, %s75
    %s78 = sphi 0, %s77
    %s92 = sphi 0, %s78
    %s96 = sphi 0, %s96
    %s98 = sphi 0, %s96
    %s99 = sphi 0, %s98
    %s113 = sphi 0, %s99
    %s117 = sphi 0, %s117
    %s119 = sphi 0, %s117
    %s120 = sphi 0, %s119
    %s134 = sphi 0, %s120
    %s138 = sphi 0, %s138
    %s140 = sphi 0, %s138
    %s141 = sphi 0, %s140
    %s155 = sphi 0, %s141
    %s159 = sphi 0, %s159
    %s161 = sphi 0, %s159
    %s162 = sphi 0, %s161
    %s176 = sphi 0, %s162
    %s180 = sphi 0, %s180
    %s182 = sphi 0, %s180
    %s183 = sphi 0, %s182
    %s197 = sphi 0, %s183
    %s201 = sphi 0, %s201
    %s203 = sphi 0, %s201
    %s204 = sphi 0, %s203
    %s218 = sphi 0, %s204
    %s222 = sphi 0, %s222
    %s224 = sphi 0, %s222
    %s225 = sphi 0, %s224
    %s239 = sphi 0, %s225
    %s243 = sphi 0, %s243
    %s245 = sphi 0, %s243
    %s246 = sphi 0, %s245
    %s260 = sphi 0, %s246
    %s264 = sphi 0, %s264
    %s266 = sphi 0, %s264
    %s267 = sphi 0, %s266
    %s281 = sphi 0, %s267
    %s285 = sphi 0, %s285
    %s287 = sphi 0, %s285
    %s288 = sphi 0, %s287
    %s302 = sphi 0, %s288
    %s306 = sphi 0, %s306
    %s308 = sphi 0, %s306
    %s309 = sphi 0, %s308
    %s323 = sphi 0, %s309
    %s329 = sphi 0, %s331
    %s332 = sphi 0, %s329
    %s333 = sphi 0, %s332
    %s349 = sphi 0, %s333
  $region4: #{tpu_custom_call.1} parent=0 // loop_header_branch
    %23 = sbr.rel (%p21) target = $region8
  $region5: #{tpu_custom_call.1} parent=0 // loop_body
    %s25 = ssub.s32 %s20, 1
    %s26 = ssub.s32 %s20, 2
    %s27 = sadd.s32 %s20, 1
    %s28 = ssub.s32 %s20, %s27
    %p29 = scmp.eq.s32.totalorder %s28, 0
    %s31 = sadd.s32 %s30, 1
    %s32 = scalar_select %p29, %s30, %s31
    %p35 = pneg %p29
    %p36 = scmp.eq.s32.totalorder %s20, 1
    %p37 = por %p35, %p36
    %p38 = scmp.ne.s32.totalorder %s30, %s33
    %p39 = scmp.eq.s32.totalorder %s20, 0
    %p40 = por %p38, %p39
    %p41 = scmp.ne.s32.totalorder %s30, %s33
    %p42 = scmp.eq.s32.totalorder %s25, 1
    %p43 = por %p41, %p42
    %p44 = scmp.ne.s32.totalorder %s33, %s34
    %p45 = scmp.eq.s32.totalorder %s25, 0
    %p46 = por %p44, %p45
    %p47 = scmp.ne.s32.totalorder %s33, %s34
    %p48 = scmp.eq.s32.totalorder %s26, 1
    %p49 = por %p47, %p48
    %p51 = scmp.ne.s32.totalorder %s34, %s50
    %p52 = scmp.eq.s32.totalorder %s26, 0
    %p53 = por %p51, %p52
    %s55 = sadd.s32 %s54, 1
    %p58 = scmp.eq.s32.totalorder %s20, 1
    %p59 = scmp.ne.s32.totalorder %s54, %s56
    %p60 = scmp.eq.s32.totalorder %s20, 0
    %p61 = por %p59, %p60
    %p62 = scmp.ne.s32.totalorder %s54, %s56
    %p63 = scmp.eq.s32.totalorder %s25, 1
    %p64 = por %p62, %p63
    %p65 = scmp.ne.s32.totalorder %s56, %s57
    %p66 = scmp.eq.s32.totalorder %s25, 0
    %p67 = por %p65, %p66
    %p68 = scmp.ne.s32.totalorder %s56, %s57
    %p69 = scmp.eq.s32.totalorder %s26, 1
    %p70 = por %p68, %p69
    %p72 = scmp.ne.s32.totalorder %s57, %s71
    %p73 = scmp.eq.s32.totalorder %s26, 0
    %p74 = por %p72, %p73
    %s76 = sadd.s32 %s75, 1
    %p79 = scmp.eq.s32.totalorder %s20, 1
    %p80 = scmp.ne.s32.totalorder %s75, %s77
    %p81 = scmp.eq.s32.totalorder %s20, 0
    %p82 = por %p80, %p81
    %p83 = scmp.ne.s32.totalorder %s75, %s77
    %p84 = scmp.eq.s32.totalorder %s25, 1
    %p85 = por %p83, %p84
    %p86 = scmp.ne.s32.totalorder %s77, %s78
    %p87 = scmp.eq.s32.totalorder %s25, 0
    %p88 = por %p86, %p87
    %p89 = scmp.ne.s32.totalorder %s77, %s78
    %p90 = scmp.eq.s32.totalorder %s26, 1
    %p91 = por %p89, %p90
    %p93 = scmp.ne.s32.totalorder %s78, %s92
    %p94 = scmp.eq.s32.totalorder %s26, 0
    %p95 = por %p93, %p94
    %s97 = sadd.s32 %s96, 1
    %p100 = scmp.eq.s32.totalorder %s20, 1
    %p101 = scmp.ne.s32.totalorder %s96, %s98
    %p102 = scmp.eq.s32.totalorder %s20, 0
    %p103 = por %p101, %p102
    %p104 = scmp.ne.s32.totalorder %s96, %s98
    %p105 = scmp.eq.s32.totalorder %s25, 1
    %p106 = por %p104, %p105
    %p107 = scmp.ne.s32.totalorder %s98, %s99
    %p108 = scmp.eq.s32.totalorder %s25, 0
    %p109 = por %p107, %p108
    %p110 = scmp.ne.s32.totalorder %s98, %s99
    %p111 = scmp.eq.s32.totalorder %s26, 1
    %p112 = por %p110, %p111
    %p114 = scmp.ne.s32.totalorder %s99, %s113
    %p115 = scmp.eq.s32.totalorder %s26, 0
    %p116 = por %p114, %p115
    %s118 = sadd.s32 %s117, 1
    %p121 = scmp.eq.s32.totalorder %s20, 1
    %p122 = scmp.ne.s32.totalorder %s117, %s119
    %p123 = scmp.eq.s32.totalorder %s20, 0
    %p124 = por %p122, %p123
    %p125 = scmp.ne.s32.totalorder %s117, %s119
    %p126 = scmp.eq.s32.totalorder %s25, 1
    %p127 = por %p125, %p126
    %p128 = scmp.ne.s32.totalorder %s119, %s120
    %p129 = scmp.eq.s32.totalorder %s25, 0
    %p130 = por %p128, %p129
    %p131 = scmp.ne.s32.totalorder %s119, %s120
    %p132 = scmp.eq.s32.totalorder %s26, 1
    %p133 = por %p131, %p132
    %p135 = scmp.ne.s32.totalorder %s120, %s134
    %p136 = scmp.eq.s32.totalorder %s26, 0
    %p137 = por %p135, %p136
    %s139 = sadd.s32 %s138, 1
    %p142 = scmp.eq.s32.totalorder %s20, 1
    %p143 = scmp.ne.s32.totalorder %s138, %s140
    %p144 = scmp.eq.s32.totalorder %s20, 0
    %p145 = por %p143, %p144
    %p146 = scmp.ne.s32.totalorder %s138, %s140
    %p147 = scmp.eq.s32.totalorder %s25, 1
    %p148 = por %p146, %p147
    %p149 = scmp.ne.s32.totalorder %s140, %s141
    %p150 = scmp.eq.s32.totalorder %s25, 0
    %p151 = por %p149, %p150
    %p152 = scmp.ne.s32.totalorder %s140, %s141
    %p153 = scmp.eq.s32.totalorder %s26, 1
    %p154 = por %p152, %p153
    %p156 = scmp.ne.s32.totalorder %s141, %s155
    %p157 = scmp.eq.s32.totalorder %s26, 0
    %p158 = por %p156, %p157
    %s160 = sadd.s32 %s159, 1
    %p163 = scmp.eq.s32.totalorder %s20, 1
    %p164 = scmp.ne.s32.totalorder %s159, %s161
    %p165 = scmp.eq.s32.totalorder %s20, 0
    %p166 = por %p164, %p165
    %p167 = scmp.ne.s32.totalorder %s159, %s161
    %p168 = scmp.eq.s32.totalorder %s25, 1
    %p169 = por %p167, %p168
    %p170 = scmp.ne.s32.totalorder %s161, %s162
    %p171 = scmp.eq.s32.totalorder %s25, 0
    %p172 = por %p170, %p171
    %p173 = scmp.ne.s32.totalorder %s161, %s162
    %p174 = scmp.eq.s32.totalorder %s26, 1
    %p175 = por %p173, %p174
    %p177 = scmp.ne.s32.totalorder %s162, %s176
    %p178 = scmp.eq.s32.totalorder %s26, 0
    %p179 = por %p177, %p178
    %s181 = sadd.s32 %s180, 1
    %p184 = scmp.eq.s32.totalorder %s20, 1
    %p185 = scmp.ne.s32.totalorder %s180, %s182
    %p186 = scmp.eq.s32.totalorder %s20, 0
    %p187 = por %p185, %p186
    %p188 = scmp.ne.s32.totalorder %s180, %s182
    %p189 = scmp.eq.s32.totalorder %s25, 1
    %p190 = por %p188, %p189
    %p191 = scmp.ne.s32.totalorder %s182, %s183
    %p192 = scmp.eq.s32.totalorder %s25, 0
    %p193 = por %p191, %p192
    %p194 = scmp.ne.s32.totalorder %s182, %s183
    %p195 = scmp.eq.s32.totalorder %s26, 1
    %p196 = por %p194, %p195
    %p198 = scmp.ne.s32.totalorder %s183, %s197
    %p199 = scmp.eq.s32.totalorder %s26, 0
    %p200 = por %p198, %p199
    %s202 = sadd.s32 %s201, 1
    %p205 = scmp.eq.s32.totalorder %s20, 1
    %p206 = scmp.ne.s32.totalorder %s201, %s203
    %p207 = scmp.eq.s32.totalorder %s20, 0
    %p208 = por %p206, %p207
    %p209 = scmp.ne.s32.totalorder %s201, %s203
    %p210 = scmp.eq.s32.totalorder %s25, 1
    %p211 = por %p209, %p210
    %p212 = scmp.ne.s32.totalorder %s203, %s204
    %p213 = scmp.eq.s32.totalorder %s25, 0
    %p214 = por %p212, %p213
    %p215 = scmp.ne.s32.totalorder %s203, %s204
    %p216 = scmp.eq.s32.totalorder %s26, 1
    %p217 = por %p215, %p216
    %p219 = scmp.ne.s32.totalorder %s204, %s218
    %p220 = scmp.eq.s32.totalorder %s26, 0
    %p221 = por %p219, %p220
    %s223 = sadd.s32 %s222, 1
    %p226 = scmp.eq.s32.totalorder %s20, 1
    %p227 = scmp.ne.s32.totalorder %s222, %s224
    %p228 = scmp.eq.s32.totalorder %s20, 0
    %p229 = por %p227, %p228
    %p230 = scmp.ne.s32.totalorder %s222, %s224
    %p231 = scmp.eq.s32.totalorder %s25, 1
    %p232 = por %p230, %p231
    %p233 = scmp.ne.s32.totalorder %s224, %s225
    %p234 = scmp.eq.s32.totalorder %s25, 0
    %p235 = por %p233, %p234
    %p236 = scmp.ne.s32.totalorder %s224, %s225
    %p237 = scmp.eq.s32.totalorder %s26, 1
    %p238 = por %p236, %p237
    %p240 = scmp.ne.s32.totalorder %s225, %s239
    %p241 = scmp.eq.s32.totalorder %s26, 0
    %p242 = por %p240, %p241
    %s244 = sadd.s32 %s243, 1
    %p247 = scmp.eq.s32.totalorder %s20, 1
    %p248 = scmp.ne.s32.totalorder %s243, %s245
    %p249 = scmp.eq.s32.totalorder %s20, 0
    %p250 = por %p248, %p249
    %p251 = scmp.ne.s32.totalorder %s243, %s245
    %p252 = scmp.eq.s32.totalorder %s25, 1
    %p253 = por %p251, %p252
    %p254 = scmp.ne.s32.totalorder %s245, %s246
    %p255 = scmp.eq.s32.totalorder %s25, 0
    %p256 = por %p254, %p255
    %p257 = scmp.ne.s32.totalorder %s245, %s246
    %p258 = scmp.eq.s32.totalorder %s26, 1
    %p259 = por %p257, %p258
    %p261 = scmp.ne.s32.totalorder %s246, %s260
    %p262 = scmp.eq.s32.totalorder %s26, 0
    %p263 = por %p261, %p262
    %s265 = sadd.s32 %s264, 1
    %p268 = scmp.eq.s32.totalorder %s20, 1
    %p269 = scmp.ne.s32.totalorder %s264, %s266
    %p270 = scmp.eq.s32.totalorder %s20, 0
    %p271 = por %p269, %p270
    %p272 = scmp.ne.s32.totalorder %s264, %s266
    %p273 = scmp.eq.s32.totalorder %s25, 1
    %p274 = por %p272, %p273
    %p275 = scmp.ne.s32.totalorder %s266, %s267
    %p276 = scmp.eq.s32.totalorder %s25, 0
    %p277 = por %p275, %p276
    %p278 = scmp.ne.s32.totalorder %s266, %s267
    %p279 = scmp.eq.s32.totalorder %s26, 1
    %p280 = por %p278, %p279
    %p282 = scmp.ne.s32.totalorder %s267, %s281
    %p283 = scmp.eq.s32.totalorder %s26, 0
    %p284 = por %p282, %p283
    %s286 = sadd.s32 %s285, 1
    %p289 = scmp.eq.s32.totalorder %s20, 1
    %p290 = scmp.ne.s32.totalorder %s285, %s287
    %p291 = scmp.eq.s32.totalorder %s20, 0
    %p292 = por %p290, %p291
    %p293 = scmp.ne.s32.totalorder %s285, %s287
    %p294 = scmp.eq.s32.totalorder %s25, 1
    %p295 = por %p293, %p294
    %p296 = scmp.ne.s32.totalorder %s287, %s288
    %p297 = scmp.eq.s32.totalorder %s25, 0
    %p298 = por %p296, %p297
    %p299 = scmp.ne.s32.totalorder %s287, %s288
    %p300 = scmp.eq.s32.totalorder %s26, 1
    %p301 = por %p299, %p300
    %p303 = scmp.ne.s32.totalorder %s288, %s302
    %p304 = scmp.eq.s32.totalorder %s26, 0
    %p305 = por %p303, %p304
    %s307 = sadd.s32 %s306, 1
    %p310 = scmp.eq.s32.totalorder %s20, 1
    %p311 = scmp.ne.s32.totalorder %s306, %s308
    %p312 = scmp.eq.s32.totalorder %s20, 0
    %p313 = por %p311, %p312
    %p314 = scmp.ne.s32.totalorder %s306, %s308
    %p315 = scmp.eq.s32.totalorder %s25, 1
    %p316 = por %p314, %p315
    %p317 = scmp.ne.s32.totalorder %s308, %s309
    %p318 = scmp.eq.s32.totalorder %s25, 0
    %p319 = por %p317, %p318
    %p320 = scmp.ne.s32.totalorder %s308, %s309
    %p321 = scmp.eq.s32.totalorder %s26, 1
    %p322 = por %p320, %p321
    %p324 = scmp.ne.s32.totalorder %s309, %s323
    %p325 = scmp.eq.s32.totalorder %s26, 0
    %p326 = por %p324, %p325
    %s327 = ssub.s32 %s20, %s27
    %p328 = scmp.eq.s32.totalorder %s327, 0
    %s330 = sadd.s32 %s329, 1
    %s331 = scalar_select %p328, %s329, %s330
    %p334 = pneg %p328
    %p335 = scmp.eq.s32.totalorder %s20, 1
    %p336 = por %p334, %p335
    %p337 = scmp.ne.s32.totalorder %s329, %s332
    %p338 = scmp.eq.s32.totalorder %s20, 0
    %p339 = por %p337, %p338
    %p340 = scmp.ne.s32.totalorder %s329, %s332
    %p341 = scmp.eq.s32.totalorder %s25, 1
    %p342 = por %p340, %p341
    %p343 = scmp.ne.s32.totalorder %s332, %s333
    %p344 = scmp.eq.s32.totalorder %s25, 0
    %p345 = por %p343, %p344
    %p346 = scmp.ne.s32.totalorder %s332, %s333
    %p347 = scmp.eq.s32.totalorder %s26, 1
    %p348 = por %p346, %p347
    %p350 = scmp.ne.s32.totalorder %s333, %s349
    %p351 = scmp.eq.s32.totalorder %s26, 0
    %p352 = por %p350, %p351
    %p353 = scmp.le.s32.totalorder 1, %s20
    %p354 = scmp.lt.s32.totalorder %s20, 3
    %p355 = pnand %p353, %p354
    %p356 = pneg %p355
    // Predicated region
    $region9: #{tpu_custom_call.1} parent=5 // pred_check
      _
    $region10: #{tpu_custom_call.1} parent=5 // pred_check_branch
      %358 = sbr.rel (%p355) target = $region12
    $region11: #{tpu_custom_call.1} parent=5 // pred_region
      %s359 = ssub.s32 %s20, 1
      // Predicated region
      $region13: #{tpu_custom_call.1} parent=11 // pred_check
        %p360 = pneg %p67
      $region14: #{tpu_custom_call.1} parent=11 // pred_check_branch
        %362 = sbr.rel (%p360) target = $region16
      $region15: #{tpu_custom_call.1} parent=11 // pred_region
        _
      $region16: #{tpu_custom_call.1} parent=11 // pred_fallthru
        _
      // Predicated region
      $region17: #{tpu_custom_call.1} parent=11 // pred_check
        %p363 = pneg %p88
      $region18: #{tpu_custom_call.1} parent=11 // pred_check_branch
        %365 = sbr.rel (%p363) target = $region20
      $region19: #{tpu_custom_call.1} parent=11 // pred_region
        _
      $region20: #{tpu_custom_call.1} parent=11 // pred_fallthru
        _
      // Predicated region
      $region21: #{tpu_custom_call.1} parent=11 // pred_check
        %p366 = pneg %p109
      $region22: #{tpu_custom_call.1} parent=11 // pred_check_branch
        %368 = sbr.rel (%p366) target = $region24
      $region23: #{tpu_custom_call.1} parent=11 // pred_region
        _
      $region24: #{tpu_custom_call.1} parent=11 // pred_fallthru
        _
      // Predicated region
      $region25: #{tpu_custom_call.1} parent=11 // pred_check
        %p369 = pneg %p130
      $region26: #{tpu_custom_call.1} parent=11 // pred_check_branch
        %371 = sbr.rel (%p369) target = $region28
      $region27: #{tpu_custom_call.1} parent=11 // pred_region
        _
      $region28: #{tpu_custom_call.1} parent=11 // pred_fallthru
        _
      // Predicated region
      $region29: #{tpu_custom_call.1} parent=11 // pred_check
        %p372 = pneg %p151
      $region30: #{tpu_custom_call.1} parent=11 // pred_check_branch
        %374 = sbr.rel (%p372) target = $region32
      $region31: #{tpu_custom_call.1} parent=11 // pred_region
        _
      $region32: #{tpu_custom_call.1} parent=11 // pred_fallthru
        _
      // Predicated region
      $region33: #{tpu_custom_call.1} parent=11 // pred_check
        %p375 = pneg %p172
      $region34: #{tpu_custom_call.1} parent=11 // pred_check_branch
        %377 = sbr.rel (%p375) target = $region36
      $region35: #{tpu_custom_call.1} parent=11 // pred_region
        _
      $region36: #{tpu_custom_call.1} parent=11 // pred_fallthru
        _
      // Predicated region
      $region37: #{tpu_custom_call.1} parent=11 // pred_check
        %p378 = pneg %p193
      $region38: #{tpu_custom_call.1} parent=11 // pred_check_branch
        %380 = sbr.rel (%p378) target = $region40
      $region39: #{tpu_custom_call.1} parent=11 // pred_region
        _
      $region40: #{tpu_custom_call.1} parent=11 // pred_fallthru
        _
      // Predicated region
      $region41: #{tpu_custom_call.1} parent=11 // pred_check
        %p381 = pneg %p214
      $region42: #{tpu_custom_call.1} parent=11 // pred_check_branch
        %383 = sbr.rel (%p381) target = $region44
      $region43: #{tpu_custom_call.1} parent=11 // pred_region
        _
      $region44: #{tpu_custom_call.1} parent=11 // pred_fallthru
        _
      // Predicated region
      $region45: #{tpu_custom_call.1} parent=11 // pred_check
        %p384 = pneg %p235
      $region46: #{tpu_custom_call.1} parent=11 // pred_check_branch
        %386 = sbr.rel (%p384) target = $region48
      $region47: #{tpu_custom_call.1} parent=11 // pred_region
        _
      $region48: #{tpu_custom_call.1} parent=11 // pred_fallthru
        _
      // Predicated region
      $region49: #{tpu_custom_call.1} parent=11 // pred_check
        %p387 = pneg %p256
      $region50: #{tpu_custom_call.1} parent=11 // pred_check_branch
        %389 = sbr.rel (%p387) target = $region52
      $region51: #{tpu_custom_call.1} parent=11 // pred_region
        _
      $region52: #{tpu_custom_call.1} parent=11 // pred_fallthru
        _
      // Predicated region
      $region53: #{tpu_custom_call.1} parent=11 // pred_check
        %p390 = pneg %p277
      $region54: #{tpu_custom_call.1} parent=11 // pred_check_branch
        %392 = sbr.rel (%p390) target = $region56
      $region55: #{tpu_custom_call.1} parent=11 // pred_region
        _
      $region56: #{tpu_custom_call.1} parent=11 // pred_fallthru
        _
      // Predicated region
      $region57: #{tpu_custom_call.1} parent=11 // pred_check
        %p393 = pneg %p298
      $region58: #{tpu_custom_call.1} parent=11 // pred_check_branch
        %395 = sbr.rel (%p393) target = $region60
      $region59: #{tpu_custom_call.1} parent=11 // pred_region
        _
      $region60: #{tpu_custom_call.1} parent=11 // pred_fallthru
        _
      // Predicated region
      $region61: #{tpu_custom_call.1} parent=11 // pred_check
        %p396 = pneg %p319
      $region62: #{tpu_custom_call.1} parent=11 // pred_check_branch
        %398 = sbr.rel (%p396) target = $region64
      $region63: #{tpu_custom_call.1} parent=11 // pred_region
        _
      $region64: #{tpu_custom_call.1} parent=11 // pred_fallthru
        _
    $region12: #{tpu_custom_call.1} parent=5 // pred_fallthru
      _
    %p399 = scmp.lt.s32.totalorder %s20, 2
    // Predicated region
    $region65: #{tpu_custom_call.1} parent=5 // pred_check
      %p400 = pneg %p399
    $region66: #{tpu_custom_call.1} parent=5 // pred_check_branch
      %402 = sbr.rel (%p400) target = $region68
    $region67: #{tpu_custom_call.1} parent=5 // pred_region
      // Predicated region
      $region69: #{tpu_custom_call.1} parent=67 // pred_check
        %p403 = pneg %p40
      $region70: #{tpu_custom_call.1} parent=67 // pred_check_branch
        %405 = sbr.rel (%p403) target = $region72
      $region71: #{tpu_custom_call.1} parent=67 // pred_region
        %p406 = scmp.lt.s32.totalorder %s20, 1
        %s407 = scalar_select %p406, %s20, 1
        %s408 = smul.addr %s407, 6
        %s409 = smul.addr %s408, 8
        %s410 = scalar_lea.vmem %s0, %s409
      $region72: #{tpu_custom_call.1} parent=67 // pred_fallthru
        _
    $region68: #{tpu_custom_call.1} parent=5 // pred_fallthru
      _
    %p411 = scmp.le.s32.totalorder 1, %s20
    %p412 = scmp.lt.s32.totalorder %s20, 3
    %p413 = pnand %p411, %p412
    %p414 = pneg %p413
    // Predicated region
    $region73: #{tpu_custom_call.1} parent=5 // pred_check
      _
    $region74: #{tpu_custom_call.1} parent=5 // pred_check_branch
      %416 = sbr.rel (%p413) target = $region76
    $region75: #{tpu_custom_call.1} parent=5 // pred_region
      %s417 = ssub.s32 %s20, 1
      %p418 = scmp.lt.s32.totalorder %s25, 1
      %s419 = scalar_select %p418, %s25, 1
      %s420 = smul.addr %s419, 6
      %s421 = smul.addr %s420, 8
      %s422 = scalar_lea.vmem %s0, %s421
      %p423 = pneg %p46
      %p424 = pneg %p43
      %p425 = pneg %p67
      %p426 = pneg %p64
      %p427 = pneg %p88
      %p428 = pneg %p85
      %p429 = pneg %p109
      %p430 = pneg %p106
      %p431 = pneg %p130
      %p432 = pneg %p127
      %p433 = pneg %p151
      %p434 = pneg %p148
      %p435 = pneg %p172
      %p436 = pneg %p169
      %p437 = pneg %p193
      %p438 = pneg %p190
      %p439 = pneg %p214
      %p440 = pneg %p211
      %p441 = pneg %p235
      %p442 = pneg %p232
      %p443 = pneg %p256
      %p444 = pneg %p253
      %p445 = pneg %p277
      %p446 = pneg %p274
      %p447 = pneg %p298
      %p448 = pneg %p295
      %p449 = pneg %p319
      %p450 = pneg %p316
      %p451 = pneg %p345
      %p452 = pneg %p342
      %p453 = scmp.lt.s32.totalorder %s25, 1
      %s454 = scalar_select %p453, %s25, 1
      %s455 = smul.addr %s454, 3
      %s456 = smul.addr %s455, 8
      %s457 = scalar_lea.vmem %s14, %s456
      %p458 = scmp.lt.s32.totalorder %s25, 1
      %s459 = scalar_select %p458, %s25, 1
      %s460 = smul.addr %s459, 6
      %s461 = smul.addr %s460, 8
      %s462 = scalar_lea.vmem %s0, %s461
      %p463 = scmp.lt.s32.totalorder %s25, 1
      %s464 = scalar_select %p463, %s25, 1
      %s465 = smul.addr %s464, 3
      %s466 = smul.addr %s465, 8
      %s467 = scalar_lea.vmem %s14, %s466
      %v468 = vld [vmem:[%s1] sm:$0xff]
      %v469 = vld [vmem:[%s1 + $0x8] sm:$0x3]
      %v470 = vld [vmem:[%s1 + $0x10] sm:$0xff]
      %v471 = vld [vmem:[%s1 + $0x18] sm:$0x3]
      %v472 = vld [vmem:[%s1 + $0x20] sm:$0xff]
      %v473 = vld [vmem:[%s1 + $0x28] sm:$0x3]
      %v474 = vld [vmem:[%s4] sm:$0xff]
      %v475 = vld [vmem:[%s4 + $0x8] sm:$0xff]
      %v476 = vld [vmem:[%s4 + $0x10] sm:$0xff]
      %v477 = vld [vmem:[%s4 + $0x18] sm:$0xff]
      %v478 = vld [vmem:[%s4 + $0x20] sm:$0xff]
      %v479 = vld [vmem:[%s4 + $0x28] sm:$0xff]
      %v480 = vld [vmem:[%s7] sm:$0xff]
      %v481 = vld [vmem:[%s7 + $0x8] sm:$0xff]
      %v482 = vld [vmem:[%s7 + $0x10] sm:$0xff]
      %v483 = vld [vmem:[%s7 + $0x18] sm:$0xff]
      %v484 = vld [vmem:[%s7 + $0x20] sm:$0xff]
      %v485 = vld [vmem:[%s7 + $0x28] sm:$0xff]
      %v486 = vld [vmem:[%s7 + $0x30] sm:$0xff]
      %v487 = vld [vmem:[%s7 + $0x38] sm:$0xff]
      %v488 = vld [vmem:[%s7 + $0x40] sm:$0xff]
      %v489 = vld [vmem:[%s7 + $0x48] sm:$0xff]
      %v490 = vld [vmem:[%s7 + $0x50] sm:$0xff]
      %v491 = vld [vmem:[%s7 + $0x58] sm:$0xff]
      %v492 = vld [vmem:[%s10] sm:$0x1f]
      %v493 = vld [vmem:[%s12] sm:$0xff]
      %v494 = vld [vmem:[%s12 + $0x8] sm:$0x3f]
      %v495 = vld [vmem:[%s13] sm:$0xff]
      %v496 = vld [vmem:[%s13 + $0x8] sm:$0x3f]
      %v497 = vld [vmem:[%s2] sm:$0xff]
      %v498 = vld [vmem:[%s2 + $0x8] sm:$0x3]
      %500 = vset.pattern.permute.xlu0 0
      %501 = vperm.xlu0 %500, %v497
      %v502 = vpop.permute.xlu0 %501
      %505 = vset.pattern.permute.xlu0 0
      %506 = vperm.xlu0 %505, %v498
      %v507 = vpop.permute.xlu0 %506
      %v509 = vld [vmem:[%s3] sm:$0xff]
      %v510 = vld [vmem:[%s3 + $0x8] sm:$0x3]
      %512 = vset.pattern.permute.xlu0 0
      %513 = vperm.xlu0 %512, %v509
      %v514 = vpop.permute.xlu0 %513
      %517 = vset.pattern.permute.xlu0 0
      %518 = vperm.xlu0 %517, %v510
      %v519 = vpop.permute.xlu0 %518
      %v521 = vld [vmem:[%s5] sm:$0xff]
      %v522 = vld [vmem:[%s5 + $0x8] sm:$0xff]
      %524 = vset.pattern.permute.xlu0 0
      %525 = vperm.xlu0 %524, %v521
      %v526 = vpop.permute.xlu0 %525
      %529 = vset.pattern.permute.xlu0 0
      %530 = vperm.xlu0 %529, %v522
      %v531 = vpop.permute.xlu0 %530
      %v533 = vld [vmem:[%s6] sm:$0xff]
      %v534 = vld [vmem:[%s6 + $0x8] sm:$0xff]
      %536 = vset.pattern.permute.xlu0 0
      %537 = vperm.xlu0 %536, %v533
      %v538 = vpop.permute.xlu0 %537
      %541 = vset.pattern.permute.xlu0 0
      %542 = vperm.xlu0 %541, %v534
      %v543 = vpop.permute.xlu0 %542
      %v545 = vld [vmem:[%s8] sm:$0xff]
      %v546 = vld [vmem:[%s8 + $0x8] sm:$0xff]
      %v547 = vld [vmem:[%s8 + $0x10] sm:$0xff]
      %v548 = vld [vmem:[%s8 + $0x18] sm:$0xff]
      %550 = vset.pattern.permute.xlu0 0
      %551 = vperm.xlu0 %550, %v545
      %v552 = vpop.permute.xlu0 %551
      %555 = vset.pattern.permute.xlu0 0
      %556 = vperm.xlu0 %555, %v546
      %v557 = vpop.permute.xlu0 %556
      %560 = vset.pattern.permute.xlu0 0
      %561 = vperm.xlu0 %560, %v547
      %v562 = vpop.permute.xlu0 %561
      %565 = vset.pattern.permute.xlu0 0
      %566 = vperm.xlu0 %565, %v548
      %v567 = vpop.permute.xlu0 %566
      %v569 = vld [vmem:[%s9] sm:$0xff]
      %v570 = vld [vmem:[%s9 + $0x8] sm:$0xff]
      %v571 = vld [vmem:[%s9 + $0x10] sm:$0xff]
      %v572 = vld [vmem:[%s9 + $0x18] sm:$0xff]
      %574 = vset.pattern.permute.xlu0 0
      %575 = vperm.xlu0 %574, %v569
      %v576 = vpop.permute.xlu0 %575
      %579 = vset.pattern.permute.xlu0 0
      %580 = vperm.xlu0 %579, %v570
      %v581 = vpop.permute.xlu0 %580
      %584 = vset.pattern.permute.xlu0 0
      %585 = vperm.xlu0 %584, %v571
      %v586 = vpop.permute.xlu0 %585
      %589 = vset.pattern.permute.xlu0 0
      %590 = vperm.xlu0 %589, %v572
      %v591 = vpop.permute.xlu0 %590
      %v593 = vld [vmem:[%s11] sm:$0x1f]
      %595 = vset.pattern.permute.xlu0 0
      %596 = vperm.xlu0 %595, %v593
      %v597 = vpop.permute.xlu0 %596
      %v599 = vlaneseq
      %v600 = vshrl.u32 %v599, 7
      %vm601 = vcmp.eq.s32.totalorder %v600, 0
      %vm602 = vcmask 56320
      %603 = vst.msk [vmem:[#allocation2] sm:$0xff] %vm602, 0.0
      %604 = vst.msk [vmem:[#allocation2 + $0x8] sm:$0xff] %vm602, 0.0
      %605 = vst.msk [vmem:[#allocation2 + $0x10] sm:$0xff] %vm602, 0.0
      %606 = vst.msk [vmem:[#allocation2 + $0x18] sm:$0xff] %vm602, 0.0
      %607 = vst.msk [vmem:[#allocation2 + $0x20] sm:$0xff] %vm602, 0.0
      %608 = vst.msk [vmem:[#allocation2 + $0x28] sm:$0xff] %vm602, 0.0
      %609 = vst.msk [vmem:[#allocation2 + $0x30] sm:$0xff] %vm602, 0.0
      %610 = vst.msk [vmem:[#allocation2 + $0x38] sm:$0xff] %vm602, 0.0
      %611 = vst.msk [vmem:[#allocation2 + $0x40] sm:$0xff] %vm602, 0.0
      %612 = vst.msk [vmem:[#allocation2 + $0x48] sm:$0xff] %vm602, 0.0
      %613 = vst.msk [vmem:[#allocation2 + $0x50] sm:$0xff] %vm602, 0.0
      %614 = vst.msk [vmem:[#allocation2 + $0x58] sm:$0xff] %vm602, 0.0
      %615 = vst.msk [vmem:[#allocation2 + $0x60] sm:$0xff] %vm602, 0.0
      %616 = vst.msk [vmem:[#allocation2 + $0x68] sm:$0xff] %vm602, 0.0
      %v617 = vld [vmem:[%s462] sm:$0xff]
      %v618 = vld [vmem:[%s462 + $0x8] sm:$0x1]
      %vm619 = vcmask 72704
      %v621 = vsel %vm619, %v468, 0
      %v624 = vsel %vm619, %v469, 0
      %vm626 = vcmask 1040384
      %v628 = vsel %vm626, %v618, 0
      %630 = vmatpush.msra.mxu0 0.0
      %631 = vmatpush.msra.mxu0 0.0
      %632 = vmatpush.msra.mxu0 0.0
      %633 = vmatpush.msra.mxu0 0.0
      %634 = vmatpush.msra.mxu0 0.0
      %635 = vmatpush.msra.mxu0 0.0
      %636 = vmatpush.msra.mxu0 0.0
      %637 = vmatpush.msra.mxu0 0.0
      %638 = vmatpush.msra.mxu0 0.0
      %639 = vmatpush.msra.mxu0 0.0
      %640 = vmatpush.msra.mxu0 0.0
      %641 = vmatpush.msra.mxu0 0.0
      %642 = vmatpush.msra.mxu0 0.0
      %643 = vmatpush.msra.mxu0 0.0
      %644 = vmatpush.msra.mxu0 %v628
      %645 = vmatpush.msra.mxu0 %v617
      %646 = vmatmul.f32.gmra.mxu0 %v621
      %v647 = vpop.f32.mrf.mxu0
      %v648 = vadd.f32 0.0, %v647
      %649 = vmatmul.f32.gmra.mxu0 %v624
      %v650 = vpop.f32.mrf.mxu0
      %v651 = vadd.f32 0.0, %v650
      %652 = vdwg.mxu0
      %v653 = vadd.f32 %v502, %v648
      %v654 = vadd.f32 %v507, %v651
      %656 = vrot.lane.b32.xlu0 %v617, 127
      %v657 = vpop.permute.xlu0 %656
      %658 = vrot.lane.b32.xlu0 %v618, 127
      %v659 = vpop.permute.xlu0 %658
      %v662 = vsel %vm619, %v470, 0
      %v665 = vsel %vm619, %v471, 0
      %v667 = vsel %vm626, %v659, 0
      %669 = vmatpush.msra.mxu0 0.0
      %670 = vmatpush.msra.mxu0 0.0
      %671 = vmatpush.msra.mxu0 0.0
      %672 = vmatpush.msra.mxu0 0.0
      %673 = vmatpush.msra.mxu0 0.0
      %674 = vmatpush.msra.mxu0 0.0
      %675 = vmatpush.msra.mxu0 0.0
      %676 = vmatpush.msra.mxu0 0.0
      %677 = vmatpush.msra.mxu0 0.0
      %678 = vmatpush.msra.mxu0 0.0
      %679 = vmatpush.msra.mxu0 0.0
      %680 = vmatpush.msra.mxu0 0.0
      %681 = vmatpush.msra.mxu0 0.0
      %682 = vmatpush.msra.mxu0 0.0
      %683 = vmatpush.msra.mxu0 %v667
      %684 = vmatpush.msra.mxu0 %v657
      %685 = vmatmul.f32.gmra.mxu0 %v662
      %v686 = vpop.f32.mrf.mxu0
      %v687 = vadd.f32 0.0, %v686
      %688 = vmatmul.f32.gmra.mxu0 %v665
      %v689 = vpop.f32.mrf.mxu0
      %v690 = vadd.f32 0.0, %v689
      %691 = vdwg.mxu0
      %v692 = vadd.f32 %v653, %v687
      %v693 = vadd.f32 %v654, %v690
      %694 = vrot.lane.b32.xlu0 %v617, 126
      %v695 = vpop.permute.xlu0 %694
      %696 = vrot.lane.b32.xlu0 %v618, 126
      %v697 = vpop.permute.xlu0 %696
      %v700 = vsel %vm619, %v472, 0
      %v703 = vsel %vm619, %v473, 0
      %v705 = vsel %vm626, %v697, 0
      %707 = vmatpush.msra.mxu0 0.0
      %708 = vmatpush.msra.mxu0 0.0
      %709 = vmatpush.msra.mxu0 0.0
      %710 = vmatpush.msra.mxu0 0.0
      %711 = vmatpush.msra.mxu0 0.0
      %712 = vmatpush.msra.mxu0 0.0
      %713 = vmatpush.msra.mxu0 0.0
      %714 = vmatpush.msra.mxu0 0.0
      %715 = vmatpush.msra.mxu0 0.0
      %716 = vmatpush.msra.mxu0 0.0
      %717 = vmatpush.msra.mxu0 0.0
      %718 = vmatpush.msra.mxu0 0.0
      %719 = vmatpush.msra.mxu0 0.0
      %720 = vmatpush.msra.mxu0 0.0
      %721 = vmatpush.msra.mxu0 %v705
      %722 = vmatpush.msra.mxu0 %v695
      %723 = vmatmul.f32.gmra.mxu0 %v700
      %v724 = vpop.f32.mrf.mxu0
      %v725 = vadd.f32 0.0, %v724
      %726 = vmatmul.f32.gmra.mxu0 %v703
      %v727 = vpop.f32.mrf.mxu0
      %v728 = vadd.f32 0.0, %v727
      %729 = vdwg.mxu0
      %v730 = vadd.f32 %v692, %v725
      %v731 = vadd.f32 %v693, %v728
      %vm732 = vcmp.gt.f32.partialorder %v730, 0.0
      %vm733 = vcmp.gt.f32.partialorder %v731, 0.0
      %v734 = vmul.f32 %v514, %v730
      %v735 = vmul.f32 %v519, %v731
      %v736 = vsel %vm732, %v730, %v734
      %v737 = vsel %vm733, %v731, %v735
      %v738 = vld [vmem:[%s462 + $0x3] sm:$0xff]
      %v739 = vld [vmem:[%s462 + $0xb] sm:$0x1]
      %v741 = vsel %vm626, %v739, 0
      %743 = vmatpush.msra.mxu0 0.0
      %744 = vmatpush.msra.mxu0 0.0
      %745 = vmatpush.msra.mxu0 0.0
      %746 = vmatpush.msra.mxu0 0.0
      %747 = vmatpush.msra.mxu0 0.0
      %748 = vmatpush.msra.mxu0 0.0
      %749 = vmatpush.msra.mxu0 0.0
      %750 = vmatpush.msra.mxu0 0.0
      %751 = vmatpush.msra.mxu0 0.0
      %752 = vmatpush.msra.mxu0 0.0
      %753 = vmatpush.msra.mxu0 0.0
      %754 = vmatpush.msra.mxu0 0.0
      %755 = vmatpush.msra.mxu0 0.0
      %756 = vmatpush.msra.mxu0 0.0
      %757 = vmatpush.msra.mxu0 %v741
      %758 = vmatpush.msra.mxu0 %v738
      %759 = vmatmul.f32.gmra.mxu0 %v621
      %v760 = vpop.f32.mrf.mxu0
      %v761 = vadd.f32 0.0, %v760
      %762 = vmatmul.f32.gmra.mxu0 %v624
      %v763 = vpop.f32.mrf.mxu0
      %v764 = vadd.f32 0.0, %v763
      %765 = vdwg.mxu0
      %v766 = vadd.f32 %v502, %v761
      %v767 = vadd.f32 %v507, %v764
      %769 = vrot.lane.b32.xlu0 %v738, 127
      %v770 = vpop.permute.xlu0 %769
      %771 = vrot.lane.b32.xlu0 %v739, 127
      %v772 = vpop.permute.xlu0 %771
      %v774 = vsel %vm626, %v772, 0
      %776 = vmatpush.msra.mxu0 0.0
      %777 = vmatpush.msra.mxu0 0.0
      %778 = vmatpush.msra.mxu0 0.0
      %779 = vmatpush.msra.mxu0 0.0
      %780 = vmatpush.msra.mxu0 0.0
      %781 = vmatpush.msra.mxu0 0.0
      %782 = vmatpush.msra.mxu0 0.0
      %783 = vmatpush.msra.mxu0 0.0
      %784 = vmatpush.msra.mxu0 0.0
      %785 = vmatpush.msra.mxu0 0.0
      %786 = vmatpush.msra.mxu0 0.0
      %787 = vmatpush.msra.mxu0 0.0
      %788 = vmatpush.msra.mxu0 0.0
      %789 = vmatpush.msra.mxu0 0.0
      %790 = vmatpush.msra.mxu0 %v774
      %791 = vmatpush.msra.mxu0 %v770
      %792 = vmatmul.f32.gmra.mxu0 %v662
      %v793 = vpop.f32.mrf.mxu0
      %v794 = vadd.f32 0.0, %v793
      %795 = vmatmul.f32.gmra.mxu0 %v665
      %v796 = vpop.f32.mrf.mxu0
      %v797 = vadd.f32 0.0, %v796
      %798 = vdwg.mxu0
      %v799 = vadd.f32 %v766, %v794
      %v800 = vadd.f32 %v767, %v797
      %801 = vrot.lane.b32.xlu0 %v738, 126
      %v802 = vpop.permute.xlu0 %801
      %803 = vrot.lane.b32.xlu0 %v739, 126
      %v804 = vpop.permute.xlu0 %803
      %v806 = vsel %vm626, %v804, 0
      %808 = vmatpush.msra.mxu0 0.0
      %809 = vmatpush.msra.mxu0 0.0
      %810 = vmatpush.msra.mxu0 0.0
      %811 = vmatpush.msra.mxu0 0.0
      %812 = vmatpush.msra.mxu0 0.0
      %813 = vmatpush.msra.mxu0 0.0
      %814 = vmatpush.msra.mxu0 0.0
      %815 = vmatpush.msra.mxu0 0.0
      %816 = vmatpush.msra.mxu0 0.0
      %817 = vmatpush.msra.mxu0 0.0
      %818 = vmatpush.msra.mxu0 0.0
      %819 = vmatpush.msra.mxu0 0.0
      %820 = vmatpush.msra.mxu0 0.0
      %821 = vmatpush.msra.mxu0 0.0
      %822 = vmatpush.msra.mxu0 %v806
      %823 = vmatpush.msra.mxu0 %v802
      %824 = vmatmul.f32.gmra.mxu0 %v700
      %v825 = vpop.f32.mrf.mxu0
      %v826 = vadd.f32 0.0, %v825
      %827 = vmatmul.f32.gmra.mxu0 %v703
      %v828 = vpop.f32.mrf.mxu0
      %v829 = vadd.f32 0.0, %v828
      %830 = vdwg.mxu0
      %v831 = vadd.f32 %v799, %v826
      %v832 = vadd.f32 %v800, %v829
      %vm833 = vcmp.gt.f32.partialorder %v831, 0.0
      %vm834 = vcmp.gt.f32.partialorder %v832, 0.0
      %v835 = vmul.f32 %v514, %v831
      %v836 = vmul.f32 %v519, %v832
      %v837 = vsel %vm833, %v831, %v835
      %v838 = vsel %vm834, %v832, %v836
      %v839 = vmax.f32 %v736, %v837
      %v840 = vmax.f32 %v737, %v838
      %vm841 = vcmask 113664
      %v843 = vsel %vm841, %v839, 0
      %v846 = vsel %vm841, %v840, 0
      %vm848 = vcmask 1045504
      %v850 = vsel %vm848, %v494, 0
      %852 = vmatpush.msra.mxu0 0.0
      %853 = vmatpush.msra.mxu0 0.0
      %854 = vmatpush.msra.mxu0 0.0
      %855 = vmatpush.msra.mxu0 0.0
      %856 = vmatpush.msra.mxu0 0.0
      %857 = vmatpush.msra.mxu0 0.0
      %858 = vmatpush.msra.mxu0 0.0
      %859 = vmatpush.msra.mxu0 0.0
      %860 = vmatpush.msra.mxu0 0.0
      %861 = vmatpush.msra.mxu0 0.0
      %862 = vmatpush.msra.mxu0 0.0
      %863 = vmatpush.msra.mxu0 0.0
      %864 = vmatpush.msra.mxu0 0.0
      %865 = vmatpush.msra.mxu0 0.0
      %866 = vmatpush.msra.mxu0 %v850
      %867 = vmatpush.msra.mxu0 %v493
      %868 = vmatmul.f32.gmra.mxu0 %v843
      %v869 = vpop.f32.mrf.mxu0
      %v870 = vadd.f32 0.0, %v869
      %871 = vmatmul.f32.gmra.mxu0 %v846
      %v872 = vpop.f32.mrf.mxu0
      %v873 = vadd.f32 0.0, %v872
      %874 = vdwg.mxu0
      %v876 = vsel %vm848, %v496, 0
      %878 = vmatpush.msra.mxu0 0.0
      %879 = vmatpush.msra.mxu0 0.0
      %880 = vmatpush.msra.mxu0 0.0
      %881 = vmatpush.msra.mxu0 0.0
      %882 = vmatpush.msra.mxu0 0.0
      %883 = vmatpush.msra.mxu0 0.0
      %884 = vmatpush.msra.mxu0 0.0
      %885 = vmatpush.msra.mxu0 0.0
      %886 = vmatpush.msra.mxu0 0.0
      %887 = vmatpush.msra.mxu0 0.0
      %888 = vmatpush.msra.mxu0 0.0
      %889 = vmatpush.msra.mxu0 0.0
      %890 = vmatpush.msra.mxu0 0.0
      %891 = vmatpush.msra.mxu0 0.0
      %892 = vmatpush.msra.mxu0 %v876
      %893 = vmatpush.msra.mxu0 %v495
      %894 = vmatmul.f32.gmra.mxu0 %v843
      %v895 = vpop.f32.mrf.mxu0
      %v896 = vadd.f32 0.0, %v895
      %897 = vmatmul.f32.gmra.mxu0 %v846
      %v898 = vpop.f32.mrf.mxu0
      %v899 = vadd.f32 0.0, %v898
      %900 = vdwg.mxu0
      %v901 = vmax.f32 %v870, %v896
      %v902 = vmax.f32 %v873, %v899
      %903 = vst.msk [vmem:[#allocation2] sm:$0xff] %vm602, %v901
      %vm904 = vcmask 50176
      %905 = vst.msk [vmem:[#allocation2 + $0x8] sm:$0x3] %vm904, %v902
      %v906 = vld [vmem:[%s462 + $0x6] sm:$0xff]
      %v907 = vld [vmem:[%s462 + $0xe] sm:$0x1]
      %v909 = vsel %vm626, %v907, 0
      %911 = vmatpush.msra.mxu0 0.0
      %912 = vmatpush.msra.mxu0 0.0
      %913 = vmatpush.msra.mxu0 0.0
      %914 = vmatpush.msra.mxu0 0.0
      %915 = vmatpush.msra.mxu0 0.0
      %916 = vmatpush.msra.mxu0 0.0
      %917 = vmatpush.msra.mxu0 0.0
      %918 = vmatpush.msra.mxu0 0.0
      %919 = vmatpush.msra.mxu0 0.0
      %920 = vmatpush.msra.mxu0 0.0
      %921 = vmatpush.msra.mxu0 0.0
      %922 = vmatpush.msra.mxu0 0.0
      %923 = vmatpush.msra.mxu0 0.0
      %924 = vmatpush.msra.mxu0 0.0
      %925 = vmatpush.msra.mxu0 %v909
      %926 = vmatpush.msra.mxu0 %v906
      %927 = vmatmul.f32.gmra.mxu0 %v621
      %v928 = vpop.f32.mrf.mxu0
      %v929 = vadd.f32 0.0, %v928
      %930 = vmatmul.f32.gmra.mxu0 %v624
      %v931 = vpop.f32.mrf.mxu0
      %v932 = vadd.f32 0.0, %v931
      %933 = vdwg.mxu0
      %v934 = vadd.f32 %v502, %v929
      %v935 = vadd.f32 %v507, %v932
      %937 = vrot.lane.b32.xlu0 %v906, 127
      %v938 = vpop.permute.xlu0 %937
      %939 = vrot.lane.b32.xlu0 %v907, 127
      %v940 = vpop.permute.xlu0 %939
      %v942 = vsel %vm626, %v940, 0
      %944 = vmatpush.msra.mxu0 0.0
      %945 = vmatpush.msra.mxu0 0.0
      %946 = vmatpush.msra.mxu0 0.0
      %947 = vmatpush.msra.mxu0 0.0
      %948 = vmatpush.msra.mxu0 0.0
      %949 = vmatpush.msra.mxu0 0.0
      %950 = vmatpush.msra.mxu0 0.0
      %951 = vmatpush.msra.mxu0 0.0
      %952 = vmatpush.msra.mxu0 0.0
      %953 = vmatpush.msra.mxu0 0.0
      %954 = vmatpush.msra.mxu0 0.0
      %955 = vmatpush.msra.mxu0 0.0
      %956 = vmatpush.msra.mxu0 0.0
      %957 = vmatpush.msra.mxu0 0.0
      %958 = vmatpush.msra.mxu0 %v942
      %959 = vmatpush.msra.mxu0 %v938
      %960 = vmatmul.f32.gmra.mxu0 %v662
      %v961 = vpop.f32.mrf.mxu0
      %v962 = vadd.f32 0.0, %v961
      %963 = vmatmul.f32.gmra.mxu0 %v665
      %v964 = vpop.f32.mrf.mxu0
      %v965 = vadd.f32 0.0, %v964
      %966 = vdwg.mxu0
      %v967 = vadd.f32 %v934, %v962
      %v968 = vadd.f32 %v935, %v965
      %969 = vrot.lane.b32.xlu0 %v906, 126
      %v970 = vpop.permute.xlu0 %969
      %971 = vrot.lane.b32.xlu0 %v907, 126
      %v972 = vpop.permute.xlu0 %971
      %v974 = vsel %vm626, %v972, 0
      %976 = vmatpush.msra.mxu0 0.0
      %977 = vmatpush.msra.mxu0 0.0
      %978 = vmatpush.msra.mxu0 0.0
      %979 = vmatpush.msra.mxu0 0.0
      %980 = vmatpush.msra.mxu0 0.0
      %981 = vmatpush.msra.mxu0 0.0
      %982 = vmatpush.msra.mxu0 0.0
      %983 = vmatpush.msra.mxu0 0.0
      %984 = vmatpush.msra.mxu0 0.0
      %985 = vmatpush.msra.mxu0 0.0
      %986 = vmatpush.msra.mxu0 0.0
      %987 = vmatpush.msra.mxu0 0.0
      %988 = vmatpush.msra.mxu0 0.0
      %989 = vmatpush.msra.mxu0 0.0
      %990 = vmatpush.msra.mxu0 %v974
      %991 = vmatpush.msra.mxu0 %v970
      %992 = vmatmul.f32.gmra.mxu0 %v700
      %v993 = vpop.f32.mrf.mxu0
      %v994 = vadd.f32 0.0, %v993
      %995 = vmatmul.f32.gmra.mxu0 %v703
      %v996 = vpop.f32.mrf.mxu0
      %v997 = vadd.f32 0.0, %v996
      %998 = vdwg.mxu0
      %v999 = vadd.f32 %v967, %v994
      %v1000 = vadd.f32 %v968, %v997
      %vm1001 = vcmp.gt.f32.partialorder %v999, 0.0
      %vm1002 = vcmp.gt.f32.partialorder %v1000, 0.0
      %v1003 = vmul.f32 %v514, %v999
      %v1004 = vmul.f32 %v519, %v1000
      %v1005 = vsel %vm1001, %v999, %v1003
      %v1006 = vsel %vm1002, %v1000, %v1004
      %v1007 = vld [vmem:[%s462 + $0x9] sm:$0xff]
      %v1008 = vld [vmem:[%s462 + $0x11] sm:$0x1]
      %v1010 = vsel %vm626, %v1008, 0
      %1012 = vmatpush.msra.mxu0 0.0
      %1013 = vmatpush.msra.mxu0 0.0
      %1014 = vmatpush.msra.mxu0 0.0
      %1015 = vmatpush.msra.mxu0 0.0
      %1016 = vmatpush.msra.mxu0 0.0
      %1017 = vmatpush.msra.mxu0 0.0
      %1018 = vmatpush.msra.mxu0 0.0
      %1019 = vmatpush.msra.mxu0 0.0
      %1020 = vmatpush.msra.mxu0 0.0
      %1021 = vmatpush.msra.mxu0 0.0
      %1022 = vmatpush.msra.mxu0 0.0
      %1023 = vmatpush.msra.mxu0 0.0
      %1024 = vmatpush.msra.mxu0 0.0
      %1025 = vmatpush.msra.mxu0 0.0
      %1026 = vmatpush.msra.mxu0 %v1010
      %1027 = vmatpush.msra.mxu0 %v1007
      %1028 = vmatmul.f32.gmra.mxu0 %v621
      %v1029 = vpop.f32.mrf.mxu0
      %v1030 = vadd.f32 0.0, %v1029
      %1031 = vmatmul.f32.gmra.mxu0 %v624
      %v1032 = vpop.f32.mrf.mxu0
      %v1033 = vadd.f32 0.0, %v1032
      %1034 = vdwg.mxu0
      %v1035 = vadd.f32 %v502, %v1030
      %v1036 = vadd.f32 %v507, %v1033
      %1038 = vrot.lane.b32.xlu0 %v1007, 127
      %v1039 = vpop.permute.xlu0 %1038
      %1040 = vrot.lane.b32.xlu0 %v1008, 127
      %v1041 = vpop.permute.xlu0 %1040
      %v1043 = vsel %vm626, %v1041, 0
      %1045 = vmatpush.msra.mxu0 0.0
      %1046 = vmatpush.msra.mxu0 0.0
      %1047 = vmatpush.msra.mxu0 0.0
      %1048 = vmatpush.msra.mxu0 0.0
      %1049 = vmatpush.msra.mxu0 0.0
      %1050 = vmatpush.msra.mxu0 0.0
      %1051 = vmatpush.msra.mxu0 0.0
      %1052 = vmatpush.msra.mxu0 0.0
      %1053 = vmatpush.msra.mxu0 0.0
      %1054 = vmatpush.msra.mxu0 0.0
      %1055 = vmatpush.msra.mxu0 0.0
      %1056 = vmatpush.msra.mxu0 0.0
      %1057 = vmatpush.msra.mxu0 0.0
      %1058 = vmatpush.msra.mxu0 0.0
      %1059 = vmatpush.msra.mxu0 %v1043
      %1060 = vmatpush.msra.mxu0 %v1039
      %1061 = vmatmul.f32.gmra.mxu0 %v662
      %v1062 = vpop.f32.mrf.mxu0
      %v1063 = vadd.f32 0.0, %v1062
      %1064 = vmatmul.f32.gmra.mxu0 %v665
      %v1065 = vpop.f32.mrf.mxu0
      %v1066 = vadd.f32 0.0, %v1065
      %1067 = vdwg.mxu0
      %v1068 = vadd.f32 %v1035, %v1063
      %v1069 = vadd.f32 %v1036, %v1066
      %1070 = vrot.lane.b32.xlu0 %v1007, 126
      %v1071 = vpop.permute.xlu0 %1070
      %1072 = vrot.lane.b32.xlu0 %v1008, 126
      %v1073 = vpop.permute.xlu0 %1072
      %v1075 = vsel %vm626, %v1073, 0
      %1077 = vmatpush.msra.mxu0 0.0
      %1078 = vmatpush.msra.mxu0 0.0
      %1079 = vmatpush.msra.mxu0 0.0
      %1080 = vmatpush.msra.mxu0 0.0
      %1081 = vmatpush.msra.mxu0 0.0
      %1082 = vmatpush.msra.mxu0 0.0
      %1083 = vmatpush.msra.mxu0 0.0
      %1084 = vmatpush.msra.mxu0 0.0
      %1085 = vmatpush.msra.mxu0 0.0
      %1086 = vmatpush.msra.mxu0 0.0
      %1087 = vmatpush.msra.mxu0 0.0
      %1088 = vmatpush.msra.mxu0 0.0
      %1089 = vmatpush.msra.mxu0 0.0
      %1090 = vmatpush.msra.mxu0 0.0
      %1091 = vmatpush.msra.mxu0 %v1075
      %1092 = vmatpush.msra.mxu0 %v1071
      %1093 = vmatmul.f32.gmra.mxu0 %v700
      %v1094 = vpop.f32.mrf.mxu0
      %v1095 = vadd.f32 0.0, %v1094
      %1096 = vmatmul.f32.gmra.mxu0 %v703
      %v1097 = vpop.f32.mrf.mxu0
      %v1098 = vadd.f32 0.0, %v1097
      %1099 = vdwg.mxu0
      %v1100 = vadd.f32 %v1068, %v1095
      %v1101 = vadd.f32 %v1069, %v1098
      %vm1102 = vcmp.gt.f32.partialorder %v1100, 0.0
      %vm1103 = vcmp.gt.f32.partialorder %v1101, 0.0
      %v1104 = vmul.f32 %v514, %v1100
      %v1105 = vmul.f32 %v519, %v1101
      %v1106 = vsel %vm1102, %v1100, %v1104
      %v1107 = vsel %vm1103, %v1101, %v1105
      %v1108 = vmax.f32 %v1005, %v1106
      %v1109 = vmax.f32 %v1006, %v1107
      %v1111 = vsel %vm841, %v1108, 0
      %v1114 = vsel %vm841, %v1109, 0
      %1116 = vmatpush.msra.mxu0 0.0
      %1117 = vmatpush.msra.mxu0 0.0
      %1118 = vmatpush.msra.mxu0 0.0
      %1119 = vmatpush.msra.mxu0 0.0
      %1120 = vmatpush.msra.mxu0 0.0
      %1121 = vmatpush.msra.mxu0 0.0
      %1122 = vmatpush.msra.mxu0 0.0
      %1123 = vmatpush.msra.mxu0 0.0
      %1124 = vmatpush.msra.mxu0 0.0
      %1125 = vmatpush.msra.mxu0 0.0
      %1126 = vmatpush.msra.mxu0 0.0
      %1127 = vmatpush.msra.mxu0 0.0
      %1128 = vmatpush.msra.mxu0 0.0
      %1129 = vmatpush.msra.mxu0 0.0
      %1130 = vmatpush.msra.mxu0 %v850
      %1131 = vmatpush.msra.mxu0 %v493
      %1132 = vmatmul.f32.gmra.mxu0 %v1111
      %v1133 = vpop.f32.mrf.mxu0
      %v1134 = vadd.f32 0.0, %v1133
      %1135 = vmatmul.f32.gmra.mxu0 %v1114
      %v1136 = vpop.f32.mrf.mxu0
      %v1137 = vadd.f32 0.0, %v1136
      %1138 = vdwg.mxu0
      %1139 = vmatpush.msra.mxu0 0.0
      %1140 = vmatpush.msra.mxu0 0.0
      %1141 = vmatpush.msra.mxu0 0.0
      %1142 = vmatpush.msra.mxu0 0.0
      %1143 = vmatpush.msra.mxu0 0.0
      %1144 = vmatpush.msra.mxu0 0.0
      %1145 = vmatpush.msra.mxu0 0.0
      %1146 = vmatpush.msra.mxu0 0.0
      %1147 = vmatpush.msra.mxu0 0.0
      %1148 = vmatpush.msra.mxu0 0.0
      %1149 = vmatpush.msra.mxu0 0.0
      %1150 = vmatpush.msra.mxu0 0.0
      %1151 = vmatpush.msra.mxu0 0.0
      %1152 = vmatpush.msra.mxu0 0.0
      %1153 = vmatpush.msra.mxu0 %v876
      %1154 = vmatpush.msra.mxu0 %v495
      %1155 = vmatmul.f32.gmra.mxu0 %v1111
      %v1156 = vpop.f32.mrf.mxu0
      %v1157 = vadd.f32 0.0, %v1156
      %1158 = vmatmul.f32.gmra.mxu0 %v1114
      %v1159 = vpop.f32.mrf.mxu0
      %v1160 = vadd.f32 0.0, %v1159
      %1161 = vdwg.mxu0
      %v1162 = vmax.f32 %v1134, %v1157
      %v1163 = vmax.f32 %v1137, %v1160
      %1164 = vst.msk [vmem:[#allocation2 + $0x10] sm:$0xff] %vm602, %v1162
      %1165 = vst.msk [vmem:[#allocation2 + $0x18] sm:$0x3] %vm904, %v1163
      %v1166 = vld [vmem:[%s462 + $0xc] sm:$0xff]
      %v1167 = vld [vmem:[%s462 + $0x14] sm:$0x1]
      %v1169 = vsel %vm626, %v1167, 0
      %1171 = vmatpush.msra.mxu0 0.0
      %1172 = vmatpush.msra.mxu0 0.0
      %1173 = vmatpush.msra.mxu0 0.0
      %1174 = vmatpush.msra.mxu0 0.0
      %1175 = vmatpush.msra.mxu0 0.0
      %1176 = vmatpush.msra.mxu0 0.0
      %1177 = vmatpush.msra.mxu0 0.0
      %1178 = vmatpush.msra.mxu0 0.0
      %1179 = vmatpush.msra.mxu0 0.0
      %1180 = vmatpush.msra.mxu0 0.0
      %1181 = vmatpush.msra.mxu0 0.0
      %1182 = vmatpush.msra.mxu0 0.0
      %1183 = vmatpush.msra.mxu0 0.0
      %1184 = vmatpush.msra.mxu0 0.0
      %1185 = vmatpush.msra.mxu0 %v1169
      %1186 = vmatpush.msra.mxu0 %v1166
      %1187 = vmatmul.f32.gmra.mxu0 %v621
      %v1188 = vpop.f32.mrf.mxu0
      %v1189 = vadd.f32 0.0, %v1188
      %1190 = vmatmul.f32.gmra.mxu0 %v624
      %v1191 = vpop.f32.mrf.mxu0
      %v1192 = vadd.f32 0.0, %v1191
      %1193 = vdwg.mxu0
      %v1194 = vadd.f32 %v502, %v1189
      %v1195 = vadd.f32 %v507, %v1192
      %1197 = vrot.lane.b32.xlu0 %v1166, 127
      %v1198 = vpop.permute.xlu0 %1197
      %1199 = vrot.lane.b32.xlu0 %v1167, 127
      %v1200 = vpop.permute.xlu0 %1199
      %v1202 = vsel %vm626, %v1200, 0
      %1204 = vmatpush.msra.mxu0 0.0
      %1205 = vmatpush.msra.mxu0 0.0
      %1206 = vmatpush.msra.mxu0 0.0
      %1207 = vmatpush.msra.mxu0 0.0
      %1208 = vmatpush.msra.mxu0 0.0
      %1209 = vmatpush.msra.mxu0 0.0
      %1210 = vmatpush.msra.mxu0 0.0
      %1211 = vmatpush.msra.mxu0 0.0
      %1212 = vmatpush.msra.mxu0 0.0
      %1213 = vmatpush.msra.mxu0 0.0
      %1214 = vmatpush.msra.mxu0 0.0
      %1215 = vmatpush.msra.mxu0 0.0
      %1216 = vmatpush.msra.mxu0 0.0
      %1217 = vmatpush.msra.mxu0 0.0
      %1218 = vmatpush.msra.mxu0 %v1202
      %1219 = vmatpush.msra.mxu0 %v1198
      %1220 = vmatmul.f32.gmra.mxu0 %v662
      %v1221 = vpop.f32.mrf.mxu0
      %v1222 = vadd.f32 0.0, %v1221
      %1223 = vmatmul.f32.gmra.mxu0 %v665
      %v1224 = vpop.f32.mrf.mxu0
      %v1225 = vadd.f32 0.0, %v1224
      %1226 = vdwg.mxu0
      %v1227 = vadd.f32 %v1194, %v1222
      %v1228 = vadd.f32 %v1195, %v1225
      %1229 = vrot.lane.b32.xlu0 %v1166, 126
      %v1230 = vpop.permute.xlu0 %1229
      %1231 = vrot.lane.b32.xlu0 %v1167, 126
      %v1232 = vpop.permute.xlu0 %1231
      %v1234 = vsel %vm626, %v1232, 0
      %1236 = vmatpush.msra.mxu0 0.0
      %1237 = vmatpush.msra.mxu0 0.0
      %1238 = vmatpush.msra.mxu0 0.0
      %1239 = vmatpush.msra.mxu0 0.0
      %1240 = vmatpush.msra.mxu0 0.0
      %1241 = vmatpush.msra.mxu0 0.0
      %1242 = vmatpush.msra.mxu0 0.0
      %1243 = vmatpush.msra.mxu0 0.0
      %1244 = vmatpush.msra.mxu0 0.0
      %1245 = vmatpush.msra.mxu0 0.0
      %1246 = vmatpush.msra.mxu0 0.0
      %1247 = vmatpush.msra.mxu0 0.0
      %1248 = vmatpush.msra.mxu0 0.0
      %1249 = vmatpush.msra.mxu0 0.0
      %1250 = vmatpush.msra.mxu0 %v1234
      %1251 = vmatpush.msra.mxu0 %v1230
      %1252 = vmatmul.f32.gmra.mxu0 %v700
      %v1253 = vpop.f32.mrf.mxu0
      %v1254 = vadd.f32 0.0, %v1253
      %1255 = vmatmul.f32.gmra.mxu0 %v703
      %v1256 = vpop.f32.mrf.mxu0
      %v1257 = vadd.f32 0.0, %v1256
      %1258 = vdwg.mxu0
      %v1259 = vadd.f32 %v1227, %v1254
      %v1260 = vadd.f32 %v1228, %v1257
      %vm1261 = vcmp.gt.f32.partialorder %v1259, 0.0
      %vm1262 = vcmp.gt.f32.partialorder %v1260, 0.0
      %v1263 = vmul.f32 %v514, %v1259
      %v1264 = vmul.f32 %v519, %v1260
      %v1265 = vsel %vm1261, %v1259, %v1263
      %v1266 = vsel %vm1262, %v1260, %v1264
      %v1267 = vld [vmem:[%s462 + $0xf] sm:$0xff]
      %v1268 = vld [vmem:[%s462 + $0x17] sm:$0x1]
      %v1270 = vsel %vm626, %v1268, 0
      %1272 = vmatpush.msra.mxu0 0.0
      %1273 = vmatpush.msra.mxu0 0.0
      %1274 = vmatpush.msra.mxu0 0.0
      %1275 = vmatpush.msra.mxu0 0.0
      %1276 = vmatpush.msra.mxu0 0.0
      %1277 = vmatpush.msra.mxu0 0.0
      %1278 = vmatpush.msra.mxu0 0.0
      %1279 = vmatpush.msra.mxu0 0.0
      %1280 = vmatpush.msra.mxu0 0.0
      %1281 = vmatpush.msra.mxu0 0.0
      %1282 = vmatpush.msra.mxu0 0.0
      %1283 = vmatpush.msra.mxu0 0.0
      %1284 = vmatpush.msra.mxu0 0.0
      %1285 = vmatpush.msra.mxu0 0.0
      %1286 = vmatpush.msra.mxu0 %v1270
      %1287 = vmatpush.msra.mxu0 %v1267
      %1288 = vmatmul.f32.gmra.mxu0 %v621
      %v1289 = vpop.f32.mrf.mxu0
      %v1290 = vadd.f32 0.0, %v1289
      %1291 = vmatmul.f32.gmra.mxu0 %v624
      %v1292 = vpop.f32.mrf.mxu0
      %v1293 = vadd.f32 0.0, %v1292
      %1294 = vdwg.mxu0
      %v1295 = vadd.f32 %v502, %v1290
      %v1296 = vadd.f32 %v507, %v1293
      %1298 = vrot.lane.b32.xlu0 %v1267, 127
      %v1299 = vpop.permute.xlu0 %1298
      %1300 = vrot.lane.b32.xlu0 %v1268, 127
      %v1301 = vpop.permute.xlu0 %1300
      %v1303 = vsel %vm626, %v1301, 0
      %1305 = vmatpush.msra.mxu0 0.0
      %1306 = vmatpush.msra.mxu0 0.0
      %1307 = vmatpush.msra.mxu0 0.0
      %1308 = vmatpush.msra.mxu0 0.0
      %1309 = vmatpush.msra.mxu0 0.0
      %1310 = vmatpush.msra.mxu0 0.0
      %1311 = vmatpush.msra.mxu0 0.0
      %1312 = vmatpush.msra.mxu0 0.0
      %1313 = vmatpush.msra.mxu0 0.0
      %1314 = vmatpush.msra.mxu0 0.0
      %1315 = vmatpush.msra.mxu0 0.0
      %1316 = vmatpush.msra.mxu0 0.0
      %1317 = vmatpush.msra.mxu0 0.0
      %1318 = vmatpush.msra.mxu0 0.0
      %1319 = vmatpush.msra.mxu0 %v1303
      %1320 = vmatpush.msra.mxu0 %v1299
      %1321 = vmatmul.f32.gmra.mxu0 %v662
      %v1322 = vpop.f32.mrf.mxu0
      %v1323 = vadd.f32 0.0, %v1322
      %1324 = vmatmul.f32.gmra.mxu0 %v665
      %v1325 = vpop.f32.mrf.mxu0
      %v1326 = vadd.f32 0.0, %v1325
      %1327 = vdwg.mxu0
      %v1328 = vadd.f32 %v1295, %v1323
      %v1329 = vadd.f32 %v1296, %v1326
      %1330 = vrot.lane.b32.xlu0 %v1267, 126
      %v1331 = vpop.permute.xlu0 %1330
      %1332 = vrot.lane.b32.xlu0 %v1268, 126
      %v1333 = vpop.permute.xlu0 %1332
      %v1335 = vsel %vm626, %v1333, 0
      %1337 = vmatpush.msra.mxu0 0.0
      %1338 = vmatpush.msra.mxu0 0.0
      %1339 = vmatpush.msra.mxu0 0.0
      %1340 = vmatpush.msra.mxu0 0.0
      %1341 = vmatpush.msra.mxu0 0.0
      %1342 = vmatpush.msra.mxu0 0.0
      %1343 = vmatpush.msra.mxu0 0.0
      %1344 = vmatpush.msra.mxu0 0.0
      %1345 = vmatpush.msra.mxu0 0.0
      %1346 = vmatpush.msra.mxu0 0.0
      %1347 = vmatpush.msra.mxu0 0.0
      %1348 = vmatpush.msra.mxu0 0.0
      %1349 = vmatpush.msra.mxu0 0.0
      %1350 = vmatpush.msra.mxu0 0.0
      %1351 = vmatpush.msra.mxu0 %v1335
      %1352 = vmatpush.msra.mxu0 %v1331
      %1353 = vmatmul.f32.gmra.mxu0 %v700
      %v1354 = vpop.f32.mrf.mxu0
      %v1355 = vadd.f32 0.0, %v1354
      %1356 = vmatmul.f32.gmra.mxu0 %v703
      %v1357 = vpop.f32.mrf.mxu0
      %v1358 = vadd.f32 0.0, %v1357
      %1359 = vdwg.mxu0
      %v1360 = vadd.f32 %v1328, %v1355
      %v1361 = vadd.f32 %v1329, %v1358
      %vm1362 = vcmp.gt.f32.partialorder %v1360, 0.0
      %vm1363 = vcmp.gt.f32.partialorder %v1361, 0.0
      %v1364 = vmul.f32 %v514, %v1360
      %v1365 = vmul.f32 %v519, %v1361
      %v1366 = vsel %vm1362, %v1360, %v1364
      %v1367 = vsel %vm1363, %v1361, %v1365
      %v1368 = vmax.f32 %v1265, %v1366
      %v1369 = vmax.f32 %v1266, %v1367
      %v1371 = vsel %vm841, %v1368, 0
      %v1374 = vsel %vm841, %v1369, 0
      %1376 = vmatpush.msra.mxu0 0.0
      %1377 = vmatpush.msra.mxu0 0.0
      %1378 = vmatpush.msra.mxu0 0.0
      %1379 = vmatpush.msra.mxu0 0.0
      %1380 = vmatpush.msra.mxu0 0.0
      %1381 = vmatpush.msra.mxu0 0.0
      %1382 = vmatpush.msra.mxu0 0.0
      %1383 = vmatpush.msra.mxu0 0.0
      %1384 = vmatpush.msra.mxu0 0.0
      %1385 = vmatpush.msra.mxu0 0.0
      %1386 = vmatpush.msra.mxu0 0.0
      %1387 = vmatpush.msra.mxu0 0.0
      %1388 = vmatpush.msra.mxu0 0.0
      %1389 = vmatpush.msra.mxu0 0.0
      %1390 = vmatpush.msra.mxu0 %v850
      %1391 = vmatpush.msra.mxu0 %v493
      %1392 = vmatmul.f32.gmra.mxu0 %v1371
      %v1393 = vpop.f32.mrf.mxu0
      %v1394 = vadd.f32 0.0, %v1393
      %1395 = vmatmul.f32.gmra.mxu0 %v1374
      %v1396 = vpop.f32.mrf.mxu0
      %v1397 = vadd.f32 0.0, %v1396
      %1398 = vdwg.mxu0
      %1399 = vmatpush.msra.mxu0 0.0
      %1400 = vmatpush.msra.mxu0 0.0
      %1401 = vmatpush.msra.mxu0 0.0
      %1402 = vmatpush.msra.mxu0 0.0
      %1403 = vmatpush.msra.mxu0 0.0
      %1404 = vmatpush.msra.mxu0 0.0
      %1405 = vmatpush.msra.mxu0 0.0
      %1406 = vmatpush.msra.mxu0 0.0
      %1407 = vmatpush.msra.mxu0 0.0
      %1408 = vmatpush.msra.mxu0 0.0
      %1409 = vmatpush.msra.mxu0 0.0
      %1410 = vmatpush.msra.mxu0 0.0
      %1411 = vmatpush.msra.mxu0 0.0
      %1412 = vmatpush.msra.mxu0 0.0
      %1413 = vmatpush.msra.mxu0 %v876
      %1414 = vmatpush.msra.mxu0 %v495
      %1415 = vmatmul.f32.gmra.mxu0 %v1371
      %v1416 = vpop.f32.mrf.mxu0
      %v1417 = vadd.f32 0.0, %v1416
      %1418 = vmatmul.f32.gmra.mxu0 %v1374
      %v1419 = vpop.f32.mrf.mxu0
      %v1420 = vadd.f32 0.0, %v1419
      %1421 = vdwg.mxu0
      %v1422 = vmax.f32 %v1394, %v1417
      %v1423 = vmax.f32 %v1397, %v1420
      %1424 = vst.msk [vmem:[#allocation2 + $0x20] sm:$0xff] %vm602, %v1422
      %1425 = vst.msk [vmem:[#allocation2 + $0x28] sm:$0x3] %vm904, %v1423
      %v1426 = vld [vmem:[%s462 + $0x12] sm:$0xff]
      %v1427 = vld [vmem:[%s462 + $0x1a] sm:$0x1]
      %v1429 = vsel %vm626, %v1427, 0
      %1431 = vmatpush.msra.mxu0 0.0
      %1432 = vmatpush.msra.mxu0 0.0
      %1433 = vmatpush.msra.mxu0 0.0
      %1434 = vmatpush.msra.mxu0 0.0
      %1435 = vmatpush.msra.mxu0 0.0
      %1436 = vmatpush.msra.mxu0 0.0
      %1437 = vmatpush.msra.mxu0 0.0
      %1438 = vmatpush.msra.mxu0 0.0
      %1439 = vmatpush.msra.mxu0 0.0
      %1440 = vmatpush.msra.mxu0 0.0
      %1441 = vmatpush.msra.mxu0 0.0
      %1442 = vmatpush.msra.mxu0 0.0
      %1443 = vmatpush.msra.mxu0 0.0
      %1444 = vmatpush.msra.mxu0 0.0
      %1445 = vmatpush.msra.mxu0 %v1429
      %1446 = vmatpush.msra.mxu0 %v1426
      %1447 = vmatmul.f32.gmra.mxu0 %v621
      %v1448 = vpop.f32.mrf.mxu0
      %v1449 = vadd.f32 0.0, %v1448
      %1450 = vmatmul.f32.gmra.mxu0 %v624
      %v1451 = vpop.f32.mrf.mxu0
      %v1452 = vadd.f32 0.0, %v1451
      %1453 = vdwg.mxu0
      %v1454 = vadd.f32 %v502, %v1449
      %v1455 = vadd.f32 %v507, %v1452
      %1457 = vrot.lane.b32.xlu0 %v1426, 127
      %v1458 = vpop.permute.xlu0 %1457
      %1459 = vrot.lane.b32.xlu0 %v1427, 127
      %v1460 = vpop.permute.xlu0 %1459
      %v1462 = vsel %vm626, %v1460, 0
      %1464 = vmatpush.msra.mxu0 0.0
      %1465 = vmatpush.msra.mxu0 0.0
      %1466 = vmatpush.msra.mxu0 0.0
      %1467 = vmatpush.msra.mxu0 0.0
      %1468 = vmatpush.msra.mxu0 0.0
      %1469 = vmatpush.msra.mxu0 0.0
      %1470 = vmatpush.msra.mxu0 0.0
      %1471 = vmatpush.msra.mxu0 0.0
      %1472 = vmatpush.msra.mxu0 0.0
      %1473 = vmatpush.msra.mxu0 0.0
      %1474 = vmatpush.msra.mxu0 0.0
      %1475 = vmatpush.msra.mxu0 0.0
      %1476 = vmatpush.msra.mxu0 0.0
      %1477 = vmatpush.msra.mxu0 0.0
      %1478 = vmatpush.msra.mxu0 %v1462
      %1479 = vmatpush.msra.mxu0 %v1458
      %1480 = vmatmul.f32.gmra.mxu0 %v662
      %v1481 = vpop.f32.mrf.mxu0
      %v1482 = vadd.f32 0.0, %v1481
      %1483 = vmatmul.f32.gmra.mxu0 %v665
      %v1484 = vpop.f32.mrf.mxu0
      %v1485 = vadd.f32 0.0, %v1484
      %1486 = vdwg.mxu0
      %v1487 = vadd.f32 %v1454, %v1482
      %v1488 = vadd.f32 %v1455, %v1485
      %1489 = vrot.lane.b32.xlu0 %v1426, 126
      %v1490 = vpop.permute.xlu0 %1489
      %1491 = vrot.lane.b32.xlu0 %v1427, 126
      %v1492 = vpop.permute.xlu0 %1491
      %v1494 = vsel %vm626, %v1492, 0
      %1496 = vmatpush.msra.mxu0 0.0
      %1497 = vmatpush.msra.mxu0 0.0
      %1498 = vmatpush.msra.mxu0 0.0
      %1499 = vmatpush.msra.mxu0 0.0
      %1500 = vmatpush.msra.mxu0 0.0
      %1501 = vmatpush.msra.mxu0 0.0
      %1502 = vmatpush.msra.mxu0 0.0
      %1503 = vmatpush.msra.mxu0 0.0
      %1504 = vmatpush.msra.mxu0 0.0
      %1505 = vmatpush.msra.mxu0 0.0
      %1506 = vmatpush.msra.mxu0 0.0
      %1507 = vmatpush.msra.mxu0 0.0
      %1508 = vmatpush.msra.mxu0 0.0
      %1509 = vmatpush.msra.mxu0 0.0
      %1510 = vmatpush.msra.mxu0 %v1494
      %1511 = vmatpush.msra.mxu0 %v1490
      %1512 = vmatmul.f32.gmra.mxu0 %v700
      %v1513 = vpop.f32.mrf.mxu0
      %v1514 = vadd.f32 0.0, %v1513
      %1515 = vmatmul.f32.gmra.mxu0 %v703
      %v1516 = vpop.f32.mrf.mxu0
      %v1517 = vadd.f32 0.0, %v1516
      %1518 = vdwg.mxu0
      %v1519 = vadd.f32 %v1487, %v1514
      %v1520 = vadd.f32 %v1488, %v1517
      %vm1521 = vcmp.gt.f32.partialorder %v1519, 0.0
      %vm1522 = vcmp.gt.f32.partialorder %v1520, 0.0
      %v1523 = vmul.f32 %v514, %v1519
      %v1524 = vmul.f32 %v519, %v1520
      %v1525 = vsel %vm1521, %v1519, %v1523
      %v1526 = vsel %vm1522, %v1520, %v1524
      %v1527 = vld [vmem:[%s462 + $0x15] sm:$0xff]
      %v1528 = vld [vmem:[%s462 + $0x1d] sm:$0x1]
      %v1530 = vsel %vm626, %v1528, 0
      %1532 = vmatpush.msra.mxu0 0.0
      %1533 = vmatpush.msra.mxu0 0.0
      %1534 = vmatpush.msra.mxu0 0.0
      %1535 = vmatpush.msra.mxu0 0.0
      %1536 = vmatpush.msra.mxu0 0.0
      %1537 = vmatpush.msra.mxu0 0.0
      %1538 = vmatpush.msra.mxu0 0.0
      %1539 = vmatpush.msra.mxu0 0.0
      %1540 = vmatpush.msra.mxu0 0.0
      %1541 = vmatpush.msra.mxu0 0.0
      %1542 = vmatpush.msra.mxu0 0.0
      %1543 = vmatpush.msra.mxu0 0.0
      %1544 = vmatpush.msra.mxu0 0.0
      %1545 = vmatpush.msra.mxu0 0.0
      %1546 = vmatpush.msra.mxu0 %v1530
      %1547 = vmatpush.msra.mxu0 %v1527
      %1548 = vmatmul.f32.gmra.mxu0 %v621
      %v1549 = vpop.f32.mrf.mxu0
      %v1550 = vadd.f32 0.0, %v1549
      %1551 = vmatmul.f32.gmra.mxu0 %v624
      %v1552 = vpop.f32.mrf.mxu0
      %v1553 = vadd.f32 0.0, %v1552
      %1554 = vdwg.mxu0
      %v1555 = vadd.f32 %v502, %v1550
      %v1556 = vadd.f32 %v507, %v1553
      %1558 = vrot.lane.b32.xlu0 %v1527, 127
      %v1559 = vpop.permute.xlu0 %1558
      %1560 = vrot.lane.b32.xlu0 %v1528, 127
      %v1561 = vpop.permute.xlu0 %1560
      %v1563 = vsel %vm626, %v1561, 0
      %1565 = vmatpush.msra.mxu0 0.0
      %1566 = vmatpush.msra.mxu0 0.0
      %1567 = vmatpush.msra.mxu0 0.0
      %1568 = vmatpush.msra.mxu0 0.0
      %1569 = vmatpush.msra.mxu0 0.0
      %1570 = vmatpush.msra.mxu0 0.0
      %1571 = vmatpush.msra.mxu0 0.0
      %1572 = vmatpush.msra.mxu0 0.0
      %1573 = vmatpush.msra.mxu0 0.0
      %1574 = vmatpush.msra.mxu0 0.0
      %1575 = vmatpush.msra.mxu0 0.0
      %1576 = vmatpush.msra.mxu0 0.0
      %1577 = vmatpush.msra.mxu0 0.0
      %1578 = vmatpush.msra.mxu0 0.0
      %1579 = vmatpush.msra.mxu0 %v1563
      %1580 = vmatpush.msra.mxu0 %v1559
      %1581 = vmatmul.f32.gmra.mxu0 %v662
      %v1582 = vpop.f32.mrf.mxu0
      %v1583 = vadd.f32 0.0, %v1582
      %1584 = vmatmul.f32.gmra.mxu0 %v665
      %v1585 = vpop.f32.mrf.mxu0
      %v1586 = vadd.f32 0.0, %v1585
      %1587 = vdwg.mxu0
      %v1588 = vadd.f32 %v1555, %v1583
      %v1589 = vadd.f32 %v1556, %v1586
      %1590 = vrot.lane.b32.xlu0 %v1527, 126
      %v1591 = vpop.permute.xlu0 %1590
      %1592 = vrot.lane.b32.xlu0 %v1528, 126
      %v1593 = vpop.permute.xlu0 %1592
      %v1595 = vsel %vm626, %v1593, 0
      %1597 = vmatpush.msra.mxu0 0.0
      %1598 = vmatpush.msra.mxu0 0.0
      %1599 = vmatpush.msra.mxu0 0.0
      %1600 = vmatpush.msra.mxu0 0.0
      %1601 = vmatpush.msra.mxu0 0.0
      %1602 = vmatpush.msra.mxu0 0.0
      %1603 = vmatpush.msra.mxu0 0.0
      %1604 = vmatpush.msra.mxu0 0.0
      %1605 = vmatpush.msra.mxu0 0.0
      %1606 = vmatpush.msra.mxu0 0.0
      %1607 = vmatpush.msra.mxu0 0.0
      %1608 = vmatpush.msra.mxu0 0.0
      %1609 = vmatpush.msra.mxu0 0.0
      %1610 = vmatpush.msra.mxu0 0.0
      %1611 = vmatpush.msra.mxu0 %v1595
      %1612 = vmatpush.msra.mxu0 %v1591
      %1613 = vmatmul.f32.gmra.mxu0 %v700
      %v1614 = vpop.f32.mrf.mxu0
      %v1615 = vadd.f32 0.0, %v1614
      %1616 = vmatmul.f32.gmra.mxu0 %v703
      %v1617 = vpop.f32.mrf.mxu0
      %v1618 = vadd.f32 0.0, %v1617
      %1619 = vdwg.mxu0
      %v1620 = vadd.f32 %v1588, %v1615
      %v1621 = vadd.f32 %v1589, %v1618
      %vm1622 = vcmp.gt.f32.partialorder %v1620, 0.0
      %vm1623 = vcmp.gt.f32.partialorder %v1621, 0.0
      %v1624 = vmul.f32 %v514, %v1620
      %v1625 = vmul.f32 %v519, %v1621
      %v1626 = vsel %vm1622, %v1620, %v1624
      %v1627 = vsel %vm1623, %v1621, %v1625
      %v1628 = vmax.f32 %v1525, %v1626
      %v1629 = vmax.f32 %v1526, %v1627
      %v1631 = vsel %vm841, %v1628, 0
      %v1634 = vsel %vm841, %v1629, 0
      %1636 = vmatpush.msra.mxu0 0.0
      %1637 = vmatpush.msra.mxu0 0.0
      %1638 = vmatpush.msra.mxu0 0.0
      %1639 = vmatpush.msra.mxu0 0.0
      %1640 = vmatpush.msra.mxu0 0.0
      %1641 = vmatpush.msra.mxu0 0.0
      %1642 = vmatpush.msra.mxu0 0.0
      %1643 = vmatpush.msra.mxu0 0.0
      %1644 = vmatpush.msra.mxu0 0.0
      %1645 = vmatpush.msra.mxu0 0.0
      %1646 = vmatpush.msra.mxu0 0.0
      %1647 = vmatpush.msra.mxu0 0.0
      %1648 = vmatpush.msra.mxu0 0.0
      %1649 = vmatpush.msra.mxu0 0.0
      %1650 = vmatpush.msra.mxu0 %v850
      %1651 = vmatpush.msra.mxu0 %v493
      %1652 = vmatmul.f32.gmra.mxu0 %v1631
      %v1653 = vpop.f32.mrf.mxu0
      %v1654 = vadd.f32 0.0, %v1653
      %1655 = vmatmul.f32.gmra.mxu0 %v1634
      %v1656 = vpop.f32.mrf.mxu0
      %v1657 = vadd.f32 0.0, %v1656
      %1658 = vdwg.mxu0
      %1659 = vmatpush.msra.mxu0 0.0
      %1660 = vmatpush.msra.mxu0 0.0
      %1661 = vmatpush.msra.mxu0 0.0
      %1662 = vmatpush.msra.mxu0 0.0
      %1663 = vmatpush.msra.mxu0 0.0
      %1664 = vmatpush.msra.mxu0 0.0
      %1665 = vmatpush.msra.mxu0 0.0
      %1666 = vmatpush.msra.mxu0 0.0
      %1667 = vmatpush.msra.mxu0 0.0
      %1668 = vmatpush.msra.mxu0 0.0
      %1669 = vmatpush.msra.mxu0 0.0
      %1670 = vmatpush.msra.mxu0 0.0
      %1671 = vmatpush.msra.mxu0 0.0
      %1672 = vmatpush.msra.mxu0 0.0
      %1673 = vmatpush.msra.mxu0 %v876
      %1674 = vmatpush.msra.mxu0 %v495
      %1675 = vmatmul.f32.gmra.mxu0 %v1631
      %v1676 = vpop.f32.mrf.mxu0
      %v1677 = vadd.f32 0.0, %v1676
      %1678 = vmatmul.f32.gmra.mxu0 %v1634
      %v1679 = vpop.f32.mrf.mxu0
      %v1680 = vadd.f32 0.0, %v1679
      %1681 = vdwg.mxu0
      %v1682 = vmax.f32 %v1654, %v1677
      %v1683 = vmax.f32 %v1657, %v1680
      %1684 = vst.msk [vmem:[#allocation2 + $0x30] sm:$0xff] %vm602, %v1682
      %1685 = vst.msk [vmem:[#allocation2 + $0x38] sm:$0x3] %vm904, %v1683
      %v1686 = vld [vmem:[%s462 + $0x18] sm:$0xff]
      %v1687 = vld [vmem:[%s462 + $0x20] sm:$0x1]
      %v1689 = vsel %vm626, %v1687, 0
      %1691 = vmatpush.msra.mxu0 0.0
      %1692 = vmatpush.msra.mxu0 0.0
      %1693 = vmatpush.msra.mxu0 0.0
      %1694 = vmatpush.msra.mxu0 0.0
      %1695 = vmatpush.msra.mxu0 0.0
      %1696 = vmatpush.msra.mxu0 0.0
      %1697 = vmatpush.msra.mxu0 0.0
      %1698 = vmatpush.msra.mxu0 0.0
      %1699 = vmatpush.msra.mxu0 0.0
      %1700 = vmatpush.msra.mxu0 0.0
      %1701 = vmatpush.msra.mxu0 0.0
      %1702 = vmatpush.msra.mxu0 0.0
      %1703 = vmatpush.msra.mxu0 0.0
      %1704 = vmatpush.msra.mxu0 0.0
      %1705 = vmatpush.msra.mxu0 %v1689
      %1706 = vmatpush.msra.mxu0 %v1686
      %1707 = vmatmul.f32.gmra.mxu0 %v621
      %v1708 = vpop.f32.mrf.mxu0
      %v1709 = vadd.f32 0.0, %v1708
      %1710 = vmatmul.f32.gmra.mxu0 %v624
      %v1711 = vpop.f32.mrf.mxu0
      %v1712 = vadd.f32 0.0, %v1711
      %1713 = vdwg.mxu0
      %v1714 = vadd.f32 %v502, %v1709
      %v1715 = vadd.f32 %v507, %v1712
      %1717 = vrot.lane.b32.xlu0 %v1686, 127
      %v1718 = vpop.permute.xlu0 %1717
      %1719 = vrot.lane.b32.xlu0 %v1687, 127
      %v1720 = vpop.permute.xlu0 %1719
      %v1722 = vsel %vm626, %v1720, 0
      %1724 = vmatpush.msra.mxu0 0.0
      %1725 = vmatpush.msra.mxu0 0.0
      %1726 = vmatpush.msra.mxu0 0.0
      %1727 = vmatpush.msra.mxu0 0.0
      %1728 = vmatpush.msra.mxu0 0.0
      %1729 = vmatpush.msra.mxu0 0.0
      %1730 = vmatpush.msra.mxu0 0.0
      %1731 = vmatpush.msra.mxu0 0.0
      %1732 = vmatpush.msra.mxu0 0.0
      %1733 = vmatpush.msra.mxu0 0.0
      %1734 = vmatpush.msra.mxu0 0.0
      %1735 = vmatpush.msra.mxu0 0.0
      %1736 = vmatpush.msra.mxu0 0.0
      %1737 = vmatpush.msra.mxu0 0.0
      %1738 = vmatpush.msra.mxu0 %v1722
      %1739 = vmatpush.msra.mxu0 %v1718
      %1740 = vmatmul.f32.gmra.mxu0 %v662
      %v1741 = vpop.f32.mrf.mxu0
      %v1742 = vadd.f32 0.0, %v1741
      %1743 = vmatmul.f32.gmra.mxu0 %v665
      %v1744 = vpop.f32.mrf.mxu0
      %v1745 = vadd.f32 0.0, %v1744
      %1746 = vdwg.mxu0
      %v1747 = vadd.f32 %v1714, %v1742
      %v1748 = vadd.f32 %v1715, %v1745
      %1749 = vrot.lane.b32.xlu0 %v1686, 126
      %v1750 = vpop.permute.xlu0 %1749
      %1751 = vrot.lane.b32.xlu0 %v1687, 126
      %v1752 = vpop.permute.xlu0 %1751
      %v1754 = vsel %vm626, %v1752, 0
      %1756 = vmatpush.msra.mxu0 0.0
      %1757 = vmatpush.msra.mxu0 0.0
      %1758 = vmatpush.msra.mxu0 0.0
      %1759 = vmatpush.msra.mxu0 0.0
      %1760 = vmatpush.msra.mxu0 0.0
      %1761 = vmatpush.msra.mxu0 0.0
      %1762 = vmatpush.msra.mxu0 0.0
      %1763 = vmatpush.msra.mxu0 0.0
      %1764 = vmatpush.msra.mxu0 0.0
      %1765 = vmatpush.msra.mxu0 0.0
      %1766 = vmatpush.msra.mxu0 0.0
      %1767 = vmatpush.msra.mxu0 0.0
      %1768 = vmatpush.msra.mxu0 0.0
      %1769 = vmatpush.msra.mxu0 0.0
      %1770 = vmatpush.msra.mxu0 %v1754
      %1771 = vmatpush.msra.mxu0 %v1750
      %1772 = vmatmul.f32.gmra.mxu0 %v700
      %v1773 = vpop.f32.mrf.mxu0
      %v1774 = vadd.f32 0.0, %v1773
      %1775 = vmatmul.f32.gmra.mxu0 %v703
      %v1776 = vpop.f32.mrf.mxu0
      %v1777 = vadd.f32 0.0, %v1776
      %1778 = vdwg.mxu0
      %v1779 = vadd.f32 %v1747, %v1774
      %v1780 = vadd.f32 %v1748, %v1777
      %vm1781 = vcmp.gt.f32.partialorder %v1779, 0.0
      %vm1782 = vcmp.gt.f32.partialorder %v1780, 0.0
      %v1783 = vmul.f32 %v514, %v1779
      %v1784 = vmul.f32 %v519, %v1780
      %v1785 = vsel %vm1781, %v1779, %v1783
      %v1786 = vsel %vm1782, %v1780, %v1784
      %v1787 = vld [vmem:[%s462 + $0x1b] sm:$0xff]
      %v1788 = vld [vmem:[%s462 + $0x23] sm:$0x1]
      %v1790 = vsel %vm626, %v1788, 0
      %1792 = vmatpush.msra.mxu0 0.0
      %1793 = vmatpush.msra.mxu0 0.0
      %1794 = vmatpush.msra.mxu0 0.0
      %1795 = vmatpush.msra.mxu0 0.0
      %1796 = vmatpush.msra.mxu0 0.0
      %1797 = vmatpush.msra.mxu0 0.0
      %1798 = vmatpush.msra.mxu0 0.0
      %1799 = vmatpush.msra.mxu0 0.0
      %1800 = vmatpush.msra.mxu0 0.0
      %1801 = vmatpush.msra.mxu0 0.0
      %1802 = vmatpush.msra.mxu0 0.0
      %1803 = vmatpush.msra.mxu0 0.0
      %1804 = vmatpush.msra.mxu0 0.0
      %1805 = vmatpush.msra.mxu0 0.0
      %1806 = vmatpush.msra.mxu0 %v1790
      %1807 = vmatpush.msra.mxu0 %v1787
      %1808 = vmatmul.f32.gmra.mxu0 %v621
      %v1809 = vpop.f32.mrf.mxu0
      %v1810 = vadd.f32 0.0, %v1809
      %1811 = vmatmul.f32.gmra.mxu0 %v624
      %v1812 = vpop.f32.mrf.mxu0
      %v1813 = vadd.f32 0.0, %v1812
      %1814 = vdwg.mxu0
      %v1815 = vadd.f32 %v502, %v1810
      %v1816 = vadd.f32 %v507, %v1813
      %1818 = vrot.lane.b32.xlu0 %v1787, 127
      %v1819 = vpop.permute.xlu0 %1818
      %1820 = vrot.lane.b32.xlu0 %v1788, 127
      %v1821 = vpop.permute.xlu0 %1820
      %v1823 = vsel %vm626, %v1821, 0
      %1825 = vmatpush.msra.mxu0 0.0
      %1826 = vmatpush.msra.mxu0 0.0
      %1827 = vmatpush.msra.mxu0 0.0
      %1828 = vmatpush.msra.mxu0 0.0
      %1829 = vmatpush.msra.mxu0 0.0
      %1830 = vmatpush.msra.mxu0 0.0
      %1831 = vmatpush.msra.mxu0 0.0
      %1832 = vmatpush.msra.mxu0 0.0
      %1833 = vmatpush.msra.mxu0 0.0
      %1834 = vmatpush.msra.mxu0 0.0
      %1835 = vmatpush.msra.mxu0 0.0
      %1836 = vmatpush.msra.mxu0 0.0
      %1837 = vmatpush.msra.mxu0 0.0
      %1838 = vmatpush.msra.mxu0 0.0
      %1839 = vmatpush.msra.mxu0 %v1823
      %1840 = vmatpush.msra.mxu0 %v1819
      %1841 = vmatmul.f32.gmra.mxu0 %v662
      %v1842 = vpop.f32.mrf.mxu0
      %v1843 = vadd.f32 0.0, %v1842
      %1844 = vmatmul.f32.gmra.mxu0 %v665
      %v1845 = vpop.f32.mrf.mxu0
      %v1846 = vadd.f32 0.0, %v1845
      %1847 = vdwg.mxu0
      %v1848 = vadd.f32 %v1815, %v1843
      %v1849 = vadd.f32 %v1816, %v1846
      %1850 = vrot.lane.b32.xlu0 %v1787, 126
      %v1851 = vpop.permute.xlu0 %1850
      %1852 = vrot.lane.b32.xlu0 %v1788, 126
      %v1853 = vpop.permute.xlu0 %1852
      %v1855 = vsel %vm626, %v1853, 0
      %1857 = vmatpush.msra.mxu0 0.0
      %1858 = vmatpush.msra.mxu0 0.0
      %1859 = vmatpush.msra.mxu0 0.0
      %1860 = vmatpush.msra.mxu0 0.0
      %1861 = vmatpush.msra.mxu0 0.0
      %1862 = vmatpush.msra.mxu0 0.0
      %1863 = vmatpush.msra.mxu0 0.0
      %1864 = vmatpush.msra.mxu0 0.0
      %1865 = vmatpush.msra.mxu0 0.0
      %1866 = vmatpush.msra.mxu0 0.0
      %1867 = vmatpush.msra.mxu0 0.0
      %1868 = vmatpush.msra.mxu0 0.0
      %1869 = vmatpush.msra.mxu0 0.0
      %1870 = vmatpush.msra.mxu0 0.0
      %1871 = vmatpush.msra.mxu0 %v1855
      %1872 = vmatpush.msra.mxu0 %v1851
      %1873 = vmatmul.f32.gmra.mxu0 %v700
      %v1874 = vpop.f32.mrf.mxu0
      %v1875 = vadd.f32 0.0, %v1874
      %1876 = vmatmul.f32.gmra.mxu0 %v703
      %v1877 = vpop.f32.mrf.mxu0
      %v1878 = vadd.f32 0.0, %v1877
      %1879 = vdwg.mxu0
      %v1880 = vadd.f32 %v1848, %v1875
      %v1881 = vadd.f32 %v1849, %v1878
      %vm1882 = vcmp.gt.f32.partialorder %v1880, 0.0
      %vm1883 = vcmp.gt.f32.partialorder %v1881, 0.0
      %v1884 = vmul.f32 %v514, %v1880
      %v1885 = vmul.f32 %v519, %v1881
      %v1886 = vsel %vm1882, %v1880, %v1884
      %v1887 = vsel %vm1883, %v1881, %v1885
      %v1888 = vmax.f32 %v1785, %v1886
      %v1889 = vmax.f32 %v1786, %v1887
      %v1891 = vsel %vm841, %v1888, 0
      %v1894 = vsel %vm841, %v1889, 0
      %1896 = vmatpush.msra.mxu0 0.0
      %1897 = vmatpush.msra.mxu0 0.0
      %1898 = vmatpush.msra.mxu0 0.0
      %1899 = vmatpush.msra.mxu0 0.0
      %1900 = vmatpush.msra.mxu0 0.0
      %1901 = vmatpush.msra.mxu0 0.0
      %1902 = vmatpush.msra.mxu0 0.0
      %1903 = vmatpush.msra.mxu0 0.0
      %1904 = vmatpush.msra.mxu0 0.0
      %1905 = vmatpush.msra.mxu0 0.0
      %1906 = vmatpush.msra.mxu0 0.0
      %1907 = vmatpush.msra.mxu0 0.0
      %1908 = vmatpush.msra.mxu0 0.0
      %1909 = vmatpush.msra.mxu0 0.0
      %1910 = vmatpush.msra.mxu0 %v850
      %1911 = vmatpush.msra.mxu0 %v493
      %1912 = vmatmul.f32.gmra.mxu0 %v1891
      %v1913 = vpop.f32.mrf.mxu0
      %v1914 = vadd.f32 0.0, %v1913
      %1915 = vmatmul.f32.gmra.mxu0 %v1894
      %v1916 = vpop.f32.mrf.mxu0
      %v1917 = vadd.f32 0.0, %v1916
      %1918 = vdwg.mxu0
      %1919 = vmatpush.msra.mxu0 0.0
      %1920 = vmatpush.msra.mxu0 0.0
      %1921 = vmatpush.msra.mxu0 0.0
      %1922 = vmatpush.msra.mxu0 0.0
      %1923 = vmatpush.msra.mxu0 0.0
      %1924 = vmatpush.msra.mxu0 0.0
      %1925 = vmatpush.msra.mxu0 0.0
      %1926 = vmatpush.msra.mxu0 0.0
      %1927 = vmatpush.msra.mxu0 0.0
      %1928 = vmatpush.msra.mxu0 0.0
      %1929 = vmatpush.msra.mxu0 0.0
      %1930 = vmatpush.msra.mxu0 0.0
      %1931 = vmatpush.msra.mxu0 0.0
      %1932 = vmatpush.msra.mxu0 0.0
      %1933 = vmatpush.msra.mxu0 %v876
      %1934 = vmatpush.msra.mxu0 %v495
      %1935 = vmatmul.f32.gmra.mxu0 %v1891
      %v1936 = vpop.f32.mrf.mxu0
      %v1937 = vadd.f32 0.0, %v1936
      %1938 = vmatmul.f32.gmra.mxu0 %v1894
      %v1939 = vpop.f32.mrf.mxu0
      %v1940 = vadd.f32 0.0, %v1939
      %1941 = vdwg.mxu0
      %v1942 = vmax.f32 %v1914, %v1937
      %v1943 = vmax.f32 %v1917, %v1940
      %1944 = vst.msk [vmem:[#allocation2 + $0x40] sm:$0xff] %vm602, %v1942
      %1945 = vst.msk [vmem:[#allocation2 + $0x48] sm:$0x3] %vm904, %v1943
      %v1946 = vld [vmem:[%s462 + $0x1e] sm:$0xff]
      %v1947 = vld [vmem:[%s462 + $0x26] sm:$0x1]
      %v1949 = vsel %vm626, %v1947, 0
      %1951 = vmatpush.msra.mxu0 0.0
      %1952 = vmatpush.msra.mxu0 0.0
      %1953 = vmatpush.msra.mxu0 0.0
      %1954 = vmatpush.msra.mxu0 0.0
      %1955 = vmatpush.msra.mxu0 0.0
      %1956 = vmatpush.msra.mxu0 0.0
      %1957 = vmatpush.msra.mxu0 0.0
      %1958 = vmatpush.msra.mxu0 0.0
      %1959 = vmatpush.msra.mxu0 0.0
      %1960 = vmatpush.msra.mxu0 0.0
      %1961 = vmatpush.msra.mxu0 0.0
      %1962 = vmatpush.msra.mxu0 0.0
      %1963 = vmatpush.msra.mxu0 0.0
      %1964 = vmatpush.msra.mxu0 0.0
      %1965 = vmatpush.msra.mxu0 %v1949
      %1966 = vmatpush.msra.mxu0 %v1946
      %1967 = vmatmul.f32.gmra.mxu0 %v621
      %v1968 = vpop.f32.mrf.mxu0
      %v1969 = vadd.f32 0.0, %v1968
      %1970 = vmatmul.f32.gmra.mxu0 %v624
      %v1971 = vpop.f32.mrf.mxu0
      %v1972 = vadd.f32 0.0, %v1971
      %1973 = vdwg.mxu0
      %v1974 = vadd.f32 %v502, %v1969
      %v1975 = vadd.f32 %v507, %v1972
      %1977 = vrot.lane.b32.xlu0 %v1946, 127
      %v1978 = vpop.permute.xlu0 %1977
      %1979 = vrot.lane.b32.xlu0 %v1947, 127
      %v1980 = vpop.permute.xlu0 %1979
      %v1982 = vsel %vm626, %v1980, 0
      %1984 = vmatpush.msra.mxu0 0.0
      %1985 = vmatpush.msra.mxu0 0.0
      %1986 = vmatpush.msra.mxu0 0.0
      %1987 = vmatpush.msra.mxu0 0.0
      %1988 = vmatpush.msra.mxu0 0.0
      %1989 = vmatpush.msra.mxu0 0.0
      %1990 = vmatpush.msra.mxu0 0.0
      %1991 = vmatpush.msra.mxu0 0.0
      %1992 = vmatpush.msra.mxu0 0.0
      %1993 = vmatpush.msra.mxu0 0.0
      %1994 = vmatpush.msra.mxu0 0.0
      %1995 = vmatpush.msra.mxu0 0.0
      %1996 = vmatpush.msra.mxu0 0.0
      %1997 = vmatpush.msra.mxu0 0.0
      %1998 = vmatpush.msra.mxu0 %v1982
      %1999 = vmatpush.msra.mxu0 %v1978
      %2000 = vmatmul.f32.gmra.mxu0 %v662
      %v2001 = vpop.f32.mrf.mxu0
      %v2002 = vadd.f32 0.0, %v2001
      %2003 = vmatmul.f32.gmra.mxu0 %v665
      %v2004 = vpop.f32.mrf.mxu0
      %v2005 = vadd.f32 0.0, %v2004
      %2006 = vdwg.mxu0
      %v2007 = vadd.f32 %v1974, %v2002
      %v2008 = vadd.f32 %v1975, %v2005
      %2009 = vrot.lane.b32.xlu0 %v1946, 126
      %v2010 = vpop.permute.xlu0 %2009
      %2011 = vrot.lane.b32.xlu0 %v1947, 126
      %v2012 = vpop.permute.xlu0 %2011
      %v2014 = vsel %vm626, %v2012, 0
      %2016 = vmatpush.msra.mxu0 0.0
      %2017 = vmatpush.msra.mxu0 0.0
      %2018 = vmatpush.msra.mxu0 0.0
      %2019 = vmatpush.msra.mxu0 0.0
      %2020 = vmatpush.msra.mxu0 0.0
      %2021 = vmatpush.msra.mxu0 0.0
      %2022 = vmatpush.msra.mxu0 0.0
      %2023 = vmatpush.msra.mxu0 0.0
      %2024 = vmatpush.msra.mxu0 0.0
      %2025 = vmatpush.msra.mxu0 0.0
      %2026 = vmatpush.msra.mxu0 0.0
      %2027 = vmatpush.msra.mxu0 0.0
      %2028 = vmatpush.msra.mxu0 0.0
      %2029 = vmatpush.msra.mxu0 0.0
      %2030 = vmatpush.msra.mxu0 %v2014
      %2031 = vmatpush.msra.mxu0 %v2010
      %2032 = vmatmul.f32.gmra.mxu0 %v700
      %v2033 = vpop.f32.mrf.mxu0
      %v2034 = vadd.f32 0.0, %v2033
      %2035 = vmatmul.f32.gmra.mxu0 %v703
      %v2036 = vpop.f32.mrf.mxu0
      %v2037 = vadd.f32 0.0, %v2036
      %2038 = vdwg.mxu0
      %v2039 = vadd.f32 %v2007, %v2034
      %v2040 = vadd.f32 %v2008, %v2037
      %vm2041 = vcmp.gt.f32.partialorder %v2039, 0.0
      %vm2042 = vcmp.gt.f32.partialorder %v2040, 0.0
      %v2043 = vmul.f32 %v514, %v2039
      %v2044 = vmul.f32 %v519, %v2040
      %v2045 = vsel %vm2041, %v2039, %v2043
      %v2046 = vsel %vm2042, %v2040, %v2044
      %v2047 = vld [vmem:[%s462 + $0x21] sm:$0xff]
      %v2048 = vld [vmem:[%s462 + $0x29] sm:$0x1]
      %v2050 = vsel %vm626, %v2048, 0
      %2052 = vmatpush.msra.mxu0 0.0
      %2053 = vmatpush.msra.mxu0 0.0
      %2054 = vmatpush.msra.mxu0 0.0
      %2055 = vmatpush.msra.mxu0 0.0
      %2056 = vmatpush.msra.mxu0 0.0
      %2057 = vmatpush.msra.mxu0 0.0
      %2058 = vmatpush.msra.mxu0 0.0
      %2059 = vmatpush.msra.mxu0 0.0
      %2060 = vmatpush.msra.mxu0 0.0
      %2061 = vmatpush.msra.mxu0 0.0
      %2062 = vmatpush.msra.mxu0 0.0
      %2063 = vmatpush.msra.mxu0 0.0
      %2064 = vmatpush.msra.mxu0 0.0
      %2065 = vmatpush.msra.mxu0 0.0
      %2066 = vmatpush.msra.mxu0 %v2050
      %2067 = vmatpush.msra.mxu0 %v2047
      %2068 = vmatmul.f32.gmra.mxu0 %v621
      %v2069 = vpop.f32.mrf.mxu0
      %v2070 = vadd.f32 0.0, %v2069
      %2071 = vmatmul.f32.gmra.mxu0 %v624
      %v2072 = vpop.f32.mrf.mxu0
      %v2073 = vadd.f32 0.0, %v2072
      %2074 = vdwg.mxu0
      %v2075 = vadd.f32 %v502, %v2070
      %v2076 = vadd.f32 %v507, %v2073
      %2078 = vrot.lane.b32.xlu0 %v2047, 127
      %v2079 = vpop.permute.xlu0 %2078
      %2080 = vrot.lane.b32.xlu0 %v2048, 127
      %v2081 = vpop.permute.xlu0 %2080
      %v2083 = vsel %vm626, %v2081, 0
      %2085 = vmatpush.msra.mxu0 0.0
      %2086 = vmatpush.msra.mxu0 0.0
      %2087 = vmatpush.msra.mxu0 0.0
      %2088 = vmatpush.msra.mxu0 0.0
      %2089 = vmatpush.msra.mxu0 0.0
      %2090 = vmatpush.msra.mxu0 0.0
      %2091 = vmatpush.msra.mxu0 0.0
      %2092 = vmatpush.msra.mxu0 0.0
      %2093 = vmatpush.msra.mxu0 0.0
      %2094 = vmatpush.msra.mxu0 0.0
      %2095 = vmatpush.msra.mxu0 0.0
      %2096 = vmatpush.msra.mxu0 0.0
      %2097 = vmatpush.msra.mxu0 0.0
      %2098 = vmatpush.msra.mxu0 0.0
      %2099 = vmatpush.msra.mxu0 %v2083
      %2100 = vmatpush.msra.mxu0 %v2079
      %2101 = vmatmul.f32.gmra.mxu0 %v662
      %v2102 = vpop.f32.mrf.mxu0
      %v2103 = vadd.f32 0.0, %v2102
      %2104 = vmatmul.f32.gmra.mxu0 %v665
      %v2105 = vpop.f32.mrf.mxu0
      %v2106 = vadd.f32 0.0, %v2105
      %2107 = vdwg.mxu0
      %v2108 = vadd.f32 %v2075, %v2103
      %v2109 = vadd.f32 %v2076, %v2106
      %2110 = vrot.lane.b32.xlu0 %v2047, 126
      %v2111 = vpop.permute.xlu0 %2110
      %2112 = vrot.lane.b32.xlu0 %v2048, 126
      %v2113 = vpop.permute.xlu0 %2112
      %v2115 = vsel %vm626, %v2113, 0
      %2117 = vmatpush.msra.mxu0 0.0
      %2118 = vmatpush.msra.mxu0 0.0
      %2119 = vmatpush.msra.mxu0 0.0
      %2120 = vmatpush.msra.mxu0 0.0
      %2121 = vmatpush.msra.mxu0 0.0
      %2122 = vmatpush.msra.mxu0 0.0
      %2123 = vmatpush.msra.mxu0 0.0
      %2124 = vmatpush.msra.mxu0 0.0
      %2125 = vmatpush.msra.mxu0 0.0
      %2126 = vmatpush.msra.mxu0 0.0
      %2127 = vmatpush.msra.mxu0 0.0
      %2128 = vmatpush.msra.mxu0 0.0
      %2129 = vmatpush.msra.mxu0 0.0
      %2130 = vmatpush.msra.mxu0 0.0
      %2131 = vmatpush.msra.mxu0 %v2115
      %2132 = vmatpush.msra.mxu0 %v2111
      %2133 = vmatmul.f32.gmra.mxu0 %v700
      %v2134 = vpop.f32.mrf.mxu0
      %v2135 = vadd.f32 0.0, %v2134
      %2136 = vmatmul.f32.gmra.mxu0 %v703
      %v2137 = vpop.f32.mrf.mxu0
      %v2138 = vadd.f32 0.0, %v2137
      %2139 = vdwg.mxu0
      %v2140 = vadd.f32 %v2108, %v2135
      %v2141 = vadd.f32 %v2109, %v2138
      %vm2142 = vcmp.gt.f32.partialorder %v2140, 0.0
      %vm2143 = vcmp.gt.f32.partialorder %v2141, 0.0
      %v2144 = vmul.f32 %v514, %v2140
      %v2145 = vmul.f32 %v519, %v2141
      %v2146 = vsel %vm2142, %v2140, %v2144
      %v2147 = vsel %vm2143, %v2141, %v2145
      %v2148 = vmax.f32 %v2045, %v2146
      %v2149 = vmax.f32 %v2046, %v2147
      %v2151 = vsel %vm841, %v2148, 0
      %v2154 = vsel %vm841, %v2149, 0
      %2156 = vmatpush.msra.mxu0 0.0
      %2157 = vmatpush.msra.mxu0 0.0
      %2158 = vmatpush.msra.mxu0 0.0
      %2159 = vmatpush.msra.mxu0 0.0
      %2160 = vmatpush.msra.mxu0 0.0
      %2161 = vmatpush.msra.mxu0 0.0
      %2162 = vmatpush.msra.mxu0 0.0
      %2163 = vmatpush.msra.mxu0 0.0
      %2164 = vmatpush.msra.mxu0 0.0
      %2165 = vmatpush.msra.mxu0 0.0
      %2166 = vmatpush.msra.mxu0 0.0
      %2167 = vmatpush.msra.mxu0 0.0
      %2168 = vmatpush.msra.mxu0 0.0
      %2169 = vmatpush.msra.mxu0 0.0
      %2170 = vmatpush.msra.mxu0 %v850
      %2171 = vmatpush.msra.mxu0 %v493
      %2172 = vmatmul.f32.gmra.mxu0 %v2151
      %v2173 = vpop.f32.mrf.mxu0
      %v2174 = vadd.f32 0.0, %v2173
      %2175 = vmatmul.f32.gmra.mxu0 %v2154
      %v2176 = vpop.f32.mrf.mxu0
      %v2177 = vadd.f32 0.0, %v2176
      %2178 = vdwg.mxu0
      %2179 = vmatpush.msra.mxu0 0.0
      %2180 = vmatpush.msra.mxu0 0.0
      %2181 = vmatpush.msra.mxu0 0.0
      %2182 = vmatpush.msra.mxu0 0.0
      %2183 = vmatpush.msra.mxu0 0.0
      %2184 = vmatpush.msra.mxu0 0.0
      %2185 = vmatpush.msra.mxu0 0.0
      %2186 = vmatpush.msra.mxu0 0.0
      %2187 = vmatpush.msra.mxu0 0.0
      %2188 = vmatpush.msra.mxu0 0.0
      %2189 = vmatpush.msra.mxu0 0.0
      %2190 = vmatpush.msra.mxu0 0.0
      %2191 = vmatpush.msra.mxu0 0.0
      %2192 = vmatpush.msra.mxu0 0.0
      %2193 = vmatpush.msra.mxu0 %v876
      %2194 = vmatpush.msra.mxu0 %v495
      %2195 = vmatmul.f32.gmra.mxu0 %v2151
      %v2196 = vpop.f32.mrf.mxu0
      %v2197 = vadd.f32 0.0, %v2196
      %2198 = vmatmul.f32.gmra.mxu0 %v2154
      %v2199 = vpop.f32.mrf.mxu0
      %v2200 = vadd.f32 0.0, %v2199
      %2201 = vdwg.mxu0
      %v2202 = vmax.f32 %v2174, %v2197
      %v2203 = vmax.f32 %v2177, %v2200
      %2204 = vst.msk [vmem:[#allocation2 + $0x50] sm:$0xff] %vm602, %v2202
      %2205 = vst.msk [vmem:[#allocation2 + $0x58] sm:$0x3] %vm904, %v2203
      %v2206 = vld [vmem:[%s462 + $0x24] sm:$0xff]
      %v2207 = vld [vmem:[%s462 + $0x2c] sm:$0x1]
      %v2209 = vsel %vm626, %v2207, 0
      %2211 = vmatpush.msra.mxu0 0.0
      %2212 = vmatpush.msra.mxu0 0.0
      %2213 = vmatpush.msra.mxu0 0.0
      %2214 = vmatpush.msra.mxu0 0.0
      %2215 = vmatpush.msra.mxu0 0.0
      %2216 = vmatpush.msra.mxu0 0.0
      %2217 = vmatpush.msra.mxu0 0.0
      %2218 = vmatpush.msra.mxu0 0.0
      %2219 = vmatpush.msra.mxu0 0.0
      %2220 = vmatpush.msra.mxu0 0.0
      %2221 = vmatpush.msra.mxu0 0.0
      %2222 = vmatpush.msra.mxu0 0.0
      %2223 = vmatpush.msra.mxu0 0.0
      %2224 = vmatpush.msra.mxu0 0.0
      %2225 = vmatpush.msra.mxu0 %v2209
      %2226 = vmatpush.msra.mxu0 %v2206
      %2227 = vmatmul.f32.gmra.mxu0 %v621
      %v2228 = vpop.f32.mrf.mxu0
      %v2229 = vadd.f32 0.0, %v2228
      %2230 = vmatmul.f32.gmra.mxu0 %v624
      %v2231 = vpop.f32.mrf.mxu0
      %v2232 = vadd.f32 0.0, %v2231
      %2233 = vdwg.mxu0
      %v2234 = vadd.f32 %v502, %v2229
      %v2235 = vadd.f32 %v507, %v2232
      %2237 = vrot.lane.b32.xlu0 %v2206, 127
      %v2238 = vpop.permute.xlu0 %2237
      %2239 = vrot.lane.b32.xlu0 %v2207, 127
      %v2240 = vpop.permute.xlu0 %2239
      %v2242 = vsel %vm626, %v2240, 0
      %2244 = vmatpush.msra.mxu0 0.0
      %2245 = vmatpush.msra.mxu0 0.0
      %2246 = vmatpush.msra.mxu0 0.0
      %2247 = vmatpush.msra.mxu0 0.0
      %2248 = vmatpush.msra.mxu0 0.0
      %2249 = vmatpush.msra.mxu0 0.0
      %2250 = vmatpush.msra.mxu0 0.0
      %2251 = vmatpush.msra.mxu0 0.0
      %2252 = vmatpush.msra.mxu0 0.0
      %2253 = vmatpush.msra.mxu0 0.0
      %2254 = vmatpush.msra.mxu0 0.0
      %2255 = vmatpush.msra.mxu0 0.0
      %2256 = vmatpush.msra.mxu0 0.0
      %2257 = vmatpush.msra.mxu0 0.0
      %2258 = vmatpush.msra.mxu0 %v2242
      %2259 = vmatpush.msra.mxu0 %v2238
      %2260 = vmatmul.f32.gmra.mxu0 %v662
      %v2261 = vpop.f32.mrf.mxu0
      %v2262 = vadd.f32 0.0, %v2261
      %2263 = vmatmul.f32.gmra.mxu0 %v665
      %v2264 = vpop.f32.mrf.mxu0
      %v2265 = vadd.f32 0.0, %v2264
      %2266 = vdwg.mxu0
      %v2267 = vadd.f32 %v2234, %v2262
      %v2268 = vadd.f32 %v2235, %v2265
      %2269 = vrot.lane.b32.xlu0 %v2206, 126
      %v2270 = vpop.permute.xlu0 %2269
      %2271 = vrot.lane.b32.xlu0 %v2207, 126
      %v2272 = vpop.permute.xlu0 %2271
      %v2274 = vsel %vm626, %v2272, 0
      %2276 = vmatpush.msra.mxu0 0.0
      %2277 = vmatpush.msra.mxu0 0.0
      %2278 = vmatpush.msra.mxu0 0.0
      %2279 = vmatpush.msra.mxu0 0.0
      %2280 = vmatpush.msra.mxu0 0.0
      %2281 = vmatpush.msra.mxu0 0.0
      %2282 = vmatpush.msra.mxu0 0.0
      %2283 = vmatpush.msra.mxu0 0.0
      %2284 = vmatpush.msra.mxu0 0.0
      %2285 = vmatpush.msra.mxu0 0.0
      %2286 = vmatpush.msra.mxu0 0.0
      %2287 = vmatpush.msra.mxu0 0.0
      %2288 = vmatpush.msra.mxu0 0.0
      %2289 = vmatpush.msra.mxu0 0.0
      %2290 = vmatpush.msra.mxu0 %v2274
      %2291 = vmatpush.msra.mxu0 %v2270
      %2292 = vmatmul.f32.gmra.mxu0 %v700
      %v2293 = vpop.f32.mrf.mxu0
      %v2294 = vadd.f32 0.0, %v2293
      %2295 = vmatmul.f32.gmra.mxu0 %v703
      %v2296 = vpop.f32.mrf.mxu0
      %v2297 = vadd.f32 0.0, %v2296
      %2298 = vdwg.mxu0
      %v2299 = vadd.f32 %v2267, %v2294
      %v2300 = vadd.f32 %v2268, %v2297
      %vm2301 = vcmp.gt.f32.partialorder %v2299, 0.0
      %vm2302 = vcmp.gt.f32.partialorder %v2300, 0.0
      %v2303 = vmul.f32 %v514, %v2299
      %v2304 = vmul.f32 %v519, %v2300
      %v2305 = vsel %vm2301, %v2299, %v2303
      %v2306 = vsel %vm2302, %v2300, %v2304
      %v2307 = vld [vmem:[%s462 + $0x27] sm:$0xff]
      %v2308 = vld [vmem:[%s462 + $0x2f] sm:$0x1]
      %v2310 = vsel %vm626, %v2308, 0
      %2312 = vmatpush.msra.mxu0 0.0
      %2313 = vmatpush.msra.mxu0 0.0
      %2314 = vmatpush.msra.mxu0 0.0
      %2315 = vmatpush.msra.mxu0 0.0
      %2316 = vmatpush.msra.mxu0 0.0
      %2317 = vmatpush.msra.mxu0 0.0
      %2318 = vmatpush.msra.mxu0 0.0
      %2319 = vmatpush.msra.mxu0 0.0
      %2320 = vmatpush.msra.mxu0 0.0
      %2321 = vmatpush.msra.mxu0 0.0
      %2322 = vmatpush.msra.mxu0 0.0
      %2323 = vmatpush.msra.mxu0 0.0
      %2324 = vmatpush.msra.mxu0 0.0
      %2325 = vmatpush.msra.mxu0 0.0
      %2326 = vmatpush.msra.mxu0 %v2310
      %2327 = vmatpush.msra.mxu0 %v2307
      %2328 = vmatmul.f32.gmra.mxu0 %v621
      %v2329 = vpop.f32.mrf.mxu0
      %v2330 = vadd.f32 0.0, %v2329
      %2331 = vmatmul.f32.gmra.mxu0 %v624
      %v2332 = vpop.f32.mrf.mxu0
      %v2333 = vadd.f32 0.0, %v2332
      %2334 = vdwg.mxu0
      %v2335 = vadd.f32 %v502, %v2330
      %v2336 = vadd.f32 %v507, %v2333
      %2338 = vrot.lane.b32.xlu0 %v2307, 127
      %v2339 = vpop.permute.xlu0 %2338
      %2340 = vrot.lane.b32.xlu0 %v2308, 127
      %v2341 = vpop.permute.xlu0 %2340
      %v2343 = vsel %vm626, %v2341, 0
      %2345 = vmatpush.msra.mxu0 0.0
      %2346 = vmatpush.msra.mxu0 0.0
      %2347 = vmatpush.msra.mxu0 0.0
      %2348 = vmatpush.msra.mxu0 0.0
      %2349 = vmatpush.msra.mxu0 0.0
      %2350 = vmatpush.msra.mxu0 0.0
      %2351 = vmatpush.msra.mxu0 0.0
      %2352 = vmatpush.msra.mxu0 0.0
      %2353 = vmatpush.msra.mxu0 0.0
      %2354 = vmatpush.msra.mxu0 0.0
      %2355 = vmatpush.msra.mxu0 0.0
      %2356 = vmatpush.msra.mxu0 0.0
      %2357 = vmatpush.msra.mxu0 0.0
      %2358 = vmatpush.msra.mxu0 0.0
      %2359 = vmatpush.msra.mxu0 %v2343
      %2360 = vmatpush.msra.mxu0 %v2339
      %2361 = vmatmul.f32.gmra.mxu0 %v662
      %v2362 = vpop.f32.mrf.mxu0
      %v2363 = vadd.f32 0.0, %v2362
      %2364 = vmatmul.f32.gmra.mxu0 %v665
      %v2365 = vpop.f32.mrf.mxu0
      %v2366 = vadd.f32 0.0, %v2365
      %2367 = vdwg.mxu0
      %v2368 = vadd.f32 %v2335, %v2363
      %v2369 = vadd.f32 %v2336, %v2366
      %2370 = vrot.lane.b32.xlu0 %v2307, 126
      %v2371 = vpop.permute.xlu0 %2370
      %2372 = vrot.lane.b32.xlu0 %v2308, 126
      %v2373 = vpop.permute.xlu0 %2372
      %v2375 = vsel %vm626, %v2373, 0
      %2377 = vmatpush.msra.mxu0 0.0
      %2378 = vmatpush.msra.mxu0 0.0
      %2379 = vmatpush.msra.mxu0 0.0
      %2380 = vmatpush.msra.mxu0 0.0
      %2381 = vmatpush.msra.mxu0 0.0
      %2382 = vmatpush.msra.mxu0 0.0
      %2383 = vmatpush.msra.mxu0 0.0
      %2384 = vmatpush.msra.mxu0 0.0
      %2385 = vmatpush.msra.mxu0 0.0
      %2386 = vmatpush.msra.mxu0 0.0
      %2387 = vmatpush.msra.mxu0 0.0
      %2388 = vmatpush.msra.mxu0 0.0
      %2389 = vmatpush.msra.mxu0 0.0
      %2390 = vmatpush.msra.mxu0 0.0
      %2391 = vmatpush.msra.mxu0 %v2375
      %2392 = vmatpush.msra.mxu0 %v2371
      %2393 = vmatmul.f32.gmra.mxu0 %v700
      %v2394 = vpop.f32.mrf.mxu0
      %v2395 = vadd.f32 0.0, %v2394
      %2396 = vmatmul.f32.gmra.mxu0 %v703
      %v2397 = vpop.f32.mrf.mxu0
      %v2398 = vadd.f32 0.0, %v2397
      %2399 = vdwg.mxu0
      %v2400 = vadd.f32 %v2368, %v2395
      %v2401 = vadd.f32 %v2369, %v2398
      %vm2402 = vcmp.gt.f32.partialorder %v2400, 0.0
      %vm2403 = vcmp.gt.f32.partialorder %v2401, 0.0
      %v2404 = vmul.f32 %v514, %v2400
      %v2405 = vmul.f32 %v519, %v2401
      %v2406 = vsel %vm2402, %v2400, %v2404
      %v2407 = vsel %vm2403, %v2401, %v2405
      %v2408 = vmax.f32 %v2305, %v2406
      %v2409 = vmax.f32 %v2306, %v2407
      %v2411 = vsel %vm841, %v2408, 0
      %v2414 = vsel %vm841, %v2409, 0
      %2416 = vmatpush.msra.mxu0 0.0
      %2417 = vmatpush.msra.mxu0 0.0
      %2418 = vmatpush.msra.mxu0 0.0
      %2419 = vmatpush.msra.mxu0 0.0
      %2420 = vmatpush.msra.mxu0 0.0
      %2421 = vmatpush.msra.mxu0 0.0
      %2422 = vmatpush.msra.mxu0 0.0
      %2423 = vmatpush.msra.mxu0 0.0
      %2424 = vmatpush.msra.mxu0 0.0
      %2425 = vmatpush.msra.mxu0 0.0
      %2426 = vmatpush.msra.mxu0 0.0
      %2427 = vmatpush.msra.mxu0 0.0
      %2428 = vmatpush.msra.mxu0 0.0
      %2429 = vmatpush.msra.mxu0 0.0
      %2430 = vmatpush.msra.mxu0 %v850
      %2431 = vmatpush.msra.mxu0 %v493
      %2432 = vmatmul.f32.gmra.mxu0 %v2411
      %v2433 = vpop.f32.mrf.mxu0
      %v2434 = vadd.f32 0.0, %v2433
      %2435 = vmatmul.f32.gmra.mxu0 %v2414
      %v2436 = vpop.f32.mrf.mxu0
      %v2437 = vadd.f32 0.0, %v2436
      %2438 = vdwg.mxu0
      %2439 = vmatpush.msra.mxu0 0.0
      %2440 = vmatpush.msra.mxu0 0.0
      %2441 = vmatpush.msra.mxu0 0.0
      %2442 = vmatpush.msra.mxu0 0.0
      %2443 = vmatpush.msra.mxu0 0.0
      %2444 = vmatpush.msra.mxu0 0.0
      %2445 = vmatpush.msra.mxu0 0.0
      %2446 = vmatpush.msra.mxu0 0.0
      %2447 = vmatpush.msra.mxu0 0.0
      %2448 = vmatpush.msra.mxu0 0.0
      %2449 = vmatpush.msra.mxu0 0.0
      %2450 = vmatpush.msra.mxu0 0.0
      %2451 = vmatpush.msra.mxu0 0.0
      %2452 = vmatpush.msra.mxu0 0.0
      %2453 = vmatpush.msra.mxu0 %v876
      %2454 = vmatpush.msra.mxu0 %v495
      %2455 = vmatmul.f32.gmra.mxu0 %v2411
      %v2456 = vpop.f32.mrf.mxu0
      %v2457 = vadd.f32 0.0, %v2456
      %2458 = vmatmul.f32.gmra.mxu0 %v2414
      %v2459 = vpop.f32.mrf.mxu0
      %v2460 = vadd.f32 0.0, %v2459
      %2461 = vdwg.mxu0
      %v2462 = vmax.f32 %v2434, %v2457
      %v2463 = vmax.f32 %v2437, %v2460
      %2464 = vst.msk [vmem:[#allocation2 + $0x60] sm:$0xff] %vm602, %v2462
      %2465 = vst.msk [vmem:[#allocation2 + $0x68] sm:$0x3] %vm904, %v2463
      %v2466 = vld [vmem:[#allocation2] sm:$0xff]
      %v2467 = vld [vmem:[#allocation2 + $0x8] sm:$0xff]
      %v2468 = vld [vmem:[#allocation2 + $0x10] sm:$0xff]
      %v2469 = vld [vmem:[#allocation2 + $0x18] sm:$0xff]
      %v2470 = vld [vmem:[#allocation2 + $0x20] sm:$0xff]
      %v2471 = vld [vmem:[#allocation2 + $0x28] sm:$0xff]
      %vm2472 = vcmask 392192
      %v2474 = vsel %vm2472, %v474, 0
      %v2477 = vsel %vm2472, %v475, 0
      %2479 = vmatpush.msra.mxu0 0.0
      %2480 = vmatpush.msra.mxu0 0.0
      %2481 = vmatpush.msra.mxu0 0.0
      %2482 = vmatpush.msra.mxu0 0.0
      %2483 = vmatpush.msra.mxu0 0.0
      %2484 = vmatpush.msra.mxu0 0.0
      %2485 = vmatpush.msra.mxu0 0.0
      %2486 = vmatpush.msra.mxu0 0.0
      %2487 = vmatpush.msra.mxu0 0.0
      %2488 = vmatpush.msra.mxu0 0.0
      %2489 = vmatpush.msra.mxu0 %v2471
      %2490 = vmatpush.msra.mxu0 %v2470
      %2491 = vmatpush.msra.mxu0 %v2469
      %2492 = vmatpush.msra.mxu0 %v2468
      %2493 = vmatpush.msra.mxu0 %v2467
      %2494 = vmatpush.msra.mxu0 %v2466
      %2495 = vmatmul.f32.gmra.mxu0 %v2474
      %v2496 = vpop.f32.mrf.mxu0
      %v2497 = vadd.f32 0.0, %v2496
      %2498 = vmatmul.f32.gmra.mxu0 %v2477
      %v2499 = vpop.f32.mrf.mxu0
      %v2500 = vadd.f32 0.0, %v2499
      %2501 = vdwg.mxu0
      %v2502 = vadd.f32 %v526, %v2497
      %v2503 = vadd.f32 %v531, %v2500
      %2510 = vrot.lane.b32.xlu0 %v2466, 127
      %v2511 = vpop.permute.xlu0 %2510
      %2512 = vrot.lane.b32.xlu0 %v2467, 127
      %v2513 = vpop.permute.xlu0 %2512
      %2514 = vrot.lane.b32.xlu0 %v2468, 127
      %v2515 = vpop.permute.xlu0 %2514
      %2516 = vrot.lane.b32.xlu0 %v2469, 127
      %v2517 = vpop.permute.xlu0 %2516
      %2518 = vrot.lane.b32.xlu0 %v2470, 127
      %v2519 = vpop.permute.xlu0 %2518
      %2520 = vrot.lane.b32.xlu0 %v2471, 127
      %v2521 = vpop.permute.xlu0 %2520
      %v2529 = vsel %vm2472, %v476, 0
      %v2532 = vsel %vm2472, %v477, 0
      %2534 = vmatpush.msra.mxu0 0.0
      %2535 = vmatpush.msra.mxu0 0.0
      %2536 = vmatpush.msra.mxu0 0.0
      %2537 = vmatpush.msra.mxu0 0.0
      %2538 = vmatpush.msra.mxu0 0.0
      %2539 = vmatpush.msra.mxu0 0.0
      %2540 = vmatpush.msra.mxu0 0.0
      %2541 = vmatpush.msra.mxu0 0.0
      %2542 = vmatpush.msra.mxu0 0.0
      %2543 = vmatpush.msra.mxu0 0.0
      %2544 = vmatpush.msra.mxu0 %v2521
      %2545 = vmatpush.msra.mxu0 %v2519
      %2546 = vmatpush.msra.mxu0 %v2517
      %2547 = vmatpush.msra.mxu0 %v2515
      %2548 = vmatpush.msra.mxu0 %v2513
      %2549 = vmatpush.msra.mxu0 %v2511
      %2550 = vmatmul.f32.gmra.mxu0 %v2529
      %v2551 = vpop.f32.mrf.mxu0
      %v2552 = vadd.f32 0.0, %v2551
      %2553 = vmatmul.f32.gmra.mxu0 %v2532
      %v2554 = vpop.f32.mrf.mxu0
      %v2555 = vadd.f32 0.0, %v2554
      %2556 = vdwg.mxu0
      %v2557 = vadd.f32 %v2502, %v2552
      %v2558 = vadd.f32 %v2503, %v2555
      %2559 = vrot.lane.b32.xlu0 %v2466, 126
      %v2560 = vpop.permute.xlu0 %2559
      %2561 = vrot.lane.b32.xlu0 %v2467, 126
      %v2562 = vpop.permute.xlu0 %2561
      %2563 = vrot.lane.b32.xlu0 %v2468, 126
      %v2564 = vpop.permute.xlu0 %2563
      %2565 = vrot.lane.b32.xlu0 %v2469, 126
      %v2566 = vpop.permute.xlu0 %2565
      %2567 = vrot.lane.b32.xlu0 %v2470, 126
      %v2568 = vpop.permute.xlu0 %2567
      %2569 = vrot.lane.b32.xlu0 %v2471, 126
      %v2570 = vpop.permute.xlu0 %2569
      %v2578 = vsel %vm2472, %v478, 0
      %v2581 = vsel %vm2472, %v479, 0
      %2583 = vmatpush.msra.mxu0 0.0
      %2584 = vmatpush.msra.mxu0 0.0
      %2585 = vmatpush.msra.mxu0 0.0
      %2586 = vmatpush.msra.mxu0 0.0
      %2587 = vmatpush.msra.mxu0 0.0
      %2588 = vmatpush.msra.mxu0 0.0
      %2589 = vmatpush.msra.mxu0 0.0
      %2590 = vmatpush.msra.mxu0 0.0
      %2591 = vmatpush.msra.mxu0 0.0
      %2592 = vmatpush.msra.mxu0 0.0
      %2593 = vmatpush.msra.mxu0 %v2570
      %2594 = vmatpush.msra.mxu0 %v2568
      %2595 = vmatpush.msra.mxu0 %v2566
      %2596 = vmatpush.msra.mxu0 %v2564
      %2597 = vmatpush.msra.mxu0 %v2562
      %2598 = vmatpush.msra.mxu0 %v2560
      %2599 = vmatmul.f32.gmra.mxu0 %v2578
      %v2600 = vpop.f32.mrf.mxu0
      %v2601 = vadd.f32 0.0, %v2600
      %2602 = vmatmul.f32.gmra.mxu0 %v2581
      %v2603 = vpop.f32.mrf.mxu0
      %v2604 = vadd.f32 0.0, %v2603
      %2605 = vdwg.mxu0
      %v2606 = vadd.f32 %v2557, %v2601
      %v2607 = vadd.f32 %v2558, %v2604
      %vm2608 = vcmp.gt.f32.partialorder %v2606, 0.0
      %vm2609 = vcmp.gt.f32.partialorder %v2607, 0.0
      %v2610 = vmul.f32 %v538, %v2606
      %v2611 = vmul.f32 %v543, %v2607
      %v2612 = vsel %vm2608, %v2606, %v2610
      %v2613 = vsel %vm2609, %v2607, %v2611
      %vm2614 = vcmask 39936
      %2615 = vst.msk [vmem:[#allocation3] sm:$0xff] %vm2614, %v2612
      %2616 = vst.msk [vmem:[#allocation3 + $0x8] sm:$0xff] %vm2614, %v2613
      %v2617 = vld [vmem:[#allocation2 + $0x10] sm:$0xff]
      %v2618 = vld [vmem:[#allocation2 + $0x18] sm:$0xff]
      %v2619 = vld [vmem:[#allocation2 + $0x20] sm:$0xff]
      %v2620 = vld [vmem:[#allocation2 + $0x28] sm:$0xff]
      %v2621 = vld [vmem:[#allocation2 + $0x30] sm:$0xff]
      %v2622 = vld [vmem:[#allocation2 + $0x38] sm:$0xff]
      %2623 = vmatpush.msra.mxu0 0.0
      %2624 = vmatpush.msra.mxu0 0.0
      %2625 = vmatpush.msra.mxu0 0.0
      %2626 = vmatpush.msra.mxu0 0.0
      %2627 = vmatpush.msra.mxu0 0.0
      %2628 = vmatpush.msra.mxu0 0.0
      %2629 = vmatpush.msra.mxu0 0.0
      %2630 = vmatpush.msra.mxu0 0.0
      %2631 = vmatpush.msra.mxu0 0.0
      %2632 = vmatpush.msra.mxu0 0.0
      %2633 = vmatpush.msra.mxu0 %v2622
      %2634 = vmatpush.msra.mxu0 %v2621
      %2635 = vmatpush.msra.mxu0 %v2620
      %2636 = vmatpush.msra.mxu0 %v2619
      %2637 = vmatpush.msra.mxu0 %v2618
      %2638 = vmatpush.msra.mxu0 %v2617
      %2639 = vmatmul.f32.gmra.mxu0 %v2474
      %v2640 = vpop.f32.mrf.mxu0
      %v2641 = vadd.f32 0.0, %v2640
      %2642 = vmatmul.f32.gmra.mxu0 %v2477
      %v2643 = vpop.f32.mrf.mxu0
      %v2644 = vadd.f32 0.0, %v2643
      %2645 = vdwg.mxu0
      %v2646 = vadd.f32 %v526, %v2641
      %v2647 = vadd.f32 %v531, %v2644
      %2654 = vrot.lane.b32.xlu0 %v2617, 127
      %v2655 = vpop.permute.xlu0 %2654
      %2656 = vrot.lane.b32.xlu0 %v2618, 127
      %v2657 = vpop.permute.xlu0 %2656
      %2658 = vrot.lane.b32.xlu0 %v2619, 127
      %v2659 = vpop.permute.xlu0 %2658
      %2660 = vrot.lane.b32.xlu0 %v2620, 127
      %v2661 = vpop.permute.xlu0 %2660
      %2662 = vrot.lane.b32.xlu0 %v2621, 127
      %v2663 = vpop.permute.xlu0 %2662
      %2664 = vrot.lane.b32.xlu0 %v2622, 127
      %v2665 = vpop.permute.xlu0 %2664
      %2672 = vmatpush.msra.mxu0 0.0
      %2673 = vmatpush.msra.mxu0 0.0
      %2674 = vmatpush.msra.mxu0 0.0
      %2675 = vmatpush.msra.mxu0 0.0
      %2676 = vmatpush.msra.mxu0 0.0
      %2677 = vmatpush.msra.mxu0 0.0
      %2678 = vmatpush.msra.mxu0 0.0
      %2679 = vmatpush.msra.mxu0 0.0
      %2680 = vmatpush.msra.mxu0 0.0
      %2681 = vmatpush.msra.mxu0 0.0
      %2682 = vmatpush.msra.mxu0 %v2665
      %2683 = vmatpush.msra.mxu0 %v2663
      %2684 = vmatpush.msra.mxu0 %v2661
      %2685 = vmatpush.msra.mxu0 %v2659
      %2686 = vmatpush.msra.mxu0 %v2657
      %2687 = vmatpush.msra.mxu0 %v2655
      %2688 = vmatmul.f32.gmra.mxu0 %v2529
      %v2689 = vpop.f32.mrf.mxu0
      %v2690 = vadd.f32 0.0, %v2689
      %2691 = vmatmul.f32.gmra.mxu0 %v2532
      %v2692 = vpop.f32.mrf.mxu0
      %v2693 = vadd.f32 0.0, %v2692
      %2694 = vdwg.mxu0
      %v2695 = vadd.f32 %v2646, %v2690
      %v2696 = vadd.f32 %v2647, %v2693
      %2697 = vrot.lane.b32.xlu0 %v2617, 126
      %v2698 = vpop.permute.xlu0 %2697
      %2699 = vrot.lane.b32.xlu0 %v2618, 126
      %v2700 = vpop.permute.xlu0 %2699
      %2701 = vrot.lane.b32.xlu0 %v2619, 126
      %v2702 = vpop.permute.xlu0 %2701
      %2703 = vrot.lane.b32.xlu0 %v2620, 126
      %v2704 = vpop.permute.xlu0 %2703
      %2705 = vrot.lane.b32.xlu0 %v2621, 126
      %v2706 = vpop.permute.xlu0 %2705
      %2707 = vrot.lane.b32.xlu0 %v2622, 126
      %v2708 = vpop.permute.xlu0 %2707
      %2715 = vmatpush.msra.mxu0 0.0
      %2716 = vmatpush.msra.mxu0 0.0
      %2717 = vmatpush.msra.mxu0 0.0
      %2718 = vmatpush.msra.mxu0 0.0
      %2719 = vmatpush.msra.mxu0 0.0
      %2720 = vmatpush.msra.mxu0 0.0
      %2721 = vmatpush.msra.mxu0 0.0
      %2722 = vmatpush.msra.mxu0 0.0
      %2723 = vmatpush.msra.mxu0 0.0
      %2724 = vmatpush.msra.mxu0 0.0
      %2725 = vmatpush.msra.mxu0 %v2708
      %2726 = vmatpush.msra.mxu0 %v2706
      %2727 = vmatpush.msra.mxu0 %v2704
      %2728 = vmatpush.msra.mxu0 %v2702
      %2729 = vmatpush.msra.mxu0 %v2700
      %2730 = vmatpush.msra.mxu0 %v2698
      %2731 = vmatmul.f32.gmra.mxu0 %v2578
      %v2732 = vpop.f32.mrf.mxu0
      %v2733 = vadd.f32 0.0, %v2732
      %2734 = vmatmul.f32.gmra.mxu0 %v2581
      %v2735 = vpop.f32.mrf.mxu0
      %v2736 = vadd.f32 0.0, %v2735
      %2737 = vdwg.mxu0
      %v2738 = vadd.f32 %v2695, %v2733
      %v2739 = vadd.f32 %v2696, %v2736
      %vm2740 = vcmp.gt.f32.partialorder %v2738, 0.0
      %vm2741 = vcmp.gt.f32.partialorder %v2739, 0.0
      %v2742 = vmul.f32 %v538, %v2738
      %v2743 = vmul.f32 %v543, %v2739
      %v2744 = vsel %vm2740, %v2738, %v2742
      %v2745 = vsel %vm2741, %v2739, %v2743
      %2746 = vst.msk [vmem:[#allocation3 + $0x10] sm:$0xff] %vm2614, %v2744
      %2747 = vst.msk [vmem:[#allocation3 + $0x18] sm:$0xff] %vm2614, %v2745
      %v2748 = vld [vmem:[#allocation2 + $0x20] sm:$0xff]
      %v2749 = vld [vmem:[#allocation2 + $0x28] sm:$0xff]
      %v2750 = vld [vmem:[#allocation2 + $0x30] sm:$0xff]
      %v2751 = vld [vmem:[#allocation2 + $0x38] sm:$0xff]
      %v2752 = vld [vmem:[#allocation2 + $0x40] sm:$0xff]
      %v2753 = vld [vmem:[#allocation2 + $0x48] sm:$0xff]
      %2754 = vmatpush.msra.mxu0 0.0
      %2755 = vmatpush.msra.mxu0 0.0
      %2756 = vmatpush.msra.mxu0 0.0
      %2757 = vmatpush.msra.mxu0 0.0
      %2758 = vmatpush.msra.mxu0 0.0
      %2759 = vmatpush.msra.mxu0 0.0
      %2760 = vmatpush.msra.mxu0 0.0
      %2761 = vmatpush.msra.mxu0 0.0
      %2762 = vmatpush.msra.mxu0 0.0
      %2763 = vmatpush.msra.mxu0 0.0
      %2764 = vmatpush.msra.mxu0 %v2753
      %2765 = vmatpush.msra.mxu0 %v2752
      %2766 = vmatpush.msra.mxu0 %v2751
      %2767 = vmatpush.msra.mxu0 %v2750
      %2768 = vmatpush.msra.mxu0 %v2749
      %2769 = vmatpush.msra.mxu0 %v2748
      %2770 = vmatmul.f32.gmra.mxu0 %v2474
      %v2771 = vpop.f32.mrf.mxu0
      %v2772 = vadd.f32 0.0, %v2771
      %2773 = vmatmul.f32.gmra.mxu0 %v2477
      %v2774 = vpop.f32.mrf.mxu0
      %v2775 = vadd.f32 0.0, %v2774
      %2776 = vdwg.mxu0
      %v2777 = vadd.f32 %v526, %v2772
      %v2778 = vadd.f32 %v531, %v2775
      %2785 = vrot.lane.b32.xlu0 %v2748, 127
      %v2786 = vpop.permute.xlu0 %2785
      %2787 = vrot.lane.b32.xlu0 %v2749, 127
      %v2788 = vpop.permute.xlu0 %2787
      %2789 = vrot.lane.b32.xlu0 %v2750, 127
      %v2790 = vpop.permute.xlu0 %2789
      %2791 = vrot.lane.b32.xlu0 %v2751, 127
      %v2792 = vpop.permute.xlu0 %2791
      %2793 = vrot.lane.b32.xlu0 %v2752, 127
      %v2794 = vpop.permute.xlu0 %2793
      %2795 = vrot.lane.b32.xlu0 %v2753, 127
      %v2796 = vpop.permute.xlu0 %2795
      %2803 = vmatpush.msra.mxu0 0.0
      %2804 = vmatpush.msra.mxu0 0.0
      %2805 = vmatpush.msra.mxu0 0.0
      %2806 = vmatpush.msra.mxu0 0.0
      %2807 = vmatpush.msra.mxu0 0.0
      %2808 = vmatpush.msra.mxu0 0.0
      %2809 = vmatpush.msra.mxu0 0.0
      %2810 = vmatpush.msra.mxu0 0.0
      %2811 = vmatpush.msra.mxu0 0.0
      %2812 = vmatpush.msra.mxu0 0.0
      %2813 = vmatpush.msra.mxu0 %v2796
      %2814 = vmatpush.msra.mxu0 %v2794
      %2815 = vmatpush.msra.mxu0 %v2792
      %2816 = vmatpush.msra.mxu0 %v2790
      %2817 = vmatpush.msra.mxu0 %v2788
      %2818 = vmatpush.msra.mxu0 %v2786
      %2819 = vmatmul.f32.gmra.mxu0 %v2529
      %v2820 = vpop.f32.mrf.mxu0
      %v2821 = vadd.f32 0.0, %v2820
      %2822 = vmatmul.f32.gmra.mxu0 %v2532
      %v2823 = vpop.f32.mrf.mxu0
      %v2824 = vadd.f32 0.0, %v2823
      %2825 = vdwg.mxu0
      %v2826 = vadd.f32 %v2777, %v2821
      %v2827 = vadd.f32 %v2778, %v2824
      %2828 = vrot.lane.b32.xlu0 %v2748, 126
      %v2829 = vpop.permute.xlu0 %2828
      %2830 = vrot.lane.b32.xlu0 %v2749, 126
      %v2831 = vpop.permute.xlu0 %2830
      %2832 = vrot.lane.b32.xlu0 %v2750, 126
      %v2833 = vpop.permute.xlu0 %2832
      %2834 = vrot.lane.b32.xlu0 %v2751, 126
      %v2835 = vpop.permute.xlu0 %2834
      %2836 = vrot.lane.b32.xlu0 %v2752, 126
      %v2837 = vpop.permute.xlu0 %2836
      %2838 = vrot.lane.b32.xlu0 %v2753, 126
      %v2839 = vpop.permute.xlu0 %2838
      %2846 = vmatpush.msra.mxu0 0.0
      %2847 = vmatpush.msra.mxu0 0.0
      %2848 = vmatpush.msra.mxu0 0.0
      %2849 = vmatpush.msra.mxu0 0.0
      %2850 = vmatpush.msra.mxu0 0.0
      %2851 = vmatpush.msra.mxu0 0.0
      %2852 = vmatpush.msra.mxu0 0.0
      %2853 = vmatpush.msra.mxu0 0.0
      %2854 = vmatpush.msra.mxu0 0.0
      %2855 = vmatpush.msra.mxu0 0.0
      %2856 = vmatpush.msra.mxu0 %v2839
      %2857 = vmatpush.msra.mxu0 %v2837
      %2858 = vmatpush.msra.mxu0 %v2835
      %2859 = vmatpush.msra.mxu0 %v2833
      %2860 = vmatpush.msra.mxu0 %v2831
      %2861 = vmatpush.msra.mxu0 %v2829
      %2862 = vmatmul.f32.gmra.mxu0 %v2578
      %v2863 = vpop.f32.mrf.mxu0
      %v2864 = vadd.f32 0.0, %v2863
      %2865 = vmatmul.f32.gmra.mxu0 %v2581
      %v2866 = vpop.f32.mrf.mxu0
      %v2867 = vadd.f32 0.0, %v2866
      %2868 = vdwg.mxu0
      %v2869 = vadd.f32 %v2826, %v2864
      %v2870 = vadd.f32 %v2827, %v2867
      %vm2871 = vcmp.gt.f32.partialorder %v2869, 0.0
      %vm2872 = vcmp.gt.f32.partialorder %v2870, 0.0
      %v2873 = vmul.f32 %v538, %v2869
      %v2874 = vmul.f32 %v543, %v2870
      %v2875 = vsel %vm2871, %v2869, %v2873
      %v2876 = vsel %vm2872, %v2870, %v2874
      %2877 = vst.msk [vmem:[#allocation3 + $0x20] sm:$0xff] %vm2614, %v2875
      %2878 = vst.msk [vmem:[#allocation3 + $0x28] sm:$0xff] %vm2614, %v2876
      %v2879 = vld [vmem:[#allocation2 + $0x30] sm:$0xff]
      %v2880 = vld [vmem:[#allocation2 + $0x38] sm:$0xff]
      %v2881 = vld [vmem:[#allocation2 + $0x40] sm:$0xff]
      %v2882 = vld [vmem:[#allocation2 + $0x48] sm:$0xff]
      %v2883 = vld [vmem:[#allocation2 + $0x50] sm:$0xff]
      %v2884 = vld [vmem:[#allocation2 + $0x58] sm:$0xff]
      %2885 = vmatpush.msra.mxu0 0.0
      %2886 = vmatpush.msra.mxu0 0.0
      %2887 = vmatpush.msra.mxu0 0.0
      %2888 = vmatpush.msra.mxu0 0.0
      %2889 = vmatpush.msra.mxu0 0.0
      %2890 = vmatpush.msra.mxu0 0.0
      %2891 = vmatpush.msra.mxu0 0.0
      %2892 = vmatpush.msra.mxu0 0.0
      %2893 = vmatpush.msra.mxu0 0.0
      %2894 = vmatpush.msra.mxu0 0.0
      %2895 = vmatpush.msra.mxu0 %v2884
      %2896 = vmatpush.msra.mxu0 %v2883
      %2897 = vmatpush.msra.mxu0 %v2882
      %2898 = vmatpush.msra.mxu0 %v2881
      %2899 = vmatpush.msra.mxu0 %v2880
      %2900 = vmatpush.msra.mxu0 %v2879
      %2901 = vmatmul.f32.gmra.mxu0 %v2474
      %v2902 = vpop.f32.mrf.mxu0
      %v2903 = vadd.f32 0.0, %v2902
      %2904 = vmatmul.f32.gmra.mxu0 %v2477
      %v2905 = vpop.f32.mrf.mxu0
      %v2906 = vadd.f32 0.0, %v2905
      %2907 = vdwg.mxu0
      %v2908 = vadd.f32 %v526, %v2903
      %v2909 = vadd.f32 %v531, %v2906
      %2916 = vrot.lane.b32.xlu0 %v2879, 127
      %v2917 = vpop.permute.xlu0 %2916
      %2918 = vrot.lane.b32.xlu0 %v2880, 127
      %v2919 = vpop.permute.xlu0 %2918
      %2920 = vrot.lane.b32.xlu0 %v2881, 127
      %v2921 = vpop.permute.xlu0 %2920
      %2922 = vrot.lane.b32.xlu0 %v2882, 127
      %v2923 = vpop.permute.xlu0 %2922
      %2924 = vrot.lane.b32.xlu0 %v2883, 127
      %v2925 = vpop.permute.xlu0 %2924
      %2926 = vrot.lane.b32.xlu0 %v2884, 127
      %v2927 = vpop.permute.xlu0 %2926
      %2934 = vmatpush.msra.mxu0 0.0
      %2935 = vmatpush.msra.mxu0 0.0
      %2936 = vmatpush.msra.mxu0 0.0
      %2937 = vmatpush.msra.mxu0 0.0
      %2938 = vmatpush.msra.mxu0 0.0
      %2939 = vmatpush.msra.mxu0 0.0
      %2940 = vmatpush.msra.mxu0 0.0
      %2941 = vmatpush.msra.mxu0 0.0
      %2942 = vmatpush.msra.mxu0 0.0
      %2943 = vmatpush.msra.mxu0 0.0
      %2944 = vmatpush.msra.mxu0 %v2927
      %2945 = vmatpush.msra.mxu0 %v2925
      %2946 = vmatpush.msra.mxu0 %v2923
      %2947 = vmatpush.msra.mxu0 %v2921
      %2948 = vmatpush.msra.mxu0 %v2919
      %2949 = vmatpush.msra.mxu0 %v2917
      %2950 = vmatmul.f32.gmra.mxu0 %v2529
      %v2951 = vpop.f32.mrf.mxu0
      %v2952 = vadd.f32 0.0, %v2951
      %2953 = vmatmul.f32.gmra.mxu0 %v2532
      %v2954 = vpop.f32.mrf.mxu0
      %v2955 = vadd.f32 0.0, %v2954
      %2956 = vdwg.mxu0
      %v2957 = vadd.f32 %v2908, %v2952
      %v2958 = vadd.f32 %v2909, %v2955
      %2959 = vrot.lane.b32.xlu0 %v2879, 126
      %v2960 = vpop.permute.xlu0 %2959
      %2961 = vrot.lane.b32.xlu0 %v2880, 126
      %v2962 = vpop.permute.xlu0 %2961
      %2963 = vrot.lane.b32.xlu0 %v2881, 126
      %v2964 = vpop.permute.xlu0 %2963
      %2965 = vrot.lane.b32.xlu0 %v2882, 126
      %v2966 = vpop.permute.xlu0 %2965
      %2967 = vrot.lane.b32.xlu0 %v2883, 126
      %v2968 = vpop.permute.xlu0 %2967
      %2969 = vrot.lane.b32.xlu0 %v2884, 126
      %v2970 = vpop.permute.xlu0 %2969
      %2977 = vmatpush.msra.mxu0 0.0
      %2978 = vmatpush.msra.mxu0 0.0
      %2979 = vmatpush.msra.mxu0 0.0
      %2980 = vmatpush.msra.mxu0 0.0
      %2981 = vmatpush.msra.mxu0 0.0
      %2982 = vmatpush.msra.mxu0 0.0
      %2983 = vmatpush.msra.mxu0 0.0
      %2984 = vmatpush.msra.mxu0 0.0
      %2985 = vmatpush.msra.mxu0 0.0
      %2986 = vmatpush.msra.mxu0 0.0
      %2987 = vmatpush.msra.mxu0 %v2970
      %2988 = vmatpush.msra.mxu0 %v2968
      %2989 = vmatpush.msra.mxu0 %v2966
      %2990 = vmatpush.msra.mxu0 %v2964
      %2991 = vmatpush.msra.mxu0 %v2962
      %2992 = vmatpush.msra.mxu0 %v2960
      %2993 = vmatmul.f32.gmra.mxu0 %v2578
      %v2994 = vpop.f32.mrf.mxu0
      %v2995 = vadd.f32 0.0, %v2994
      %2996 = vmatmul.f32.gmra.mxu0 %v2581
      %v2997 = vpop.f32.mrf.mxu0
      %v2998 = vadd.f32 0.0, %v2997
      %2999 = vdwg.mxu0
      %v3000 = vadd.f32 %v2957, %v2995
      %v3001 = vadd.f32 %v2958, %v2998
      %vm3002 = vcmp.gt.f32.partialorder %v3000, 0.0
      %vm3003 = vcmp.gt.f32.partialorder %v3001, 0.0
      %v3004 = vmul.f32 %v538, %v3000
      %v3005 = vmul.f32 %v543, %v3001
      %v3006 = vsel %vm3002, %v3000, %v3004
      %v3007 = vsel %vm3003, %v3001, %v3005
      %3008 = vst.msk [vmem:[#allocation3 + $0x30] sm:$0xff] %vm2614, %v3006
      %3009 = vst.msk [vmem:[#allocation3 + $0x38] sm:$0xff] %vm2614, %v3007
      %v3010 = vld [vmem:[#allocation2 + $0x40] sm:$0xff]
      %v3011 = vld [vmem:[#allocation2 + $0x48] sm:$0xff]
      %v3012 = vld [vmem:[#allocation2 + $0x50] sm:$0xff]
      %v3013 = vld [vmem:[#allocation2 + $0x58] sm:$0xff]
      %v3014 = vld [vmem:[#allocation2 + $0x60] sm:$0xff]
      %v3015 = vld [vmem:[#allocation2 + $0x68] sm:$0xff]
      %3016 = vmatpush.msra.mxu0 0.0
      %3017 = vmatpush.msra.mxu0 0.0
      %3018 = vmatpush.msra.mxu0 0.0
      %3019 = vmatpush.msra.mxu0 0.0
      %3020 = vmatpush.msra.mxu0 0.0
      %3021 = vmatpush.msra.mxu0 0.0
      %3022 = vmatpush.msra.mxu0 0.0
      %3023 = vmatpush.msra.mxu0 0.0
      %3024 = vmatpush.msra.mxu0 0.0
      %3025 = vmatpush.msra.mxu0 0.0
      %3026 = vmatpush.msra.mxu0 %v3015
      %3027 = vmatpush.msra.mxu0 %v3014
      %3028 = vmatpush.msra.mxu0 %v3013
      %3029 = vmatpush.msra.mxu0 %v3012
      %3030 = vmatpush.msra.mxu0 %v3011
      %3031 = vmatpush.msra.mxu0 %v3010
      %3032 = vmatmul.f32.gmra.mxu0 %v2474
      %v3033 = vpop.f32.mrf.mxu0
      %v3034 = vadd.f32 0.0, %v3033
      %3035 = vmatmul.f32.gmra.mxu0 %v2477
      %v3036 = vpop.f32.mrf.mxu0
      %v3037 = vadd.f32 0.0, %v3036
      %3038 = vdwg.mxu0
      %v3039 = vadd.f32 %v526, %v3034
      %v3040 = vadd.f32 %v531, %v3037
      %3047 = vrot.lane.b32.xlu0 %v3010, 127
      %v3048 = vpop.permute.xlu0 %3047
      %3049 = vrot.lane.b32.xlu0 %v3011, 127
      %v3050 = vpop.permute.xlu0 %3049
      %3051 = vrot.lane.b32.xlu0 %v3012, 127
      %v3052 = vpop.permute.xlu0 %3051
      %3053 = vrot.lane.b32.xlu0 %v3013, 127
      %v3054 = vpop.permute.xlu0 %3053
      %3055 = vrot.lane.b32.xlu0 %v3014, 127
      %v3056 = vpop.permute.xlu0 %3055
      %3057 = vrot.lane.b32.xlu0 %v3015, 127
      %v3058 = vpop.permute.xlu0 %3057
      %3065 = vmatpush.msra.mxu0 0.0
      %3066 = vmatpush.msra.mxu0 0.0
      %3067 = vmatpush.msra.mxu0 0.0
      %3068 = vmatpush.msra.mxu0 0.0
      %3069 = vmatpush.msra.mxu0 0.0
      %3070 = vmatpush.msra.mxu0 0.0
      %3071 = vmatpush.msra.mxu0 0.0
      %3072 = vmatpush.msra.mxu0 0.0
      %3073 = vmatpush.msra.mxu0 0.0
      %3074 = vmatpush.msra.mxu0 0.0
      %3075 = vmatpush.msra.mxu0 %v3058
      %3076 = vmatpush.msra.mxu0 %v3056
      %3077 = vmatpush.msra.mxu0 %v3054
      %3078 = vmatpush.msra.mxu0 %v3052
      %3079 = vmatpush.msra.mxu0 %v3050
      %3080 = vmatpush.msra.mxu0 %v3048
      %3081 = vmatmul.f32.gmra.mxu0 %v2529
      %v3082 = vpop.f32.mrf.mxu0
      %v3083 = vadd.f32 0.0, %v3082
      %3084 = vmatmul.f32.gmra.mxu0 %v2532
      %v3085 = vpop.f32.mrf.mxu0
      %v3086 = vadd.f32 0.0, %v3085
      %3087 = vdwg.mxu0
      %v3088 = vadd.f32 %v3039, %v3083
      %v3089 = vadd.f32 %v3040, %v3086
      %3090 = vrot.lane.b32.xlu0 %v3010, 126
      %v3091 = vpop.permute.xlu0 %3090
      %3092 = vrot.lane.b32.xlu0 %v3011, 126
      %v3093 = vpop.permute.xlu0 %3092
      %3094 = vrot.lane.b32.xlu0 %v3012, 126
      %v3095 = vpop.permute.xlu0 %3094
      %3096 = vrot.lane.b32.xlu0 %v3013, 126
      %v3097 = vpop.permute.xlu0 %3096
      %3098 = vrot.lane.b32.xlu0 %v3014, 126
      %v3099 = vpop.permute.xlu0 %3098
      %3100 = vrot.lane.b32.xlu0 %v3015, 126
      %v3101 = vpop.permute.xlu0 %3100
      %3108 = vmatpush.msra.mxu0 0.0
      %3109 = vmatpush.msra.mxu0 0.0
      %3110 = vmatpush.msra.mxu0 0.0
      %3111 = vmatpush.msra.mxu0 0.0
      %3112 = vmatpush.msra.mxu0 0.0
      %3113 = vmatpush.msra.mxu0 0.0
      %3114 = vmatpush.msra.mxu0 0.0
      %3115 = vmatpush.msra.mxu0 0.0
      %3116 = vmatpush.msra.mxu0 0.0
      %3117 = vmatpush.msra.mxu0 0.0
      %3118 = vmatpush.msra.mxu0 %v3101
      %3119 = vmatpush.msra.mxu0 %v3099
      %3120 = vmatpush.msra.mxu0 %v3097
      %3121 = vmatpush.msra.mxu0 %v3095
      %3122 = vmatpush.msra.mxu0 %v3093
      %3123 = vmatpush.msra.mxu0 %v3091
      %3124 = vmatmul.f32.gmra.mxu0 %v2578
      %v3125 = vpop.f32.mrf.mxu0
      %v3126 = vadd.f32 0.0, %v3125
      %3127 = vmatmul.f32.gmra.mxu0 %v2581
      %v3128 = vpop.f32.mrf.mxu0
      %v3129 = vadd.f32 0.0, %v3128
      %3130 = vdwg.mxu0
      %v3131 = vadd.f32 %v3088, %v3126
      %v3132 = vadd.f32 %v3089, %v3129
      %vm3133 = vcmp.gt.f32.partialorder %v3131, 0.0
      %vm3134 = vcmp.gt.f32.partialorder %v3132, 0.0
      %v3135 = vmul.f32 %v538, %v3131
      %v3136 = vmul.f32 %v543, %v3132
      %v3137 = vsel %vm3133, %v3131, %v3135
      %v3138 = vsel %vm3134, %v3132, %v3136
      %3139 = vst.msk [vmem:[#allocation3 + $0x40] sm:$0xff] %vm2614, %v3137
      %3140 = vst.msk [vmem:[#allocation3 + $0x48] sm:$0xff] %vm2614, %v3138
      %v3141 = vld [vmem:[#allocation3] sm:$0xff]
      %v3142 = vld [vmem:[#allocation3 + $0x8] sm:$0xff]
      %v3143 = vld [vmem:[#allocation3 + $0x10] sm:$0xff]
      %v3144 = vld [vmem:[#allocation3 + $0x18] sm:$0xff]
      %v3145 = vld [vmem:[#allocation3 + $0x20] sm:$0xff]
      %v3146 = vld [vmem:[#allocation3 + $0x28] sm:$0xff]
      %v3148 = vsel %vm2472, %v480, 0
      %v3151 = vsel %vm2472, %v481, 0
      %v3154 = vsel %vm2472, %v482, 0
      %v3157 = vsel %vm2472, %v483, 0
      %3159 = vmatpush.msra.mxu0 0.0
      %3160 = vmatpush.msra.mxu0 0.0
      %3161 = vmatpush.msra.mxu0 0.0
      %3162 = vmatpush.msra.mxu0 0.0
      %3163 = vmatpush.msra.mxu0 0.0
      %3164 = vmatpush.msra.mxu0 0.0
      %3165 = vmatpush.msra.mxu0 0.0
      %3166 = vmatpush.msra.mxu0 0.0
      %3167 = vmatpush.msra.mxu0 0.0
      %3168 = vmatpush.msra.mxu0 0.0
      %3169 = vmatpush.msra.mxu0 %v3146
      %3170 = vmatpush.msra.mxu0 %v3145
      %3171 = vmatpush.msra.mxu0 %v3144
      %3172 = vmatpush.msra.mxu0 %v3143
      %3173 = vmatpush.msra.mxu0 %v3142
      %3174 = vmatpush.msra.mxu0 %v3141
      %3175 = vmatmul.f32.gmra.mxu0 %v3148
      %v3176 = vpop.f32.mrf.mxu0
      %v3177 = vadd.f32 0.0, %v3176
      %3178 = vmatmul.f32.gmra.mxu0 %v3151
      %v3179 = vpop.f32.mrf.mxu0
      %v3180 = vadd.f32 0.0, %v3179
      %3181 = vmatmul.f32.gmra.mxu0 %v3154
      %v3182 = vpop.f32.mrf.mxu0
      %v3183 = vadd.f32 0.0, %v3182
      %3184 = vmatmul.f32.gmra.mxu0 %v3157
      %v3185 = vpop.f32.mrf.mxu0
      %v3186 = vadd.f32 0.0, %v3185
      %3187 = vdwg.mxu0
      %v3188 = vadd.f32 %v552, %v3177
      %v3189 = vadd.f32 %v557, %v3180
      %v3190 = vadd.f32 %v562, %v3183
      %v3191 = vadd.f32 %v567, %v3186
      %3198 = vrot.lane.b32.xlu0 %v3141, 127
      %v3199 = vpop.permute.xlu0 %3198
      %3200 = vrot.lane.b32.xlu0 %v3142, 127
      %v3201 = vpop.permute.xlu0 %3200
      %3202 = vrot.lane.b32.xlu0 %v3143, 127
      %v3203 = vpop.permute.xlu0 %3202
      %3204 = vrot.lane.b32.xlu0 %v3144, 127
      %v3205 = vpop.permute.xlu0 %3204
      %3206 = vrot.lane.b32.xlu0 %v3145, 127
      %v3207 = vpop.permute.xlu0 %3206
      %3208 = vrot.lane.b32.xlu0 %v3146, 127
      %v3209 = vpop.permute.xlu0 %3208
      %v3217 = vsel %vm2472, %v484, 0
      %v3220 = vsel %vm2472, %v485, 0
      %v3223 = vsel %vm2472, %v486, 0
      %v3226 = vsel %vm2472, %v487, 0
      %3228 = vmatpush.msra.mxu0 0.0
      %3229 = vmatpush.msra.mxu0 0.0
      %3230 = vmatpush.msra.mxu0 0.0
      %3231 = vmatpush.msra.mxu0 0.0
      %3232 = vmatpush.msra.mxu0 0.0
      %3233 = vmatpush.msra.mxu0 0.0
      %3234 = vmatpush.msra.mxu0 0.0
      %3235 = vmatpush.msra.mxu0 0.0
      %3236 = vmatpush.msra.mxu0 0.0
      %3237 = vmatpush.msra.mxu0 0.0
      %3238 = vmatpush.msra.mxu0 %v3209
      %3239 = vmatpush.msra.mxu0 %v3207
      %3240 = vmatpush.msra.mxu0 %v3205
      %3241 = vmatpush.msra.mxu0 %v3203
      %3242 = vmatpush.msra.mxu0 %v3201
      %3243 = vmatpush.msra.mxu0 %v3199
      %3244 = vmatmul.f32.gmra.mxu0 %v3217
      %v3245 = vpop.f32.mrf.mxu0
      %v3246 = vadd.f32 0.0, %v3245
      %3247 = vmatmul.f32.gmra.mxu0 %v3220
      %v3248 = vpop.f32.mrf.mxu0
      %v3249 = vadd.f32 0.0, %v3248
      %3250 = vmatmul.f32.gmra.mxu0 %v3223
      %v3251 = vpop.f32.mrf.mxu0
      %v3252 = vadd.f32 0.0, %v3251
      %3253 = vmatmul.f32.gmra.mxu0 %v3226
      %v3254 = vpop.f32.mrf.mxu0
      %v3255 = vadd.f32 0.0, %v3254
      %3256 = vdwg.mxu0
      %v3257 = vadd.f32 %v3188, %v3246
      %v3258 = vadd.f32 %v3189, %v3249
      %v3259 = vadd.f32 %v3190, %v3252
      %v3260 = vadd.f32 %v3191, %v3255
      %3261 = vrot.lane.b32.xlu0 %v3141, 126
      %v3262 = vpop.permute.xlu0 %3261
      %3263 = vrot.lane.b32.xlu0 %v3142, 126
      %v3264 = vpop.permute.xlu0 %3263
      %3265 = vrot.lane.b32.xlu0 %v3143, 126
      %v3266 = vpop.permute.xlu0 %3265
      %3267 = vrot.lane.b32.xlu0 %v3144, 126
      %v3268 = vpop.permute.xlu0 %3267
      %3269 = vrot.lane.b32.xlu0 %v3145, 126
      %v3270 = vpop.permute.xlu0 %3269
      %3271 = vrot.lane.b32.xlu0 %v3146, 126
      %v3272 = vpop.permute.xlu0 %3271
      %v3280 = vsel %vm2472, %v488, 0
      %v3283 = vsel %vm2472, %v489, 0
      %v3286 = vsel %vm2472, %v490, 0
      %v3289 = vsel %vm2472, %v491, 0
      %3291 = vmatpush.msra.mxu0 0.0
      %3292 = vmatpush.msra.mxu0 0.0
      %3293 = vmatpush.msra.mxu0 0.0
      %3294 = vmatpush.msra.mxu0 0.0
      %3295 = vmatpush.msra.mxu0 0.0
      %3296 = vmatpush.msra.mxu0 0.0
      %3297 = vmatpush.msra.mxu0 0.0
      %3298 = vmatpush.msra.mxu0 0.0
      %3299 = vmatpush.msra.mxu0 0.0
      %3300 = vmatpush.msra.mxu0 0.0
      %3301 = vmatpush.msra.mxu0 %v3272
      %3302 = vmatpush.msra.mxu0 %v3270
      %3303 = vmatpush.msra.mxu0 %v3268
      %3304 = vmatpush.msra.mxu0 %v3266
      %3305 = vmatpush.msra.mxu0 %v3264
      %3306 = vmatpush.msra.mxu0 %v3262
      %3307 = vmatmul.f32.gmra.mxu0 %v3280
      %v3308 = vpop.f32.mrf.mxu0
      %v3309 = vadd.f32 0.0, %v3308
      %3310 = vmatmul.f32.gmra.mxu0 %v3283
      %v3311 = vpop.f32.mrf.mxu0
      %v3312 = vadd.f32 0.0, %v3311
      %3313 = vmatmul.f32.gmra.mxu0 %v3286
      %v3314 = vpop.f32.mrf.mxu0
      %v3315 = vadd.f32 0.0, %v3314
      %3316 = vmatmul.f32.gmra.mxu0 %v3289
      %v3317 = vpop.f32.mrf.mxu0
      %v3318 = vadd.f32 0.0, %v3317
      %3319 = vdwg.mxu0
      %v3320 = vadd.f32 %v3257, %v3309
      %v3321 = vadd.f32 %v3258, %v3312
      %v3322 = vadd.f32 %v3259, %v3315
      %v3323 = vadd.f32 %v3260, %v3318
      %vm3324 = vcmp.gt.f32.partialorder %v3320, 0.0
      %vm3325 = vcmp.gt.f32.partialorder %v3321, 0.0
      %vm3326 = vcmp.gt.f32.partialorder %v3322, 0.0
      %vm3327 = vcmp.gt.f32.partialorder %v3323, 0.0
      %v3328 = vmul.f32 %v576, %v3320
      %v3329 = vmul.f32 %v581, %v3321
      %v3330 = vmul.f32 %v586, %v3322
      %v3331 = vmul.f32 %v591, %v3323
      %v3332 = vsel %vm3324, %v3320, %v3328
      %v3333 = vsel %vm3325, %v3321, %v3329
      %v3334 = vsel %vm3326, %v3322, %v3330
      %v3335 = vsel %vm3327, %v3323, %v3331
      %vm3336 = vcmask 261120
      %v3338 = vsel %vm3336, %v492, 0
      %3340 = vmatpush.msra.mxu0 0.0
      %3341 = vmatpush.msra.mxu0 0.0
      %3342 = vmatpush.msra.mxu0 0.0
      %3343 = vmatpush.msra.mxu0 0.0
      %3344 = vmatpush.msra.mxu0 0.0
      %3345 = vmatpush.msra.mxu0 0.0
      %3346 = vmatpush.msra.mxu0 0.0
      %3347 = vmatpush.msra.mxu0 0.0
      %3348 = vmatpush.msra.mxu0 0.0
      %3349 = vmatpush.msra.mxu0 0.0
      %3350 = vmatpush.msra.mxu0 0.0
      %3351 = vmatpush.msra.mxu0 0.0
      %3352 = vmatpush.msra.mxu0 %v3335
      %3353 = vmatpush.msra.mxu0 %v3334
      %3354 = vmatpush.msra.mxu0 %v3333
      %3355 = vmatpush.msra.mxu0 %v3332
      %3356 = vmatmul.f32.gmra.mxu0 %v3338
      %v3357 = vpop.f32.mrf.mxu0
      %v3358 = vadd.f32 %v597, %v3357
      %3359 = vdwg.mxu0
      %v3360 = vsub.f32 0.0, %v3358
      %v3361 = vmul.f32 %v3360, 1.442695
      %v3362 = vpow.pop %v3361
      %v3363 = vadd.f32 %v3362, 1.0
      %v3364 = vrcp.pop %v3363
      %v3365 = vmul.f32 %v3363, %v3364
      %v3366 = vsub.f32 1.0, %v3365
      %v3367 = vmul.f32 %v3364, %v3366
      %v3368 = vadd.f32 %v3364, %v3367
      %vm3369 = vweird.f32 %v3363
      %vm3370 = vweird.f32 %v3364
      %vm3371 = vmor %vm3369, %vm3370
      %v3372 = vsel %vm3371, %v3364, %v3368
      %v3373 = vand.u32 2147483647, %v3363
      %vm3374 = vcmp.eq.f32.partialorder %v3373, 8.507059e+37
      %v3375 = vand.u32 %v3363, 2147483648
      %v3376 = vor.u32 1.1754944e-38, %v3375
      %v3377 = vsel %vm3374, %v3376, %v3372
      %v3378 = vmul.f32 1.0, %v3377
      %v3379 = vsel %vm601, %v3378, %v3358
      %vm3380 = vcmask 20480
      %3381 = vst.msk [vmem:[%s467] sm:$0x1f] %vm3380, %v3379
      %v3382 = vld [vmem:[#allocation3 + $0x10] sm:$0xff]
      %v3383 = vld [vmem:[#allocation3 + $0x18] sm:$0xff]
      %v3384 = vld [vmem:[#allocation3 + $0x20] sm:$0xff]
      %v3385 = vld [vmem:[#allocation3 + $0x28] sm:$0xff]
      %v3386 = vld [vmem:[#allocation3 + $0x30] sm:$0xff]
      %v3387 = vld [vmem:[#allocation3 + $0x38] sm:$0xff]
      %3388 = vmatpush.msra.mxu0 0.0
      %3389 = vmatpush.msra.mxu0 0.0
      %3390 = vmatpush.msra.mxu0 0.0
      %3391 = vmatpush.msra.mxu0 0.0
      %3392 = vmatpush.msra.mxu0 0.0
      %3393 = vmatpush.msra.mxu0 0.0
      %3394 = vmatpush.msra.mxu0 0.0
      %3395 = vmatpush.msra.mxu0 0.0
      %3396 = vmatpush.msra.mxu0 0.0
      %3397 = vmatpush.msra.mxu0 0.0
      %3398 = vmatpush.msra.mxu0 %v3387
      %3399 = vmatpush.msra.mxu0 %v3386
      %3400 = vmatpush.msra.mxu0 %v3385
      %3401 = vmatpush.msra.mxu0 %v3384
      %3402 = vmatpush.msra.mxu0 %v3383
      %3403 = vmatpush.msra.mxu0 %v3382
      %3404 = vmatmul.f32.gmra.mxu0 %v3148
      %v3405 = vpop.f32.mrf.mxu0
      %v3406 = vadd.f32 0.0, %v3405
      %3407 = vmatmul.f32.gmra.mxu0 %v3151
      %v3408 = vpop.f32.mrf.mxu0
      %v3409 = vadd.f32 0.0, %v3408
      %3410 = vmatmul.f32.gmra.mxu0 %v3154
      %v3411 = vpop.f32.mrf.mxu0
      %v3412 = vadd.f32 0.0, %v3411
      %3413 = vmatmul.f32.gmra.mxu0 %v3157
      %v3414 = vpop.f32.mrf.mxu0
      %v3415 = vadd.f32 0.0, %v3414
      %3416 = vdwg.mxu0
      %v3417 = vadd.f32 %v552, %v3406
      %v3418 = vadd.f32 %v557, %v3409
      %v3419 = vadd.f32 %v562, %v3412
      %v3420 = vadd.f32 %v567, %v3415
      %3427 = vrot.lane.b32.xlu0 %v3382, 127
      %v3428 = vpop.permute.xlu0 %3427
      %3429 = vrot.lane.b32.xlu0 %v3383, 127
      %v3430 = vpop.permute.xlu0 %3429
      %3431 = vrot.lane.b32.xlu0 %v3384, 127
      %v3432 = vpop.permute.xlu0 %3431
      %3433 = vrot.lane.b32.xlu0 %v3385, 127
      %v3434 = vpop.permute.xlu0 %3433
      %3435 = vrot.lane.b32.xlu0 %v3386, 127
      %v3436 = vpop.permute.xlu0 %3435
      %3437 = vrot.lane.b32.xlu0 %v3387, 127
      %v3438 = vpop.permute.xlu0 %3437
      %3445 = vmatpush.msra.mxu0 0.0
      %3446 = vmatpush.msra.mxu0 0.0
      %3447 = vmatpush.msra.mxu0 0.0
      %3448 = vmatpush.msra.mxu0 0.0
      %3449 = vmatpush.msra.mxu0 0.0
      %3450 = vmatpush.msra.mxu0 0.0
      %3451 = vmatpush.msra.mxu0 0.0
      %3452 = vmatpush.msra.mxu0 0.0
      %3453 = vmatpush.msra.mxu0 0.0
      %3454 = vmatpush.msra.mxu0 0.0
      %3455 = vmatpush.msra.mxu0 %v3438
      %3456 = vmatpush.msra.mxu0 %v3436
      %3457 = vmatpush.msra.mxu0 %v3434
      %3458 = vmatpush.msra.mxu0 %v3432
      %3459 = vmatpush.msra.mxu0 %v3430
      %3460 = vmatpush.msra.mxu0 %v3428
      %3461 = vmatmul.f32.gmra.mxu0 %v3217
      %v3462 = vpop.f32.mrf.mxu0
      %v3463 = vadd.f32 0.0, %v3462
      %3464 = vmatmul.f32.gmra.mxu0 %v3220
      %v3465 = vpop.f32.mrf.mxu0
      %v3466 = vadd.f32 0.0, %v3465
      %3467 = vmatmul.f32.gmra.mxu0 %v3223
      %v3468 = vpop.f32.mrf.mxu0
      %v3469 = vadd.f32 0.0, %v3468
      %3470 = vmatmul.f32.gmra.mxu0 %v3226
      %v3471 = vpop.f32.mrf.mxu0
      %v3472 = vadd.f32 0.0, %v3471
      %3473 = vdwg.mxu0
      %v3474 = vadd.f32 %v3417, %v3463
      %v3475 = vadd.f32 %v3418, %v3466
      %v3476 = vadd.f32 %v3419, %v3469
      %v3477 = vadd.f32 %v3420, %v3472
      %3478 = vrot.lane.b32.xlu0 %v3382, 126
      %v3479 = vpop.permute.xlu0 %3478
      %3480 = vrot.lane.b32.xlu0 %v3383, 126
      %v3481 = vpop.permute.xlu0 %3480
      %3482 = vrot.lane.b32.xlu0 %v3384, 126
      %v3483 = vpop.permute.xlu0 %3482
      %3484 = vrot.lane.b32.xlu0 %v3385, 126
      %v3485 = vpop.permute.xlu0 %3484
      %3486 = vrot.lane.b32.xlu0 %v3386, 126
      %v3487 = vpop.permute.xlu0 %3486
      %3488 = vrot.lane.b32.xlu0 %v3387, 126
      %v3489 = vpop.permute.xlu0 %3488
      %3496 = vmatpush.msra.mxu0 0.0
      %3497 = vmatpush.msra.mxu0 0.0
      %3498 = vmatpush.msra.mxu0 0.0
      %3499 = vmatpush.msra.mxu0 0.0
      %3500 = vmatpush.msra.mxu0 0.0
      %3501 = vmatpush.msra.mxu0 0.0
      %3502 = vmatpush.msra.mxu0 0.0
      %3503 = vmatpush.msra.mxu0 0.0
      %3504 = vmatpush.msra.mxu0 0.0
      %3505 = vmatpush.msra.mxu0 0.0
      %3506 = vmatpush.msra.mxu0 %v3489
      %3507 = vmatpush.msra.mxu0 %v3487
      %3508 = vmatpush.msra.mxu0 %v3485
      %3509 = vmatpush.msra.mxu0 %v3483
      %3510 = vmatpush.msra.mxu0 %v3481
      %3511 = vmatpush.msra.mxu0 %v3479
      %3512 = vmatmul.f32.gmra.mxu0 %v3280
      %v3513 = vpop.f32.mrf.mxu0
      %v3514 = vadd.f32 0.0, %v3513
      %3515 = vmatmul.f32.gmra.mxu0 %v3283
      %v3516 = vpop.f32.mrf.mxu0
      %v3517 = vadd.f32 0.0, %v3516
      %3518 = vmatmul.f32.gmra.mxu0 %v3286
      %v3519 = vpop.f32.mrf.mxu0
      %v3520 = vadd.f32 0.0, %v3519
      %3521 = vmatmul.f32.gmra.mxu0 %v3289
      %v3522 = vpop.f32.mrf.mxu0
      %v3523 = vadd.f32 0.0, %v3522
      %3524 = vdwg.mxu0
      %v3525 = vadd.f32 %v3474, %v3514
      %v3526 = vadd.f32 %v3475, %v3517
      %v3527 = vadd.f32 %v3476, %v3520
      %v3528 = vadd.f32 %v3477, %v3523
      %vm3529 = vcmp.gt.f32.partialorder %v3525, 0.0
      %vm3530 = vcmp.gt.f32.partialorder %v3526, 0.0
      %vm3531 = vcmp.gt.f32.partialorder %v3527, 0.0
      %vm3532 = vcmp.gt.f32.partialorder %v3528, 0.0
      %v3533 = vmul.f32 %v576, %v3525
      %v3534 = vmul.f32 %v581, %v3526
      %v3535 = vmul.f32 %v586, %v3527
      %v3536 = vmul.f32 %v591, %v3528
      %v3537 = vsel %vm3529, %v3525, %v3533
      %v3538 = vsel %vm3530, %v3526, %v3534
      %v3539 = vsel %vm3531, %v3527, %v3535
      %v3540 = vsel %vm3532, %v3528, %v3536
      %3541 = vmatpush.msra.mxu0 0.0
      %3542 = vmatpush.msra.mxu0 0.0
      %3543 = vmatpush.msra.mxu0 0.0
      %3544 = vmatpush.msra.mxu0 0.0
      %3545 = vmatpush.msra.mxu0 0.0
      %3546 = vmatpush.msra.mxu0 0.0
      %3547 = vmatpush.msra.mxu0 0.0
      %3548 = vmatpush.msra.mxu0 0.0
      %3549 = vmatpush.msra.mxu0 0.0
      %3550 = vmatpush.msra.mxu0 0.0
      %3551 = vmatpush.msra.mxu0 0.0
      %3552 = vmatpush.msra.mxu0 0.0
      %3553 = vmatpush.msra.mxu0 %v3540
      %3554 = vmatpush.msra.mxu0 %v3539
      %3555 = vmatpush.msra.mxu0 %v3538
      %3556 = vmatpush.msra.mxu0 %v3537
      %3557 = vmatmul.f32.gmra.mxu0 %v3338
      %v3558 = vpop.f32.mrf.mxu0
      %v3559 = vadd.f32 %v597, %v3558
      %3560 = vdwg.mxu0
      %v3561 = vsub.f32 0.0, %v3559
      %v3562 = vmul.f32 %v3561, 1.442695
      %v3563 = vpow.pop %v3562
      %v3564 = vadd.f32 %v3563, 1.0
      %v3565 = vrcp.pop %v3564
      %v3566 = vmul.f32 %v3564, %v3565
      %v3567 = vsub.f32 1.0, %v3566
      %v3568 = vmul.f32 %v3565, %v3567
      %v3569 = vadd.f32 %v3565, %v3568
      %vm3570 = vweird.f32 %v3564
      %vm3571 = vweird.f32 %v3565
      %vm3572 = vmor %vm3570, %vm3571
      %v3573 = vsel %vm3572, %v3565, %v3569
      %v3574 = vand.u32 2147483647, %v3564
      %vm3575 = vcmp.eq.f32.partialorder %v3574, 8.507059e+37
      %v3576 = vand.u32 %v3564, 2147483648
      %v3577 = vor.u32 1.1754944e-38, %v3576
      %v3578 = vsel %vm3575, %v3577, %v3573
      %v3579 = vmul.f32 1.0, %v3578
      %v3580 = vsel %vm601, %v3579, %v3559
      %s3581 = scalar_lea.vmem %s467, 8
      %3582 = vst.msk [vmem:[%s3581] sm:$0x1f] %vm3380, %v3580
      %v3583 = vld [vmem:[#allocation3 + $0x20] sm:$0xff]
      %v3584 = vld [vmem:[#allocation3 + $0x28] sm:$0xff]
      %v3585 = vld [vmem:[#allocation3 + $0x30] sm:$0xff]
      %v3586 = vld [vmem:[#allocation3 + $0x38] sm:$0xff]
      %v3587 = vld [vmem:[#allocation3 + $0x40] sm:$0xff]
      %v3588 = vld [vmem:[#allocation3 + $0x48] sm:$0xff]
      %3589 = vmatpush.msra.mxu0 0.0
      %3590 = vmatpush.msra.mxu0 0.0
      %3591 = vmatpush.msra.mxu0 0.0
      %3592 = vmatpush.msra.mxu0 0.0
      %3593 = vmatpush.msra.mxu0 0.0
      %3594 = vmatpush.msra.mxu0 0.0
      %3595 = vmatpush.msra.mxu0 0.0
      %3596 = vmatpush.msra.mxu0 0.0
      %3597 = vmatpush.msra.mxu0 0.0
      %3598 = vmatpush.msra.mxu0 0.0
      %3599 = vmatpush.msra.mxu0 %v3588
      %3600 = vmatpush.msra.mxu0 %v3587
      %3601 = vmatpush.msra.mxu0 %v3586
      %3602 = vmatpush.msra.mxu0 %v3585
      %3603 = vmatpush.msra.mxu0 %v3584
      %3604 = vmatpush.msra.mxu0 %v3583
      %3605 = vmatmul.f32.gmra.mxu0 %v3148
      %v3606 = vpop.f32.mrf.mxu0
      %v3607 = vadd.f32 0.0, %v3606
      %3608 = vmatmul.f32.gmra.mxu0 %v3151
      %v3609 = vpop.f32.mrf.mxu0
      %v3610 = vadd.f32 0.0, %v3609
      %3611 = vmatmul.f32.gmra.mxu0 %v3154
      %v3612 = vpop.f32.mrf.mxu0
      %v3613 = vadd.f32 0.0, %v3612
      %3614 = vmatmul.f32.gmra.mxu0 %v3157
      %v3615 = vpop.f32.mrf.mxu0
      %v3616 = vadd.f32 0.0, %v3615
      %3617 = vdwg.mxu0
      %v3618 = vadd.f32 %v552, %v3607
      %v3619 = vadd.f32 %v557, %v3610
      %v3620 = vadd.f32 %v562, %v3613
      %v3621 = vadd.f32 %v567, %v3616
      %3628 = vrot.lane.b32.xlu0 %v3583, 127
      %v3629 = vpop.permute.xlu0 %3628
      %3630 = vrot.lane.b32.xlu0 %v3584, 127
      %v3631 = vpop.permute.xlu0 %3630
      %3632 = vrot.lane.b32.xlu0 %v3585, 127
      %v3633 = vpop.permute.xlu0 %3632
      %3634 = vrot.lane.b32.xlu0 %v3586, 127
      %v3635 = vpop.permute.xlu0 %3634
      %3636 = vrot.lane.b32.xlu0 %v3587, 127
      %v3637 = vpop.permute.xlu0 %3636
      %3638 = vrot.lane.b32.xlu0 %v3588, 127
      %v3639 = vpop.permute.xlu0 %3638
      %3646 = vmatpush.msra.mxu0 0.0
      %3647 = vmatpush.msra.mxu0 0.0
      %3648 = vmatpush.msra.mxu0 0.0
      %3649 = vmatpush.msra.mxu0 0.0
      %3650 = vmatpush.msra.mxu0 0.0
      %3651 = vmatpush.msra.mxu0 0.0
      %3652 = vmatpush.msra.mxu0 0.0
      %3653 = vmatpush.msra.mxu0 0.0
      %3654 = vmatpush.msra.mxu0 0.0
      %3655 = vmatpush.msra.mxu0 0.0
      %3656 = vmatpush.msra.mxu0 %v3639
      %3657 = vmatpush.msra.mxu0 %v3637
      %3658 = vmatpush.msra.mxu0 %v3635
      %3659 = vmatpush.msra.mxu0 %v3633
      %3660 = vmatpush.msra.mxu0 %v3631
      %3661 = vmatpush.msra.mxu0 %v3629
      %3662 = vmatmul.f32.gmra.mxu0 %v3217
      %v3663 = vpop.f32.mrf.mxu0
      %v3664 = vadd.f32 0.0, %v3663
      %3665 = vmatmul.f32.gmra.mxu0 %v3220
      %v3666 = vpop.f32.mrf.mxu0
      %v3667 = vadd.f32 0.0, %v3666
      %3668 = vmatmul.f32.gmra.mxu0 %v3223
      %v3669 = vpop.f32.mrf.mxu0
      %v3670 = vadd.f32 0.0, %v3669
      %3671 = vmatmul.f32.gmra.mxu0 %v3226
      %v3672 = vpop.f32.mrf.mxu0
      %v3673 = vadd.f32 0.0, %v3672
      %3674 = vdwg.mxu0
      %v3675 = vadd.f32 %v3618, %v3664
      %v3676 = vadd.f32 %v3619, %v3667
      %v3677 = vadd.f32 %v3620, %v3670
      %v3678 = vadd.f32 %v3621, %v3673
      %3679 = vrot.lane.b32.xlu0 %v3583, 126
      %v3680 = vpop.permute.xlu0 %3679
      %3681 = vrot.lane.b32.xlu0 %v3584, 126
      %v3682 = vpop.permute.xlu0 %3681
      %3683 = vrot.lane.b32.xlu0 %v3585, 126
      %v3684 = vpop.permute.xlu0 %3683
      %3685 = vrot.lane.b32.xlu0 %v3586, 126
      %v3686 = vpop.permute.xlu0 %3685
      %3687 = vrot.lane.b32.xlu0 %v3587, 126
      %v3688 = vpop.permute.xlu0 %3687
      %3689 = vrot.lane.b32.xlu0 %v3588, 126
      %v3690 = vpop.permute.xlu0 %3689
      %3697 = vmatpush.msra.mxu0 0.0
      %3698 = vmatpush.msra.mxu0 0.0
      %3699 = vmatpush.msra.mxu0 0.0
      %3700 = vmatpush.msra.mxu0 0.0
      %3701 = vmatpush.msra.mxu0 0.0
      %3702 = vmatpush.msra.mxu0 0.0
      %3703 = vmatpush.msra.mxu0 0.0
      %3704 = vmatpush.msra.mxu0 0.0
      %3705 = vmatpush.msra.mxu0 0.0
      %3706 = vmatpush.msra.mxu0 0.0
      %3707 = vmatpush.msra.mxu0 %v3690
      %3708 = vmatpush.msra.mxu0 %v3688
      %3709 = vmatpush.msra.mxu0 %v3686
      %3710 = vmatpush.msra.mxu0 %v3684
      %3711 = vmatpush.msra.mxu0 %v3682
      %3712 = vmatpush.msra.mxu0 %v3680
      %3713 = vmatmul.f32.gmra.mxu0 %v3280
      %v3714 = vpop.f32.mrf.mxu0
      %v3715 = vadd.f32 0.0, %v3714
      %3716 = vmatmul.f32.gmra.mxu0 %v3283
      %v3717 = vpop.f32.mrf.mxu0
      %v3718 = vadd.f32 0.0, %v3717
      %3719 = vmatmul.f32.gmra.mxu0 %v3286
      %v3720 = vpop.f32.mrf.mxu0
      %v3721 = vadd.f32 0.0, %v3720
      %3722 = vmatmul.f32.gmra.mxu0 %v3289
      %v3723 = vpop.f32.mrf.mxu0
      %v3724 = vadd.f32 0.0, %v3723
      %3725 = vdwg.mxu0
      %v3726 = vadd.f32 %v3675, %v3715
      %v3727 = vadd.f32 %v3676, %v3718
      %v3728 = vadd.f32 %v3677, %v3721
      %v3729 = vadd.f32 %v3678, %v3724
      %vm3730 = vcmp.gt.f32.partialorder %v3726, 0.0
      %vm3731 = vcmp.gt.f32.partialorder %v3727, 0.0
      %vm3732 = vcmp.gt.f32.partialorder %v3728, 0.0
      %vm3733 = vcmp.gt.f32.partialorder %v3729, 0.0
      %v3734 = vmul.f32 %v576, %v3726
      %v3735 = vmul.f32 %v581, %v3727
      %v3736 = vmul.f32 %v586, %v3728
      %v3737 = vmul.f32 %v591, %v3729
      %v3738 = vsel %vm3730, %v3726, %v3734
      %v3739 = vsel %vm3731, %v3727, %v3735
      %v3740 = vsel %vm3732, %v3728, %v3736
      %v3741 = vsel %vm3733, %v3729, %v3737
      %3742 = vmatpush.msra.mxu0 0.0
      %3743 = vmatpush.msra.mxu0 0.0
      %3744 = vmatpush.msra.mxu0 0.0
      %3745 = vmatpush.msra.mxu0 0.0
      %3746 = vmatpush.msra.mxu0 0.0
      %3747 = vmatpush.msra.mxu0 0.0
      %3748 = vmatpush.msra.mxu0 0.0
      %3749 = vmatpush.msra.mxu0 0.0
      %3750 = vmatpush.msra.mxu0 0.0
      %3751 = vmatpush.msra.mxu0 0.0
      %3752 = vmatpush.msra.mxu0 0.0
      %3753 = vmatpush.msra.mxu0 0.0
      %3754 = vmatpush.msra.mxu0 %v3741
      %3755 = vmatpush.msra.mxu0 %v3740
      %3756 = vmatpush.msra.mxu0 %v3739
      %3757 = vmatpush.msra.mxu0 %v3738
      %3758 = vmatmul.f32.gmra.mxu0 %v3338
      %v3759 = vpop.f32.mrf.mxu0
      %v3760 = vadd.f32 %v597, %v3759
      %3761 = vdwg.mxu0
      %v3762 = vsub.f32 0.0, %v3760
      %v3763 = vmul.f32 %v3762, 1.442695
      %v3764 = vpow.pop %v3763
      %v3765 = vadd.f32 %v3764, 1.0
      %v3766 = vrcp.pop %v3765
      %v3767 = vmul.f32 %v3765, %v3766
      %v3768 = vsub.f32 1.0, %v3767
      %v3769 = vmul.f32 %v3766, %v3768
      %v3770 = vadd.f32 %v3766, %v3769
      %vm3771 = vweird.f32 %v3765
      %vm3772 = vweird.f32 %v3766
      %vm3773 = vmor %vm3771, %vm3772
      %v3774 = vsel %vm3773, %v3766, %v3770
      %v3775 = vand.u32 2147483647, %v3765
      %vm3776 = vcmp.eq.f32.partialorder %v3775, 8.507059e+37
      %v3777 = vand.u32 %v3765, 2147483648
      %v3778 = vor.u32 1.1754944e-38, %v3777
      %v3779 = vsel %vm3776, %v3778, %v3774
      %v3780 = vmul.f32 1.0, %v3779
      %v3781 = vsel %vm601, %v3780, %v3760
      %s3782 = scalar_lea.vmem %s467, 16
      %3783 = vst.msk [vmem:[%s3782] sm:$0x1f] %vm3380, %v3781
      %p3784 = scmp.lt.s32.totalorder %s25, 1
      %s3785 = scalar_select %p3784, %s25, 1
      %s3786 = smul.addr %s3785, 3
      %s3787 = smul.addr %s3786, 8
      %s3788 = scalar_lea.vmem %s14, %s3787
      // Predicated region
      $region77: #{tpu_custom_call.1} parent=75 // pred_check
        %p3789 = pneg %p342
      $region78: #{tpu_custom_call.1} parent=75 // pred_check_branch
        %3791 = sbr.rel (%p3789) target = $region80
      $region79: #{tpu_custom_call.1} parent=75 // pred_region
        _
      $region80: #{tpu_custom_call.1} parent=75 // pred_fallthru
        _
    $region76: #{tpu_custom_call.1} parent=5 // pred_fallthru
      _
    %p3792 = scmp.le.s32.totalorder 2, %s20
    // Predicated region
    $region81: #{tpu_custom_call.1} parent=5 // pred_check
      %p3793 = pneg %p3792
    $region82: #{tpu_custom_call.1} parent=5 // pred_check_branch
      %3795 = sbr.rel (%p3793) target = $region84
    $region83: #{tpu_custom_call.1} parent=5 // pred_region
      %s3796 = ssub.s32 %s20, 2
      // Predicated region
      $region85: #{tpu_custom_call.1} parent=83 // pred_check
        %p3797 = pneg %p348
      $region86: #{tpu_custom_call.1} parent=83 // pred_check_branch
        %3799 = sbr.rel (%p3797) target = $region88
      $region87: #{tpu_custom_call.1} parent=83 // pred_region
        %p3800 = scmp.lt.s32.totalorder %s26, 1
        %s3801 = scalar_select %p3800, %s26, 1
        %s3802 = smul.addr %s3801, 3
        %s3803 = smul.addr %s3802, 8
        %s3804 = scalar_lea.vmem %s14, %s3803
      $region88: #{tpu_custom_call.1} parent=83 // pred_fallthru
        _
    $region84: #{tpu_custom_call.1} parent=5 // pred_fallthru
      _
  $region6: #{tpu_custom_call.1} parent=0 // loop_footer
    %s24 = sadd.s32 1, %s20
  $region7: #{tpu_custom_call.1} parent=0 // loop_footer_branch
    %19 = sbr.rel target = $region3
  $region8: #{tpu_custom_call.1} parent=0 // loop_exit
    _

</llo_original>
